<compile_context>
chip_gen: v6e
topology: v6e:2x2x1
jax: 0.10.0
libtpu: 0.0.40
codegen_flags: <defaults>
</compile_context>

<pallas_src>
import functools

import jax
import jax.numpy as jnp
from jax.experimental import pallas as pl
from jax.experimental.pallas import tpu as pltpu

KSIZE = 7
PAD = KSIZE // 2


def _cbam_kernel(x_ref, w1t_ref, w2t_ref, masks_ref, wsa_ref, o_ref, *, S, W):
    # x_ref:     (Bt, C, Sp)  VMEM, Sp = lane-padded H*W (multiple of 128)
    # w1t_ref:   (C, Ch)      VMEM  (= torch ca.fc[0].weight[:, :, 0, 0].T)
    # w2t_ref:   (Ch, C)      VMEM  (= torch ca.fc[2].weight[:, :, 0, 0].T)
    # masks_ref: (2*K+1, Sp)  VMEM  f32 {0,1}: rows 0..6 row-validity per dh,
    #                         rows 7..13 col-validity per dw, row 14 = lane < S
    # wsa_ref:   (2*K*K,)     SMEM  (= torch sa.conv1.weight[0], flattened)
    # o_ref:     (Bt, C, Sp)  VMEM
    Bt, C, Sp = x_ref.shape
    KK = KSIZE * KSIZE

    xf = x_ref[...].astype(jnp.float32)                    # (Bt, C, Sp) lane-dense

    # ---------------- Channel attention ----------------
    # Zero lane-padding keeps the sum exact; divide by the true S.
    avg = jnp.sum(xf, axis=2) * (1.0 / S)                  # (Bt, C)
    if Sp == S:
        mx = jnp.max(xf, axis=2)                           # (Bt, C)
    else:
        lane_valid = masks_ref[2 * KSIZE:2 * KSIZE + 1, :] > 0.5      # (1, Sp)
        mx = jnp.max(jnp.where(lane_valid[None], xf, -jnp.inf), axis=2)

    # Fused fc(avg) + fc(max): one stacked pass on the MXU.
    pooled = jnp.concatenate([avg, mx], axis=0)            # (2*Bt, C)
    w1t = w1t_ref[...].astype(jnp.float32)                 # (C, Ch)
    w2t = w2t_ref[...].astype(jnp.float32)                 # (Ch, C)
    h = jnp.maximum(
        jnp.dot(pooled, w1t, preferred_element_type=jnp.float32), 0.0)  # (2*Bt, Ch)
    fc_out = jnp.dot(h, w2t, preferred_element_type=jnp.float32)        # (2*Bt, C)
    ca = jax.nn.sigmoid(fc_out[:Bt] + fc_out[Bt:])         # (Bt, C)

    x1 = xf * ca[:, :, None]                               # (Bt, C, Sp) lane-dense VPU

    # ---------------- Spatial attention ----------------
    avg_map = jnp.mean(x1, axis=1)                         # (Bt, Sp) sublane reduce
    max_map = jnp.max(x1, axis=1)                          # (Bt, Sp)
    # Pack avg maps (rows 0..Bt-1) and max maps (rows Bt..2Bt-1) into sublanes so
    # every roll / FMA of the 49-tap conv works on all images + both map types.
    maps = jnp.concatenate([avg_map, max_map], axis=0)     # (2*Bt, Sp)

    rowm = [masks_ref[dh:dh + 1, :] > 0.5 for dh in range(KSIZE)]
    colm = [masks_ref[KSIZE + dw:KSIZE + dw + 1, :] > 0.5 for dw in range(KSIZE)]

    row_id = jax.lax.broadcasted_iota(jnp.int32, (2 * Bt, 1), 0)
    is_avg_row = row_id < Bt                               # (2*Bt, 1)

    accs = [jnp.zeros((2 * Bt, Sp), jnp.float32) for _ in range(4)]
    t = 0
    for dh in range(KSIZE):
        for dw in range(KSIZE):
            # tap (dh, dw) at output p reads input p + (dh-PAD)*W + (dw-PAD)
            shift = ((PAD - dh) * W + (PAD - dw)) % Sp
            r = maps if shift == 0 else pltpu.roll(maps, shift, axis=1)
            w_col = jnp.where(is_avg_row,
                              wsa_ref[dh * KSIZE + dw],            # avg-map tap weight
                              wsa_ref[KK + dh * KSIZE + dw])       # max-map tap weight
            valid = rowm[dh] & colm[dw]                            # (1, Sp)
            accs[t & 3] = accs[t & 3] + jnp.where(valid, w_col * r, 0.0)
            t += 1
    conv = (accs[0] + accs[1]) + (accs[2] + accs[3])       # (2*Bt, Sp)
    sa = jax.nn.sigmoid(conv[:Bt] + conv[Bt:])             # (Bt, Sp)

    # TODO(synk): for bf16 activations on v6e/v7x the two big scalings could be
    # done in bf16 to halve VMEM pressure; kept in f32 here for all generations.
    o_ref[...] = (x1 * sa[:, None, :]).astype(o_ref.dtype)  # lane-dense store


def _pick_block_b(B, bytes_per_img):
    # Aim for ~0.5-2 MiB of x per grid step; keep double-buffered in+out tiles
    # under ~24 MiB (fits the 32 MiB scoped VMEM on v6e/v7x and, with the raised
    # limit below, v5e); keep >= 2 grid steps when possible for v7x megacore.
    budget = max(1, min((2 << 20) // max(bytes_per_img, 1),
                        (24 << 20) // max(4 * bytes_per_img, 1)))
    divisors = [d for d in range(1, B + 1) if B % d == 0 and d <= budget]
    if not divisors:
        return 1
    multi_step = [d for d in divisors if B // d >= 2]
    return max(multi_step) if multi_step else max(divisors)


def _build_masks(H, W, Sp):
    # f32 {0,1} masks, computed once in the wrapper (no in-kernel iota / % W).
    S = H * W
    pos = jnp.arange(Sp, dtype=jnp.int32)
    r_idx = pos // W
    c_idx = pos % W
    lane_valid = pos < S
    rows = [((r_idx + dh - PAD) >= 0) & ((r_idx + dh - PAD) < H) & lane_valid
            for dh in range(KSIZE)]
    cols = [((c_idx + dw - PAD) >= 0) & ((c_idx + dw - PAD) < W)
            for dw in range(KSIZE)]
    return jnp.stack(rows + cols + [lane_valid]).astype(jnp.float32)  # (2K+1, Sp)


def cbam_pallas(x, w1, w2, wsa, *, block_b=None):
    """CBAM forward (matches the PyTorch module, NCHW).

    x:   (B, C, H, W)
    w1:  (Ch, C)   == torch ca.fc[0].weight[:, :, 0, 0]   (Ch = C // ratio)
    w2:  (C, Ch)   == torch ca.fc[2].weight[:, :, 0, 0]
    wsa: (2, K, K) == torch sa.conv1.weight[0]
    """
    B, C, H, W = x.shape
    Ch = w1.shape[0]
    S = H * W
    Sp = ((S + 127) // 128) * 128            # lane-dense spatial axis

    itemsize = jnp.dtype(x.dtype).itemsize
    if block_b is None:
        block_b = _pick_block_b(B, C * Sp * itemsize)
    assert B % block_b == 0, "block_b must divide B"

    x2 = x.reshape(B, C, S)                  # free, contiguous reshape
    if Sp != S:
        x2 = jnp.pad(x2, ((0, 0), (0, 0), (0, Sp - S)))

    w1t = jnp.transpose(w1)                  # (C, Ch)
    w2t = jnp.transpose(w2)                  # (Ch, C)
    wsa_flat = wsa.reshape(-1).astype(jnp.float32)   # (2*K*K,) 1-D SMEM array
    masks = _build_masks(H, W, Sp)           # (2*K+1, Sp) f32, VMEM-resident

    # Double-buffered input + output tiles; raise the scoped VMEM limit with
    # headroom (default is 16 MiB on v5e / 32 MiB on v6e/v7x; 64 MiB physical
    # on v7x is the cross-generation cap).
    tile_bytes = block_b * C * Sp * itemsize
    vmem_limit = int(min(64 << 20, max(32 << 20, 4 * tile_bytes + (8 << 20))))

    kernel = functools.partial(_cbam_kernel, S=S, W=W)

    out = pl.pallas_call(
        kernel,
        out_shape=jax.ShapeDtypeStruct((B, C, Sp), x.dtype),
        grid=(B // block_b,),
        in_specs=[
            pl.BlockSpec((block_b, C, Sp), lambda b: (b, 0, 0)),
            pl.BlockSpec((C, Ch), lambda b: (0, 0)),
            pl.BlockSpec((Ch, C), lambda b: (0, 0)),
            pl.BlockSpec((2 * KSIZE + 1, Sp), lambda b: (0, 0)),
            pl.BlockSpec(memory_space=pltpu.MemorySpace.SMEM),
        ],
        out_specs=pl.BlockSpec((block_b, C, Sp), lambda b: (b, 0, 0)),
        compiler_params=pltpu.CompilerParams(
            dimension_semantics=("parallel",),
            vmem_limit_bytes=vmem_limit),
    )(x2, w1t, w2t, masks, wsa_flat)

    if Sp != S:
        out = out[:, :, :S]
    return out.reshape(B, C, H, W)


def cbam_reference(x, w1, w2, wsa):
    """Pure-JAX NCHW reference mirroring the PyTorch forward exactly."""
    avg = jnp.mean(x, axis=(2, 3))                        # (B, C)
    mx = jnp.max(x, axis=(2, 3))                          # (B, C)

    def fc(v):
        h = jax.nn.relu(v @ w1.T)                         # (B, Ch)
        return h @ w2.T                                   # (B, C)

    ca = jax.nn.sigmoid(fc(avg) + fc(mx))                 # (B, C)
    x1 = x * ca[:, :, None, None]                         # (B, C, H, W)

    avg_m = jnp.mean(x1, axis=1, keepdims=True)           # (B, 1, H, W)
    max_m = jnp.max(x1, axis=1, keepdims=True)            # (B, 1, H, W)
    maps = jnp.concatenate([avg_m, max_m], axis=1)        # (B, 2, H, W)
    conv = jax.lax.conv_general_dilated(
        maps, wsa[None],                                  # (1, 2, K, K)
        window_strides=(1, 1),
        padding=((PAD, PAD), (PAD, PAD)),
        dimension_numbers=("NCHW", "OIHW", "NCHW"),
    )                                                     # (B, 1, H, W)
    sa = jax.nn.sigmoid(conv)
    return x1 * sa


if __name__ == "__main__":
    def run_case(B, C, H, W, ratio, key):
        Ch = max(1, C // ratio)
        kx, k1, k2, k3 = jax.random.split(key, 4)
        x = jax.random.normal(kx, (B, C, H, W), dtype=jnp.float32)
        # fc[0]: Conv2d(C, Ch, 1, bias=False)  -> weight (Ch, C, 1, 1) -> (Ch, C)
        w1 = jax.random.normal(k1, (Ch, C), dtype=jnp.float32) * 0.1
        # fc[2]: Conv2d(Ch, C, 1, bias=False)  -> weight (C, Ch, 1, 1) -> (C, Ch)
        w2 = jax.random.normal(k2, (C, Ch), dtype=jnp.float32) * 0.1
        # SpatialAttention conv1: Conv2d(2, 1, 7, padding=3, bias=False) -> (2, 7, 7)
        wsa = jax.random.normal(k3, (2, KSIZE, KSIZE), dtype=jnp.float32) * 0.1

        out = jax.block_until_ready(cbam_pallas(x, w1, w2, wsa))
        ref = jax.block_until_ready(cbam_reference(x, w1, w2, wsa))
        assert out.shape == (B, C, H, W)
        err = float(jnp.max(jnp.abs(out - ref)))
        assert jnp.allclose(out, ref, atol=1e-4, rtol=1e-4), (
            f"mismatch B={B} C={C} H={H} W={W}: max abs err = {err}")

    key = jax.random.PRNGKey(0)
    k1, k2 = jax.random.split(key)
    # CBAM(in_planes=32, ratio=16): S=256 (lane-aligned), block_b=2, grid=2.
    run_case(4, 32, 16, 16, 16, k1)
    # Non-lane-aligned S (7*7=49 -> padded to 128) and W not a power of two.
    run_case(2, 16, 7, 7, 8, k2)
    print("KERNEL_OK")
</pallas_src>

<mosaic_0001>
module attributes {stable_mosaic.version = 11 : i64} {
  func.func @_cbam_kernel(%arg0: i32, %arg1: memref<2x32x256xf32, #tpu.memory_space<vmem>>, %arg2: memref<32x2xf32, #tpu.memory_space<vmem>>, %arg3: memref<2x32xf32, #tpu.memory_space<vmem>>, %arg4: memref<15x256xf32, #tpu.memory_space<vmem>>, %arg5: memref<98xf32, #tpu.memory_space<smem>>, %arg6: memref<2x32x256xf32, #tpu.memory_space<vmem>>) attributes {dimension_semantics = [#tpu.dimension_semantics<parallel>], iteration_bounds = array<i64: 2>, scalar_prefetch = 0 : i64, scratch_operands = 0 : i64, tpu.core_type = #tpu.core_type<tc>, window_params = [{transform_indices = @transform_0, window_bounds = array<i64: 2, 32, 256>}, {pipeline_mode = #tpu.pipeline_mode<synchronous>, transform_indices = @transform_1, window_bounds = array<i64: 32, 2>}, {pipeline_mode = #tpu.pipeline_mode<synchronous>, transform_indices = @transform_2, window_bounds = array<i64: 2, 32>}, {pipeline_mode = #tpu.pipeline_mode<synchronous>, transform_indices = @transform_3, window_bounds = array<i64: 15, 256>}, {transform_indices = @transform_4, window_bounds = array<i64: 98>}, {transform_indices = @transform_5, window_bounds = array<i64: 2, 32, 256>}]} {
    %c0 = arith.constant 0 : index
    %c0_0 = arith.constant 0 : index
    %c0_1 = arith.constant 0 : index
    %0 = vector.load %arg1[%c0, %c0_0, %c0_1] : memref<2x32x256xf32, #tpu.memory_space<vmem>>, vector<2x32x256xf32>
    %cst = arith.constant dense<0.000000e+00> : vector<2x32xf32>
    %1 = vector.multi_reduction <add>, %0, %cst [2] : vector<2x32x256xf32> to vector<2x32xf32>
    %cst_2 = arith.constant 3.906250e-03 : f32
    %2 = vector.broadcast %cst_2 : f32 to vector<2x32xf32>
    %3 = arith.mulf %1, %2 : vector<2x32xf32>
    %cst_3 = arith.constant dense<0xFF800000> : vector<2x32xf32>
    %4 = vector.multi_reduction <maximumf>, %0, %cst_3 [2] : vector<2x32x256xf32> to vector<2x32xf32>
    %5 = tpu.concatenate %3, %4 in 0 : vector<2x32xf32>, vector<2x32xf32> -> vector<4x32xf32>
    %c0_4 = arith.constant 0 : index
    %c0_5 = arith.constant 0 : index
    %6 = vector.load %arg2[%c0_4, %c0_5] : memref<32x2xf32, #tpu.memory_space<vmem>>, vector<32x2xf32>
    %c0_6 = arith.constant 0 : index
    %c0_7 = arith.constant 0 : index
    %7 = vector.load %arg3[%c0_6, %c0_7] : memref<2x32xf32, #tpu.memory_space<vmem>>, vector<2x32xf32>
    %cst_8 = arith.constant dense<0.000000e+00> : vector<4x2xf32>
    %8 = tpu.matmul %5, %6, %cst_8 {dimension_numbers = #tpu.dot_dimension_numbers<[1], [0], [0], [1], [0, 0, 1, 1], [], []>} : vector<4x32xf32>, vector<32x2xf32>, vector<4x2xf32> -> vector<4x2xf32>
    %cst_9 = arith.constant 0.000000e+00 : f32
    %9 = vector.broadcast %cst_9 : f32 to vector<4x2xf32>
    %10 = arith.maximumf %8, %9 : vector<4x2xf32>
    %cst_10 = arith.constant dense<0.000000e+00> : vector<4x32xf32>
    %11 = tpu.matmul %10, %7, %cst_10 {dimension_numbers = #tpu.dot_dimension_numbers<[1], [0], [0], [1], [0, 0, 1, 1], [], []>} : vector<4x2xf32>, vector<2x32xf32>, vector<4x32xf32> -> vector<4x32xf32>
    %12 = vector.extract_strided_slice %11 {offsets = [0, 0], sizes = [2, 32], strides = [1, 1]} : vector<4x32xf32> to vector<2x32xf32>
    %13 = vector.extract_strided_slice %11 {offsets = [2, 0], sizes = [2, 32], strides = [1, 1]} : vector<4x32xf32> to vector<2x32xf32>
    %14 = arith.addf %12, %13 : vector<2x32xf32>
    %15 = arith.negf %14 : vector<2x32xf32>
    %16 = math.exp %15 : vector<2x32xf32>
    %cst_11 = arith.constant 1.000000e+00 : f32
    %17 = vector.broadcast %cst_11 : f32 to vector<2x32xf32>
    %18 = arith.addf %17, %16 : vector<2x32xf32>
    %19 = arith.divf %17, %18 : vector<2x32xf32>
    %20 = vector.shape_cast %19 : vector<2x32xf32> to vector<2x32x1xf32>
    %21 = vector.broadcast %20 : vector<2x32x1xf32> to vector<2x32x256xf32>
    %22 = arith.mulf %0, %21 : vector<2x32x256xf32>
    %cst_12 = arith.constant dense<0.000000e+00> : vector<2x256xf32>
    %23 = vector.multi_reduction <add>, %22, %cst_12 [1] : vector<2x32x256xf32> to vector<2x256xf32>
    %cst_13 = arith.constant 3.200000e+01 : f32
    %24 = vector.broadcast %cst_13 : f32 to vector<2x256xf32>
    %25 = arith.divf %23, %24 : vector<2x256xf32>
    %cst_14 = arith.constant dense<0xFF800000> : vector<2x256xf32>
    %26 = vector.multi_reduction <maximumf>, %22, %cst_14 [1] : vector<2x32x256xf32> to vector<2x256xf32>
    %27 = tpu.concatenate %25, %26 in 0 : vector<2x256xf32>, vector<2x256xf32> -> vector<4x256xf32>
    %c0_15 = arith.constant 0 : index
    %c0_16 = arith.constant 0 : index
    %28 = vector.load %arg4[%c0_15, %c0_16] : memref<15x256xf32, #tpu.memory_space<vmem>>, vector<1x256xf32>
    %cst_17 = arith.constant 5.000000e-01 : f32
    %29 = vector.broadcast %cst_17 : f32 to vector<1x256xf32>
    %30 = arith.cmpf ogt, %28, %29 : vector<1x256xf32>
    %c1 = arith.constant 1 : index
    %c0_18 = arith.constant 0 : index
    %31 = vector.load %arg4[%c1, %c0_18] : memref<15x256xf32, #tpu.memory_space<vmem>>, vector<1x256xf32>
    %cst_19 = arith.constant 5.000000e-01 : f32
    %32 = vector.broadcast %cst_19 : f32 to vector<1x256xf32>
    %33 = arith.cmpf ogt, %31, %32 : vector<1x256xf32>
    %c2 = arith.constant 2 : index
    %c0_20 = arith.constant 0 : index
    %34 = vector.load %arg4[%c2, %c0_20] : memref<15x256xf32, #tpu.memory_space<vmem>>, vector<1x256xf32>
    %cst_21 = arith.constant 5.000000e-01 : f32
    %35 = vector.broadcast %cst_21 : f32 to vector<1x256xf32>
    %36 = arith.cmpf ogt, %34, %35 : vector<1x256xf32>
    %c3 = arith.constant 3 : index
    %c0_22 = arith.constant 0 : index
    %37 = vector.load %arg4[%c3, %c0_22] : memref<15x256xf32, #tpu.memory_space<vmem>>, vector<1x256xf32>
    %cst_23 = arith.constant 5.000000e-01 : f32
    %38 = vector.broadcast %cst_23 : f32 to vector<1x256xf32>
    %39 = arith.cmpf ogt, %37, %38 : vector<1x256xf32>
    %c4 = arith.constant 4 : index
    %c0_24 = arith.constant 0 : index
    %40 = vector.load %arg4[%c4, %c0_24] : memref<15x256xf32, #tpu.memory_space<vmem>>, vector<1x256xf32>
    %cst_25 = arith.constant 5.000000e-01 : f32
    %41 = vector.broadcast %cst_25 : f32 to vector<1x256xf32>
    %42 = arith.cmpf ogt, %40, %41 : vector<1x256xf32>
    %c5 = arith.constant 5 : index
    %c0_26 = arith.constant 0 : index
    %43 = vector.load %arg4[%c5, %c0_26] : memref<15x256xf32, #tpu.memory_space<vmem>>, vector<1x256xf32>
    %cst_27 = arith.constant 5.000000e-01 : f32
    %44 = vector.broadcast %cst_27 : f32 to vector<1x256xf32>
    %45 = arith.cmpf ogt, %43, %44 : vector<1x256xf32>
    %c6 = arith.constant 6 : index
    %c0_28 = arith.constant 0 : index
    %46 = vector.load %arg4[%c6, %c0_28] : memref<15x256xf32, #tpu.memory_space<vmem>>, vector<1x256xf32>
    %cst_29 = arith.constant 5.000000e-01 : f32
    %47 = vector.broadcast %cst_29 : f32 to vector<1x256xf32>
    %48 = arith.cmpf ogt, %46, %47 : vector<1x256xf32>
    %c7 = arith.constant 7 : index
    %c0_30 = arith.constant 0 : index
    %49 = vector.load %arg4[%c7, %c0_30] : memref<15x256xf32, #tpu.memory_space<vmem>>, vector<1x256xf32>
    %cst_31 = arith.constant 5.000000e-01 : f32
    %50 = vector.broadcast %cst_31 : f32 to vector<1x256xf32>
    %51 = arith.cmpf ogt, %49, %50 : vector<1x256xf32>
    %c8 = arith.constant 8 : index
    %c0_32 = arith.constant 0 : index
    %52 = vector.load %arg4[%c8, %c0_32] : memref<15x256xf32, #tpu.memory_space<vmem>>, vector<1x256xf32>
    %cst_33 = arith.constant 5.000000e-01 : f32
    %53 = vector.broadcast %cst_33 : f32 to vector<1x256xf32>
    %54 = arith.cmpf ogt, %52, %53 : vector<1x256xf32>
    %c9 = arith.constant 9 : index
    %c0_34 = arith.constant 0 : index
    %55 = vector.load %arg4[%c9, %c0_34] : memref<15x256xf32, #tpu.memory_space<vmem>>, vector<1x256xf32>
    %cst_35 = arith.constant 5.000000e-01 : f32
    %56 = vector.broadcast %cst_35 : f32 to vector<1x256xf32>
    %57 = arith.cmpf ogt, %55, %56 : vector<1x256xf32>
    %c10 = arith.constant 10 : index
    %c0_36 = arith.constant 0 : index
    %58 = vector.load %arg4[%c10, %c0_36] : memref<15x256xf32, #tpu.memory_space<vmem>>, vector<1x256xf32>
    %cst_37 = arith.constant 5.000000e-01 : f32
    %59 = vector.broadcast %cst_37 : f32 to vector<1x256xf32>
    %60 = arith.cmpf ogt, %58, %59 : vector<1x256xf32>
    %c11 = arith.constant 11 : index
    %c0_38 = arith.constant 0 : index
    %61 = vector.load %arg4[%c11, %c0_38] : memref<15x256xf32, #tpu.memory_space<vmem>>, vector<1x256xf32>
    %cst_39 = arith.constant 5.000000e-01 : f32
    %62 = vector.broadcast %cst_39 : f32 to vector<1x256xf32>
    %63 = arith.cmpf ogt, %61, %62 : vector<1x256xf32>
    %c12 = arith.constant 12 : index
    %c0_40 = arith.constant 0 : index
    %64 = vector.load %arg4[%c12, %c0_40] : memref<15x256xf32, #tpu.memory_space<vmem>>, vector<1x256xf32>
    %cst_41 = arith.constant 5.000000e-01 : f32
    %65 = vector.broadcast %cst_41 : f32 to vector<1x256xf32>
    %66 = arith.cmpf ogt, %64, %65 : vector<1x256xf32>
    %c13 = arith.constant 13 : index
    %c0_42 = arith.constant 0 : index
    %67 = vector.load %arg4[%c13, %c0_42] : memref<15x256xf32, #tpu.memory_space<vmem>>, vector<1x256xf32>
    %cst_43 = arith.constant 5.000000e-01 : f32
    %68 = vector.broadcast %cst_43 : f32 to vector<1x256xf32>
    %69 = arith.cmpf ogt, %67, %68 : vector<1x256xf32>
    %70 = tpu.iota {dimensions = array<i32: 0>} : vector<4x1xi32>
    %c2_i32 = arith.constant 2 : i32
    %71 = vector.broadcast %c2_i32 : i32 to vector<4x1xi32>
    %72 = arith.cmpi slt, %70, %71 : vector<4x1xi32>
    %cst_44 = arith.constant 0.000000e+00 : f32
    %73 = vector.broadcast %cst_44 : f32 to vector<4x256xf32>
    %cst_45 = arith.constant 0.000000e+00 : f32
    %74 = vector.broadcast %cst_45 : f32 to vector<4x256xf32>
    %cst_46 = arith.constant 0.000000e+00 : f32
    %75 = vector.broadcast %cst_46 : f32 to vector<4x256xf32>
    %cst_47 = arith.constant 0.000000e+00 : f32
    %76 = vector.broadcast %cst_47 : f32 to vector<4x256xf32>
    %c51_i32 = arith.constant 51 : i32
    %77 = tpu.dynamic_rotate %27 by %c51_i32 dim 1 : vector<4x256xf32>, i32 -> vector<4x256xf32>
    %c0_48 = arith.constant 0 : index
    %78 = memref.load %arg5[%c0_48] : memref<98xf32, #tpu.memory_space<smem>>
    %c49 = arith.constant 49 : index
    %79 = memref.load %arg5[%c49] : memref<98xf32, #tpu.memory_space<smem>>
    %80 = vector.broadcast %78 : f32 to vector<4x1xf32>
    %81 = vector.broadcast %79 : f32 to vector<4x1xf32>
    %82 = arith.select %72, %80, %81 : vector<4x1xi1>, vector<4x1xf32>
    %83 = arith.andi %30, %51 : vector<1x256xi1>
    %84 = vector.broadcast %82 : vector<4x1xf32> to vector<4x256xf32>
    %85 = arith.mulf %84, %77 : vector<4x256xf32>
    %cst_49 = arith.constant 0.000000e+00 : f32
    %86 = vector.shape_cast %83 : vector<1x256xi1> to vector<1x256xi1>
    %87 = vector.broadcast %86 : vector<1x256xi1> to vector<4x256xi1>
    %88 = vector.broadcast %cst_49 : f32 to vector<4x256xf32>
    %89 = arith.select %87, %85, %88 : vector<4x256xi1>, vector<4x256xf32>
    %90 = arith.addf %73, %89 : vector<4x256xf32>
    %c50_i32 = arith.constant 50 : i32
    %91 = tpu.dynamic_rotate %27 by %c50_i32 dim 1 : vector<4x256xf32>, i32 -> vector<4x256xf32>
    %c1_50 = arith.constant 1 : index
    %92 = memref.load %arg5[%c1_50] : memref<98xf32, #tpu.memory_space<smem>>
    %c50 = arith.constant 50 : index
    %93 = memref.load %arg5[%c50] : memref<98xf32, #tpu.memory_space<smem>>
    %94 = vector.broadcast %92 : f32 to vector<4x1xf32>
    %95 = vector.broadcast %93 : f32 to vector<4x1xf32>
    %96 = arith.select %72, %94, %95 : vector<4x1xi1>, vector<4x1xf32>
    %97 = arith.andi %30, %54 : vector<1x256xi1>
    %98 = vector.broadcast %96 : vector<4x1xf32> to vector<4x256xf32>
    %99 = arith.mulf %98, %91 : vector<4x256xf32>
    %cst_51 = arith.constant 0.000000e+00 : f32
    %100 = vector.shape_cast %97 : vector<1x256xi1> to vector<1x256xi1>
    %101 = vector.broadcast %100 : vector<1x256xi1> to vector<4x256xi1>
    %102 = vector.broadcast %cst_51 : f32 to vector<4x256xf32>
    %103 = arith.select %101, %99, %102 : vector<4x256xi1>, vector<4x256xf32>
    %104 = arith.addf %74, %103 : vector<4x256xf32>
    %c49_i32 = arith.constant 49 : i32
    %105 = tpu.dynamic_rotate %27 by %c49_i32 dim 1 : vector<4x256xf32>, i32 -> vector<4x256xf32>
    %c2_52 = arith.constant 2 : index
    %106 = memref.load %arg5[%c2_52] : memref<98xf32, #tpu.memory_space<smem>>
    %c51 = arith.constant 51 : index
    %107 = memref.load %arg5[%c51] : memref<98xf32, #tpu.memory_space<smem>>
    %108 = vector.broadcast %106 : f32 to vector<4x1xf32>
    %109 = vector.broadcast %107 : f32 to vector<4x1xf32>
    %110 = arith.select %72, %108, %109 : vector<4x1xi1>, vector<4x1xf32>
    %111 = arith.andi %30, %57 : vector<1x256xi1>
    %112 = vector.broadcast %110 : vector<4x1xf32> to vector<4x256xf32>
    %113 = arith.mulf %112, %105 : vector<4x256xf32>
    %cst_53 = arith.constant 0.000000e+00 : f32
    %114 = vector.shape_cast %111 : vector<1x256xi1> to vector<1x256xi1>
    %115 = vector.broadcast %114 : vector<1x256xi1> to vector<4x256xi1>
    %116 = vector.broadcast %cst_53 : f32 to vector<4x256xf32>
    %117 = arith.select %115, %113, %116 : vector<4x256xi1>, vector<4x256xf32>
    %118 = arith.addf %75, %117 : vector<4x256xf32>
    %c48_i32 = arith.constant 48 : i32
    %119 = tpu.dynamic_rotate %27 by %c48_i32 dim 1 : vector<4x256xf32>, i32 -> vector<4x256xf32>
    %c3_54 = arith.constant 3 : index
    %120 = memref.load %arg5[%c3_54] : memref<98xf32, #tpu.memory_space<smem>>
    %c52 = arith.constant 52 : index
    %121 = memref.load %arg5[%c52] : memref<98xf32, #tpu.memory_space<smem>>
    %122 = vector.broadcast %120 : f32 to vector<4x1xf32>
    %123 = vector.broadcast %121 : f32 to vector<4x1xf32>
    %124 = arith.select %72, %122, %123 : vector<4x1xi1>, vector<4x1xf32>
    %125 = arith.andi %30, %60 : vector<1x256xi1>
    %126 = vector.broadcast %124 : vector<4x1xf32> to vector<4x256xf32>
    %127 = arith.mulf %126, %119 : vector<4x256xf32>
    %cst_55 = arith.constant 0.000000e+00 : f32
    %128 = vector.shape_cast %125 : vector<1x256xi1> to vector<1x256xi1>
    %129 = vector.broadcast %128 : vector<1x256xi1> to vector<4x256xi1>
    %130 = vector.broadcast %cst_55 : f32 to vector<4x256xf32>
    %131 = arith.select %129, %127, %130 : vector<4x256xi1>, vector<4x256xf32>
    %132 = arith.addf %76, %131 : vector<4x256xf32>
    %c47_i32 = arith.constant 47 : i32
    %133 = tpu.dynamic_rotate %27 by %c47_i32 dim 1 : vector<4x256xf32>, i32 -> vector<4x256xf32>
    %c4_56 = arith.constant 4 : index
    %134 = memref.load %arg5[%c4_56] : memref<98xf32, #tpu.memory_space<smem>>
    %c53 = arith.constant 53 : index
    %135 = memref.load %arg5[%c53] : memref<98xf32, #tpu.memory_space<smem>>
    %136 = vector.broadcast %134 : f32 to vector<4x1xf32>
    %137 = vector.broadcast %135 : f32 to vector<4x1xf32>
    %138 = arith.select %72, %136, %137 : vector<4x1xi1>, vector<4x1xf32>
    %139 = arith.andi %30, %63 : vector<1x256xi1>
    %140 = vector.broadcast %138 : vector<4x1xf32> to vector<4x256xf32>
    %141 = arith.mulf %140, %133 : vector<4x256xf32>
    %cst_57 = arith.constant 0.000000e+00 : f32
    %142 = vector.shape_cast %139 : vector<1x256xi1> to vector<1x256xi1>
    %143 = vector.broadcast %142 : vector<1x256xi1> to vector<4x256xi1>
    %144 = vector.broadcast %cst_57 : f32 to vector<4x256xf32>
    %145 = arith.select %143, %141, %144 : vector<4x256xi1>, vector<4x256xf32>
    %146 = arith.addf %90, %145 : vector<4x256xf32>
    %c46_i32 = arith.constant 46 : i32
    %147 = tpu.dynamic_rotate %27 by %c46_i32 dim 1 : vector<4x256xf32>, i32 -> vector<4x256xf32>
    %c5_58 = arith.constant 5 : index
    %148 = memref.load %arg5[%c5_58] : memref<98xf32, #tpu.memory_space<smem>>
    %c54 = arith.constant 54 : index
    %149 = memref.load %arg5[%c54] : memref<98xf32, #tpu.memory_space<smem>>
    %150 = vector.broadcast %148 : f32 to vector<4x1xf32>
    %151 = vector.broadcast %149 : f32 to vector<4x1xf32>
    %152 = arith.select %72, %150, %151 : vector<4x1xi1>, vector<4x1xf32>
    %153 = arith.andi %30, %66 : vector<1x256xi1>
    %154 = vector.broadcast %152 : vector<4x1xf32> to vector<4x256xf32>
    %155 = arith.mulf %154, %147 : vector<4x256xf32>
    %cst_59 = arith.constant 0.000000e+00 : f32
    %156 = vector.shape_cast %153 : vector<1x256xi1> to vector<1x256xi1>
    %157 = vector.broadcast %156 : vector<1x256xi1> to vector<4x256xi1>
    %158 = vector.broadcast %cst_59 : f32 to vector<4x256xf32>
    %159 = arith.select %157, %155, %158 : vector<4x256xi1>, vector<4x256xf32>
    %160 = arith.addf %104, %159 : vector<4x256xf32>
    %c45_i32 = arith.constant 45 : i32
    %161 = tpu.dynamic_rotate %27 by %c45_i32 dim 1 : vector<4x256xf32>, i32 -> vector<4x256xf32>
    %c6_60 = arith.constant 6 : index
    %162 = memref.load %arg5[%c6_60] : memref<98xf32, #tpu.memory_space<smem>>
    %c55 = arith.constant 55 : index
    %163 = memref.load %arg5[%c55] : memref<98xf32, #tpu.memory_space<smem>>
    %164 = vector.broadcast %162 : f32 to vector<4x1xf32>
    %165 = vector.broadcast %163 : f32 to vector<4x1xf32>
    %166 = arith.select %72, %164, %165 : vector<4x1xi1>, vector<4x1xf32>
    %167 = arith.andi %30, %69 : vector<1x256xi1>
    %168 = vector.broadcast %166 : vector<4x1xf32> to vector<4x256xf32>
    %169 = arith.mulf %168, %161 : vector<4x256xf32>
    %cst_61 = arith.constant 0.000000e+00 : f32
    %170 = vector.shape_cast %167 : vector<1x256xi1> to vector<1x256xi1>
    %171 = vector.broadcast %170 : vector<1x256xi1> to vector<4x256xi1>
    %172 = vector.broadcast %cst_61 : f32 to vector<4x256xf32>
    %173 = arith.select %171, %169, %172 : vector<4x256xi1>, vector<4x256xf32>
    %174 = arith.addf %118, %173 : vector<4x256xf32>
    %c35_i32 = arith.constant 35 : i32
    %175 = tpu.dynamic_rotate %27 by %c35_i32 dim 1 : vector<4x256xf32>, i32 -> vector<4x256xf32>
    %c7_62 = arith.constant 7 : index
    %176 = memref.load %arg5[%c7_62] : memref<98xf32, #tpu.memory_space<smem>>
    %c56 = arith.constant 56 : index
    %177 = memref.load %arg5[%c56] : memref<98xf32, #tpu.memory_space<smem>>
    %178 = vector.broadcast %176 : f32 to vector<4x1xf32>
    %179 = vector.broadcast %177 : f32 to vector<4x1xf32>
    %180 = arith.select %72, %178, %179 : vector<4x1xi1>, vector<4x1xf32>
    %181 = arith.andi %33, %51 : vector<1x256xi1>
    %182 = vector.broadcast %180 : vector<4x1xf32> to vector<4x256xf32>
    %183 = arith.mulf %182, %175 : vector<4x256xf32>
    %cst_63 = arith.constant 0.000000e+00 : f32
    %184 = vector.shape_cast %181 : vector<1x256xi1> to vector<1x256xi1>
    %185 = vector.broadcast %184 : vector<1x256xi1> to vector<4x256xi1>
    %186 = vector.broadcast %cst_63 : f32 to vector<4x256xf32>
    %187 = arith.select %185, %183, %186 : vector<4x256xi1>, vector<4x256xf32>
    %188 = arith.addf %132, %187 : vector<4x256xf32>
    %c34_i32 = arith.constant 34 : i32
    %189 = tpu.dynamic_rotate %27 by %c34_i32 dim 1 : vector<4x256xf32>, i32 -> vector<4x256xf32>
    %c8_64 = arith.constant 8 : index
    %190 = memref.load %arg5[%c8_64] : memref<98xf32, #tpu.memory_space<smem>>
    %c57 = arith.constant 57 : index
    %191 = memref.load %arg5[%c57] : memref<98xf32, #tpu.memory_space<smem>>
    %192 = vector.broadcast %190 : f32 to vector<4x1xf32>
    %193 = vector.broadcast %191 : f32 to vector<4x1xf32>
    %194 = arith.select %72, %192, %193 : vector<4x1xi1>, vector<4x1xf32>
    %195 = arith.andi %33, %54 : vector<1x256xi1>
    %196 = vector.broadcast %194 : vector<4x1xf32> to vector<4x256xf32>
    %197 = arith.mulf %196, %189 : vector<4x256xf32>
    %cst_65 = arith.constant 0.000000e+00 : f32
    %198 = vector.shape_cast %195 : vector<1x256xi1> to vector<1x256xi1>
    %199 = vector.broadcast %198 : vector<1x256xi1> to vector<4x256xi1>
    %200 = vector.broadcast %cst_65 : f32 to vector<4x256xf32>
    %201 = arith.select %199, %197, %200 : vector<4x256xi1>, vector<4x256xf32>
    %202 = arith.addf %146, %201 : vector<4x256xf32>
    %c33_i32 = arith.constant 33 : i32
    %203 = tpu.dynamic_rotate %27 by %c33_i32 dim 1 : vector<4x256xf32>, i32 -> vector<4x256xf32>
    %c9_66 = arith.constant 9 : index
    %204 = memref.load %arg5[%c9_66] : memref<98xf32, #tpu.memory_space<smem>>
    %c58 = arith.constant 58 : index
    %205 = memref.load %arg5[%c58] : memref<98xf32, #tpu.memory_space<smem>>
    %206 = vector.broadcast %204 : f32 to vector<4x1xf32>
    %207 = vector.broadcast %205 : f32 to vector<4x1xf32>
    %208 = arith.select %72, %206, %207 : vector<4x1xi1>, vector<4x1xf32>
    %209 = arith.andi %33, %57 : vector<1x256xi1>
    %210 = vector.broadcast %208 : vector<4x1xf32> to vector<4x256xf32>
    %211 = arith.mulf %210, %203 : vector<4x256xf32>
    %cst_67 = arith.constant 0.000000e+00 : f32
    %212 = vector.shape_cast %209 : vector<1x256xi1> to vector<1x256xi1>
    %213 = vector.broadcast %212 : vector<1x256xi1> to vector<4x256xi1>
    %214 = vector.broadcast %cst_67 : f32 to vector<4x256xf32>
    %215 = arith.select %213, %211, %214 : vector<4x256xi1>, vector<4x256xf32>
    %216 = arith.addf %160, %215 : vector<4x256xf32>
    %c32_i32 = arith.constant 32 : i32
    %217 = tpu.dynamic_rotate %27 by %c32_i32 dim 1 : vector<4x256xf32>, i32 -> vector<4x256xf32>
    %c10_68 = arith.constant 10 : index
    %218 = memref.load %arg5[%c10_68] : memref<98xf32, #tpu.memory_space<smem>>
    %c59 = arith.constant 59 : index
    %219 = memref.load %arg5[%c59] : memref<98xf32, #tpu.memory_space<smem>>
    %220 = vector.broadcast %218 : f32 to vector<4x1xf32>
    %221 = vector.broadcast %219 : f32 to vector<4x1xf32>
    %222 = arith.select %72, %220, %221 : vector<4x1xi1>, vector<4x1xf32>
    %223 = arith.andi %33, %60 : vector<1x256xi1>
    %224 = vector.broadcast %222 : vector<4x1xf32> to vector<4x256xf32>
    %225 = arith.mulf %224, %217 : vector<4x256xf32>
    %cst_69 = arith.constant 0.000000e+00 : f32
    %226 = vector.shape_cast %223 : vector<1x256xi1> to vector<1x256xi1>
    %227 = vector.broadcast %226 : vector<1x256xi1> to vector<4x256xi1>
    %228 = vector.broadcast %cst_69 : f32 to vector<4x256xf32>
    %229 = arith.select %227, %225, %228 : vector<4x256xi1>, vector<4x256xf32>
    %230 = arith.addf %174, %229 : vector<4x256xf32>
    %c31_i32 = arith.constant 31 : i32
    %231 = tpu.dynamic_rotate %27 by %c31_i32 dim 1 : vector<4x256xf32>, i32 -> vector<4x256xf32>
    %c11_70 = arith.constant 11 : index
    %232 = memref.load %arg5[%c11_70] : memref<98xf32, #tpu.memory_space<smem>>
    %c60 = arith.constant 60 : index
    %233 = memref.load %arg5[%c60] : memref<98xf32, #tpu.memory_space<smem>>
    %234 = vector.broadcast %232 : f32 to vector<4x1xf32>
    %235 = vector.broadcast %233 : f32 to vector<4x1xf32>
    %236 = arith.select %72, %234, %235 : vector<4x1xi1>, vector<4x1xf32>
    %237 = arith.andi %33, %63 : vector<1x256xi1>
    %238 = vector.broadcast %236 : vector<4x1xf32> to vector<4x256xf32>
    %239 = arith.mulf %238, %231 : vector<4x256xf32>
    %cst_71 = arith.constant 0.000000e+00 : f32
    %240 = vector.shape_cast %237 : vector<1x256xi1> to vector<1x256xi1>
    %241 = vector.broadcast %240 : vector<1x256xi1> to vector<4x256xi1>
    %242 = vector.broadcast %cst_71 : f32 to vector<4x256xf32>
    %243 = arith.select %241, %239, %242 : vector<4x256xi1>, vector<4x256xf32>
    %244 = arith.addf %188, %243 : vector<4x256xf32>
    %c30_i32 = arith.constant 30 : i32
    %245 = tpu.dynamic_rotate %27 by %c30_i32 dim 1 : vector<4x256xf32>, i32 -> vector<4x256xf32>
    %c12_72 = arith.constant 12 : index
    %246 = memref.load %arg5[%c12_72] : memref<98xf32, #tpu.memory_space<smem>>
    %c61 = arith.constant 61 : index
    %247 = memref.load %arg5[%c61] : memref<98xf32, #tpu.memory_space<smem>>
    %248 = vector.broadcast %246 : f32 to vector<4x1xf32>
    %249 = vector.broadcast %247 : f32 to vector<4x1xf32>
    %250 = arith.select %72, %248, %249 : vector<4x1xi1>, vector<4x1xf32>
    %251 = arith.andi %33, %66 : vector<1x256xi1>
    %252 = vector.broadcast %250 : vector<4x1xf32> to vector<4x256xf32>
    %253 = arith.mulf %252, %245 : vector<4x256xf32>
    %cst_73 = arith.constant 0.000000e+00 : f32
    %254 = vector.shape_cast %251 : vector<1x256xi1> to vector<1x256xi1>
    %255 = vector.broadcast %254 : vector<1x256xi1> to vector<4x256xi1>
    %256 = vector.broadcast %cst_73 : f32 to vector<4x256xf32>
    %257 = arith.select %255, %253, %256 : vector<4x256xi1>, vector<4x256xf32>
    %258 = arith.addf %202, %257 : vector<4x256xf32>
    %c29_i32 = arith.constant 29 : i32
    %259 = tpu.dynamic_rotate %27 by %c29_i32 dim 1 : vector<4x256xf32>, i32 -> vector<4x256xf32>
    %c13_74 = arith.constant 13 : index
    %260 = memref.load %arg5[%c13_74] : memref<98xf32, #tpu.memory_space<smem>>
    %c62 = arith.constant 62 : index
    %261 = memref.load %arg5[%c62] : memref<98xf32, #tpu.memory_space<smem>>
    %262 = vector.broadcast %260 : f32 to vector<4x1xf32>
    %263 = vector.broadcast %261 : f32 to vector<4x1xf32>
    %264 = arith.select %72, %262, %263 : vector<4x1xi1>, vector<4x1xf32>
    %265 = arith.andi %33, %69 : vector<1x256xi1>
    %266 = vector.broadcast %264 : vector<4x1xf32> to vector<4x256xf32>
    %267 = arith.mulf %266, %259 : vector<4x256xf32>
    %cst_75 = arith.constant 0.000000e+00 : f32
    %268 = vector.shape_cast %265 : vector<1x256xi1> to vector<1x256xi1>
    %269 = vector.broadcast %268 : vector<1x256xi1> to vector<4x256xi1>
    %270 = vector.broadcast %cst_75 : f32 to vector<4x256xf32>
    %271 = arith.select %269, %267, %270 : vector<4x256xi1>, vector<4x256xf32>
    %272 = arith.addf %216, %271 : vector<4x256xf32>
    %c19_i32 = arith.constant 19 : i32
    %273 = tpu.dynamic_rotate %27 by %c19_i32 dim 1 : vector<4x256xf32>, i32 -> vector<4x256xf32>
    %c14 = arith.constant 14 : index
    %274 = memref.load %arg5[%c14] : memref<98xf32, #tpu.memory_space<smem>>
    %c63 = arith.constant 63 : index
    %275 = memref.load %arg5[%c63] : memref<98xf32, #tpu.memory_space<smem>>
    %276 = vector.broadcast %274 : f32 to vector<4x1xf32>
    %277 = vector.broadcast %275 : f32 to vector<4x1xf32>
    %278 = arith.select %72, %276, %277 : vector<4x1xi1>, vector<4x1xf32>
    %279 = arith.andi %36, %51 : vector<1x256xi1>
    %280 = vector.broadcast %278 : vector<4x1xf32> to vector<4x256xf32>
    %281 = arith.mulf %280, %273 : vector<4x256xf32>
    %cst_76 = arith.constant 0.000000e+00 : f32
    %282 = vector.shape_cast %279 : vector<1x256xi1> to vector<1x256xi1>
    %283 = vector.broadcast %282 : vector<1x256xi1> to vector<4x256xi1>
    %284 = vector.broadcast %cst_76 : f32 to vector<4x256xf32>
    %285 = arith.select %283, %281, %284 : vector<4x256xi1>, vector<4x256xf32>
    %286 = arith.addf %230, %285 : vector<4x256xf32>
    %c18_i32 = arith.constant 18 : i32
    %287 = tpu.dynamic_rotate %27 by %c18_i32 dim 1 : vector<4x256xf32>, i32 -> vector<4x256xf32>
    %c15 = arith.constant 15 : index
    %288 = memref.load %arg5[%c15] : memref<98xf32, #tpu.memory_space<smem>>
    %c64 = arith.constant 64 : index
    %289 = memref.load %arg5[%c64] : memref<98xf32, #tpu.memory_space<smem>>
    %290 = vector.broadcast %288 : f32 to vector<4x1xf32>
    %291 = vector.broadcast %289 : f32 to vector<4x1xf32>
    %292 = arith.select %72, %290, %291 : vector<4x1xi1>, vector<4x1xf32>
    %293 = arith.andi %36, %54 : vector<1x256xi1>
    %294 = vector.broadcast %292 : vector<4x1xf32> to vector<4x256xf32>
    %295 = arith.mulf %294, %287 : vector<4x256xf32>
    %cst_77 = arith.constant 0.000000e+00 : f32
    %296 = vector.shape_cast %293 : vector<1x256xi1> to vector<1x256xi1>
    %297 = vector.broadcast %296 : vector<1x256xi1> to vector<4x256xi1>
    %298 = vector.broadcast %cst_77 : f32 to vector<4x256xf32>
    %299 = arith.select %297, %295, %298 : vector<4x256xi1>, vector<4x256xf32>
    %300 = arith.addf %244, %299 : vector<4x256xf32>
    %c17_i32 = arith.constant 17 : i32
    %301 = tpu.dynamic_rotate %27 by %c17_i32 dim 1 : vector<4x256xf32>, i32 -> vector<4x256xf32>
    %c16 = arith.constant 16 : index
    %302 = memref.load %arg5[%c16] : memref<98xf32, #tpu.memory_space<smem>>
    %c65 = arith.constant 65 : index
    %303 = memref.load %arg5[%c65] : memref<98xf32, #tpu.memory_space<smem>>
    %304 = vector.broadcast %302 : f32 to vector<4x1xf32>
    %305 = vector.broadcast %303 : f32 to vector<4x1xf32>
    %306 = arith.select %72, %304, %305 : vector<4x1xi1>, vector<4x1xf32>
    %307 = arith.andi %36, %57 : vector<1x256xi1>
    %308 = vector.broadcast %306 : vector<4x1xf32> to vector<4x256xf32>
    %309 = arith.mulf %308, %301 : vector<4x256xf32>
    %cst_78 = arith.constant 0.000000e+00 : f32
    %310 = vector.shape_cast %307 : vector<1x256xi1> to vector<1x256xi1>
    %311 = vector.broadcast %310 : vector<1x256xi1> to vector<4x256xi1>
    %312 = vector.broadcast %cst_78 : f32 to vector<4x256xf32>
    %313 = arith.select %311, %309, %312 : vector<4x256xi1>, vector<4x256xf32>
    %314 = arith.addf %258, %313 : vector<4x256xf32>
    %c16_i32 = arith.constant 16 : i32
    %315 = tpu.dynamic_rotate %27 by %c16_i32 dim 1 : vector<4x256xf32>, i32 -> vector<4x256xf32>
    %c17 = arith.constant 17 : index
    %316 = memref.load %arg5[%c17] : memref<98xf32, #tpu.memory_space<smem>>
    %c66 = arith.constant 66 : index
    %317 = memref.load %arg5[%c66] : memref<98xf32, #tpu.memory_space<smem>>
    %318 = vector.broadcast %316 : f32 to vector<4x1xf32>
    %319 = vector.broadcast %317 : f32 to vector<4x1xf32>
    %320 = arith.select %72, %318, %319 : vector<4x1xi1>, vector<4x1xf32>
    %321 = arith.andi %36, %60 : vector<1x256xi1>
    %322 = vector.broadcast %320 : vector<4x1xf32> to vector<4x256xf32>
    %323 = arith.mulf %322, %315 : vector<4x256xf32>
    %cst_79 = arith.constant 0.000000e+00 : f32
    %324 = vector.shape_cast %321 : vector<1x256xi1> to vector<1x256xi1>
    %325 = vector.broadcast %324 : vector<1x256xi1> to vector<4x256xi1>
    %326 = vector.broadcast %cst_79 : f32 to vector<4x256xf32>
    %327 = arith.select %325, %323, %326 : vector<4x256xi1>, vector<4x256xf32>
    %328 = arith.addf %272, %327 : vector<4x256xf32>
    %c15_i32 = arith.constant 15 : i32
    %329 = tpu.dynamic_rotate %27 by %c15_i32 dim 1 : vector<4x256xf32>, i32 -> vector<4x256xf32>
    %c18 = arith.constant 18 : index
    %330 = memref.load %arg5[%c18] : memref<98xf32, #tpu.memory_space<smem>>
    %c67 = arith.constant 67 : index
    %331 = memref.load %arg5[%c67] : memref<98xf32, #tpu.memory_space<smem>>
    %332 = vector.broadcast %330 : f32 to vector<4x1xf32>
    %333 = vector.broadcast %331 : f32 to vector<4x1xf32>
    %334 = arith.select %72, %332, %333 : vector<4x1xi1>, vector<4x1xf32>
    %335 = arith.andi %36, %63 : vector<1x256xi1>
    %336 = vector.broadcast %334 : vector<4x1xf32> to vector<4x256xf32>
    %337 = arith.mulf %336, %329 : vector<4x256xf32>
    %cst_80 = arith.constant 0.000000e+00 : f32
    %338 = vector.shape_cast %335 : vector<1x256xi1> to vector<1x256xi1>
    %339 = vector.broadcast %338 : vector<1x256xi1> to vector<4x256xi1>
    %340 = vector.broadcast %cst_80 : f32 to vector<4x256xf32>
    %341 = arith.select %339, %337, %340 : vector<4x256xi1>, vector<4x256xf32>
    %342 = arith.addf %286, %341 : vector<4x256xf32>
    %c14_i32 = arith.constant 14 : i32
    %343 = tpu.dynamic_rotate %27 by %c14_i32 dim 1 : vector<4x256xf32>, i32 -> vector<4x256xf32>
    %c19 = arith.constant 19 : index
    %344 = memref.load %arg5[%c19] : memref<98xf32, #tpu.memory_space<smem>>
    %c68 = arith.constant 68 : index
    %345 = memref.load %arg5[%c68] : memref<98xf32, #tpu.memory_space<smem>>
    %346 = vector.broadcast %344 : f32 to vector<4x1xf32>
    %347 = vector.broadcast %345 : f32 to vector<4x1xf32>
    %348 = arith.select %72, %346, %347 : vector<4x1xi1>, vector<4x1xf32>
    %349 = arith.andi %36, %66 : vector<1x256xi1>
    %350 = vector.broadcast %348 : vector<4x1xf32> to vector<4x256xf32>
    %351 = arith.mulf %350, %343 : vector<4x256xf32>
    %cst_81 = arith.constant 0.000000e+00 : f32
    %352 = vector.shape_cast %349 : vector<1x256xi1> to vector<1x256xi1>
    %353 = vector.broadcast %352 : vector<1x256xi1> to vector<4x256xi1>
    %354 = vector.broadcast %cst_81 : f32 to vector<4x256xf32>
    %355 = arith.select %353, %351, %354 : vector<4x256xi1>, vector<4x256xf32>
    %356 = arith.addf %300, %355 : vector<4x256xf32>
    %c13_i32 = arith.constant 13 : i32
    %357 = tpu.dynamic_rotate %27 by %c13_i32 dim 1 : vector<4x256xf32>, i32 -> vector<4x256xf32>
    %c20 = arith.constant 20 : index
    %358 = memref.load %arg5[%c20] : memref<98xf32, #tpu.memory_space<smem>>
    %c69 = arith.constant 69 : index
    %359 = memref.load %arg5[%c69] : memref<98xf32, #tpu.memory_space<smem>>
    %360 = vector.broadcast %358 : f32 to vector<4x1xf32>
    %361 = vector.broadcast %359 : f32 to vector<4x1xf32>
    %362 = arith.select %72, %360, %361 : vector<4x1xi1>, vector<4x1xf32>
    %363 = arith.andi %36, %69 : vector<1x256xi1>
    %364 = vector.broadcast %362 : vector<4x1xf32> to vector<4x256xf32>
    %365 = arith.mulf %364, %357 : vector<4x256xf32>
    %cst_82 = arith.constant 0.000000e+00 : f32
    %366 = vector.shape_cast %363 : vector<1x256xi1> to vector<1x256xi1>
    %367 = vector.broadcast %366 : vector<1x256xi1> to vector<4x256xi1>
    %368 = vector.broadcast %cst_82 : f32 to vector<4x256xf32>
    %369 = arith.select %367, %365, %368 : vector<4x256xi1>, vector<4x256xf32>
    %370 = arith.addf %314, %369 : vector<4x256xf32>
    %c3_i32 = arith.constant 3 : i32
    %371 = tpu.dynamic_rotate %27 by %c3_i32 dim 1 : vector<4x256xf32>, i32 -> vector<4x256xf32>
    %c21 = arith.constant 21 : index
    %372 = memref.load %arg5[%c21] : memref<98xf32, #tpu.memory_space<smem>>
    %c70 = arith.constant 70 : index
    %373 = memref.load %arg5[%c70] : memref<98xf32, #tpu.memory_space<smem>>
    %374 = vector.broadcast %372 : f32 to vector<4x1xf32>
    %375 = vector.broadcast %373 : f32 to vector<4x1xf32>
    %376 = arith.select %72, %374, %375 : vector<4x1xi1>, vector<4x1xf32>
    %377 = arith.andi %39, %51 : vector<1x256xi1>
    %378 = vector.broadcast %376 : vector<4x1xf32> to vector<4x256xf32>
    %379 = arith.mulf %378, %371 : vector<4x256xf32>
    %cst_83 = arith.constant 0.000000e+00 : f32
    %380 = vector.shape_cast %377 : vector<1x256xi1> to vector<1x256xi1>
    %381 = vector.broadcast %380 : vector<1x256xi1> to vector<4x256xi1>
    %382 = vector.broadcast %cst_83 : f32 to vector<4x256xf32>
    %383 = arith.select %381, %379, %382 : vector<4x256xi1>, vector<4x256xf32>
    %384 = arith.addf %328, %383 : vector<4x256xf32>
    %c2_i32_84 = arith.constant 2 : i32
    %385 = tpu.dynamic_rotate %27 by %c2_i32_84 dim 1 : vector<4x256xf32>, i32 -> vector<4x256xf32>
    %c22 = arith.constant 22 : index
    %386 = memref.load %arg5[%c22] : memref<98xf32, #tpu.memory_space<smem>>
    %c71 = arith.constant 71 : index
    %387 = memref.load %arg5[%c71] : memref<98xf32, #tpu.memory_space<smem>>
    %388 = vector.broadcast %386 : f32 to vector<4x1xf32>
    %389 = vector.broadcast %387 : f32 to vector<4x1xf32>
    %390 = arith.select %72, %388, %389 : vector<4x1xi1>, vector<4x1xf32>
    %391 = arith.andi %39, %54 : vector<1x256xi1>
    %392 = vector.broadcast %390 : vector<4x1xf32> to vector<4x256xf32>
    %393 = arith.mulf %392, %385 : vector<4x256xf32>
    %cst_85 = arith.constant 0.000000e+00 : f32
    %394 = vector.shape_cast %391 : vector<1x256xi1> to vector<1x256xi1>
    %395 = vector.broadcast %394 : vector<1x256xi1> to vector<4x256xi1>
    %396 = vector.broadcast %cst_85 : f32 to vector<4x256xf32>
    %397 = arith.select %395, %393, %396 : vector<4x256xi1>, vector<4x256xf32>
    %398 = arith.addf %342, %397 : vector<4x256xf32>
    %c1_i32 = arith.constant 1 : i32
    %399 = tpu.dynamic_rotate %27 by %c1_i32 dim 1 : vector<4x256xf32>, i32 -> vector<4x256xf32>
    %c23 = arith.constant 23 : index
    %400 = memref.load %arg5[%c23] : memref<98xf32, #tpu.memory_space<smem>>
    %c72 = arith.constant 72 : index
    %401 = memref.load %arg5[%c72] : memref<98xf32, #tpu.memory_space<smem>>
    %402 = vector.broadcast %400 : f32 to vector<4x1xf32>
    %403 = vector.broadcast %401 : f32 to vector<4x1xf32>
    %404 = arith.select %72, %402, %403 : vector<4x1xi1>, vector<4x1xf32>
    %405 = arith.andi %39, %57 : vector<1x256xi1>
    %406 = vector.broadcast %404 : vector<4x1xf32> to vector<4x256xf32>
    %407 = arith.mulf %406, %399 : vector<4x256xf32>
    %cst_86 = arith.constant 0.000000e+00 : f32
    %408 = vector.shape_cast %405 : vector<1x256xi1> to vector<1x256xi1>
    %409 = vector.broadcast %408 : vector<1x256xi1> to vector<4x256xi1>
    %410 = vector.broadcast %cst_86 : f32 to vector<4x256xf32>
    %411 = arith.select %409, %407, %410 : vector<4x256xi1>, vector<4x256xf32>
    %412 = arith.addf %356, %411 : vector<4x256xf32>
    %c24 = arith.constant 24 : index
    %413 = memref.load %arg5[%c24] : memref<98xf32, #tpu.memory_space<smem>>
    %c73 = arith.constant 73 : index
    %414 = memref.load %arg5[%c73] : memref<98xf32, #tpu.memory_space<smem>>
    %415 = vector.broadcast %413 : f32 to vector<4x1xf32>
    %416 = vector.broadcast %414 : f32 to vector<4x1xf32>
    %417 = arith.select %72, %415, %416 : vector<4x1xi1>, vector<4x1xf32>
    %418 = arith.andi %39, %60 : vector<1x256xi1>
    %419 = vector.broadcast %417 : vector<4x1xf32> to vector<4x256xf32>
    %420 = arith.mulf %419, %27 : vector<4x256xf32>
    %cst_87 = arith.constant 0.000000e+00 : f32
    %421 = vector.shape_cast %418 : vector<1x256xi1> to vector<1x256xi1>
    %422 = vector.broadcast %421 : vector<1x256xi1> to vector<4x256xi1>
    %423 = vector.broadcast %cst_87 : f32 to vector<4x256xf32>
    %424 = arith.select %422, %420, %423 : vector<4x256xi1>, vector<4x256xf32>
    %425 = arith.addf %370, %424 : vector<4x256xf32>
    %c255_i32 = arith.constant 255 : i32
    %426 = tpu.dynamic_rotate %27 by %c255_i32 dim 1 : vector<4x256xf32>, i32 -> vector<4x256xf32>
    %c25 = arith.constant 25 : index
    %427 = memref.load %arg5[%c25] : memref<98xf32, #tpu.memory_space<smem>>
    %c74 = arith.constant 74 : index
    %428 = memref.load %arg5[%c74] : memref<98xf32, #tpu.memory_space<smem>>
    %429 = vector.broadcast %427 : f32 to vector<4x1xf32>
    %430 = vector.broadcast %428 : f32 to vector<4x1xf32>
    %431 = arith.select %72, %429, %430 : vector<4x1xi1>, vector<4x1xf32>
    %432 = arith.andi %39, %63 : vector<1x256xi1>
    %433 = vector.broadcast %431 : vector<4x1xf32> to vector<4x256xf32>
    %434 = arith.mulf %433, %426 : vector<4x256xf32>
    %cst_88 = arith.constant 0.000000e+00 : f32
    %435 = vector.shape_cast %432 : vector<1x256xi1> to vector<1x256xi1>
    %436 = vector.broadcast %435 : vector<1x256xi1> to vector<4x256xi1>
    %437 = vector.broadcast %cst_88 : f32 to vector<4x256xf32>
    %438 = arith.select %436, %434, %437 : vector<4x256xi1>, vector<4x256xf32>
    %439 = arith.addf %384, %438 : vector<4x256xf32>
    %c254_i32 = arith.constant 254 : i32
    %440 = tpu.dynamic_rotate %27 by %c254_i32 dim 1 : vector<4x256xf32>, i32 -> vector<4x256xf32>
    %c26 = arith.constant 26 : index
    %441 = memref.load %arg5[%c26] : memref<98xf32, #tpu.memory_space<smem>>
    %c75 = arith.constant 75 : index
    %442 = memref.load %arg5[%c75] : memref<98xf32, #tpu.memory_space<smem>>
    %443 = vector.broadcast %441 : f32 to vector<4x1xf32>
    %444 = vector.broadcast %442 : f32 to vector<4x1xf32>
    %445 = arith.select %72, %443, %444 : vector<4x1xi1>, vector<4x1xf32>
    %446 = arith.andi %39, %66 : vector<1x256xi1>
    %447 = vector.broadcast %445 : vector<4x1xf32> to vector<4x256xf32>
    %448 = arith.mulf %447, %440 : vector<4x256xf32>
    %cst_89 = arith.constant 0.000000e+00 : f32
    %449 = vector.shape_cast %446 : vector<1x256xi1> to vector<1x256xi1>
    %450 = vector.broadcast %449 : vector<1x256xi1> to vector<4x256xi1>
    %451 = vector.broadcast %cst_89 : f32 to vector<4x256xf32>
    %452 = arith.select %450, %448, %451 : vector<4x256xi1>, vector<4x256xf32>
    %453 = arith.addf %398, %452 : vector<4x256xf32>
    %c253_i32 = arith.constant 253 : i32
    %454 = tpu.dynamic_rotate %27 by %c253_i32 dim 1 : vector<4x256xf32>, i32 -> vector<4x256xf32>
    %c27 = arith.constant 27 : index
    %455 = memref.load %arg5[%c27] : memref<98xf32, #tpu.memory_space<smem>>
    %c76 = arith.constant 76 : index
    %456 = memref.load %arg5[%c76] : memref<98xf32, #tpu.memory_space<smem>>
    %457 = vector.broadcast %455 : f32 to vector<4x1xf32>
    %458 = vector.broadcast %456 : f32 to vector<4x1xf32>
    %459 = arith.select %72, %457, %458 : vector<4x1xi1>, vector<4x1xf32>
    %460 = arith.andi %39, %69 : vector<1x256xi1>
    %461 = vector.broadcast %459 : vector<4x1xf32> to vector<4x256xf32>
    %462 = arith.mulf %461, %454 : vector<4x256xf32>
    %cst_90 = arith.constant 0.000000e+00 : f32
    %463 = vector.shape_cast %460 : vector<1x256xi1> to vector<1x256xi1>
    %464 = vector.broadcast %463 : vector<1x256xi1> to vector<4x256xi1>
    %465 = vector.broadcast %cst_90 : f32 to vector<4x256xf32>
    %466 = arith.select %464, %462, %465 : vector<4x256xi1>, vector<4x256xf32>
    %467 = arith.addf %412, %466 : vector<4x256xf32>
    %c243_i32 = arith.constant 243 : i32
    %468 = tpu.dynamic_rotate %27 by %c243_i32 dim 1 : vector<4x256xf32>, i32 -> vector<4x256xf32>
    %c28 = arith.constant 28 : index
    %469 = memref.load %arg5[%c28] : memref<98xf32, #tpu.memory_space<smem>>
    %c77 = arith.constant 77 : index
    %470 = memref.load %arg5[%c77] : memref<98xf32, #tpu.memory_space<smem>>
    %471 = vector.broadcast %469 : f32 to vector<4x1xf32>
    %472 = vector.broadcast %470 : f32 to vector<4x1xf32>
    %473 = arith.select %72, %471, %472 : vector<4x1xi1>, vector<4x1xf32>
    %474 = arith.andi %42, %51 : vector<1x256xi1>
    %475 = vector.broadcast %473 : vector<4x1xf32> to vector<4x256xf32>
    %476 = arith.mulf %475, %468 : vector<4x256xf32>
    %cst_91 = arith.constant 0.000000e+00 : f32
    %477 = vector.shape_cast %474 : vector<1x256xi1> to vector<1x256xi1>
    %478 = vector.broadcast %477 : vector<1x256xi1> to vector<4x256xi1>
    %479 = vector.broadcast %cst_91 : f32 to vector<4x256xf32>
    %480 = arith.select %478, %476, %479 : vector<4x256xi1>, vector<4x256xf32>
    %481 = arith.addf %425, %480 : vector<4x256xf32>
    %c242_i32 = arith.constant 242 : i32
    %482 = tpu.dynamic_rotate %27 by %c242_i32 dim 1 : vector<4x256xf32>, i32 -> vector<4x256xf32>
    %c29 = arith.constant 29 : index
    %483 = memref.load %arg5[%c29] : memref<98xf32, #tpu.memory_space<smem>>
    %c78 = arith.constant 78 : index
    %484 = memref.load %arg5[%c78] : memref<98xf32, #tpu.memory_space<smem>>
    %485 = vector.broadcast %483 : f32 to vector<4x1xf32>
    %486 = vector.broadcast %484 : f32 to vector<4x1xf32>
    %487 = arith.select %72, %485, %486 : vector<4x1xi1>, vector<4x1xf32>
    %488 = arith.andi %42, %54 : vector<1x256xi1>
    %489 = vector.broadcast %487 : vector<4x1xf32> to vector<4x256xf32>
    %490 = arith.mulf %489, %482 : vector<4x256xf32>
    %cst_92 = arith.constant 0.000000e+00 : f32
    %491 = vector.shape_cast %488 : vector<1x256xi1> to vector<1x256xi1>
    %492 = vector.broadcast %491 : vector<1x256xi1> to vector<4x256xi1>
    %493 = vector.broadcast %cst_92 : f32 to vector<4x256xf32>
    %494 = arith.select %492, %490, %493 : vector<4x256xi1>, vector<4x256xf32>
    %495 = arith.addf %439, %494 : vector<4x256xf32>
    %c241_i32 = arith.constant 241 : i32
    %496 = tpu.dynamic_rotate %27 by %c241_i32 dim 1 : vector<4x256xf32>, i32 -> vector<4x256xf32>
    %c30 = arith.constant 30 : index
    %497 = memref.load %arg5[%c30] : memref<98xf32, #tpu.memory_space<smem>>
    %c79 = arith.constant 79 : index
    %498 = memref.load %arg5[%c79] : memref<98xf32, #tpu.memory_space<smem>>
    %499 = vector.broadcast %497 : f32 to vector<4x1xf32>
    %500 = vector.broadcast %498 : f32 to vector<4x1xf32>
    %501 = arith.select %72, %499, %500 : vector<4x1xi1>, vector<4x1xf32>
    %502 = arith.andi %42, %57 : vector<1x256xi1>
    %503 = vector.broadcast %501 : vector<4x1xf32> to vector<4x256xf32>
    %504 = arith.mulf %503, %496 : vector<4x256xf32>
    %cst_93 = arith.constant 0.000000e+00 : f32
    %505 = vector.shape_cast %502 : vector<1x256xi1> to vector<1x256xi1>
    %506 = vector.broadcast %505 : vector<1x256xi1> to vector<4x256xi1>
    %507 = vector.broadcast %cst_93 : f32 to vector<4x256xf32>
    %508 = arith.select %506, %504, %507 : vector<4x256xi1>, vector<4x256xf32>
    %509 = arith.addf %453, %508 : vector<4x256xf32>
    %c240_i32 = arith.constant 240 : i32
    %510 = tpu.dynamic_rotate %27 by %c240_i32 dim 1 : vector<4x256xf32>, i32 -> vector<4x256xf32>
    %c31 = arith.constant 31 : index
    %511 = memref.load %arg5[%c31] : memref<98xf32, #tpu.memory_space<smem>>
    %c80 = arith.constant 80 : index
    %512 = memref.load %arg5[%c80] : memref<98xf32, #tpu.memory_space<smem>>
    %513 = vector.broadcast %511 : f32 to vector<4x1xf32>
    %514 = vector.broadcast %512 : f32 to vector<4x1xf32>
    %515 = arith.select %72, %513, %514 : vector<4x1xi1>, vector<4x1xf32>
    %516 = arith.andi %42, %60 : vector<1x256xi1>
    %517 = vector.broadcast %515 : vector<4x1xf32> to vector<4x256xf32>
    %518 = arith.mulf %517, %510 : vector<4x256xf32>
    %cst_94 = arith.constant 0.000000e+00 : f32
    %519 = vector.shape_cast %516 : vector<1x256xi1> to vector<1x256xi1>
    %520 = vector.broadcast %519 : vector<1x256xi1> to vector<4x256xi1>
    %521 = vector.broadcast %cst_94 : f32 to vector<4x256xf32>
    %522 = arith.select %520, %518, %521 : vector<4x256xi1>, vector<4x256xf32>
    %523 = arith.addf %467, %522 : vector<4x256xf32>
    %c239_i32 = arith.constant 239 : i32
    %524 = tpu.dynamic_rotate %27 by %c239_i32 dim 1 : vector<4x256xf32>, i32 -> vector<4x256xf32>
    %c32 = arith.constant 32 : index
    %525 = memref.load %arg5[%c32] : memref<98xf32, #tpu.memory_space<smem>>
    %c81 = arith.constant 81 : index
    %526 = memref.load %arg5[%c81] : memref<98xf32, #tpu.memory_space<smem>>
    %527 = vector.broadcast %525 : f32 to vector<4x1xf32>
    %528 = vector.broadcast %526 : f32 to vector<4x1xf32>
    %529 = arith.select %72, %527, %528 : vector<4x1xi1>, vector<4x1xf32>
    %530 = arith.andi %42, %63 : vector<1x256xi1>
    %531 = vector.broadcast %529 : vector<4x1xf32> to vector<4x256xf32>
    %532 = arith.mulf %531, %524 : vector<4x256xf32>
    %cst_95 = arith.constant 0.000000e+00 : f32
    %533 = vector.shape_cast %530 : vector<1x256xi1> to vector<1x256xi1>
    %534 = vector.broadcast %533 : vector<1x256xi1> to vector<4x256xi1>
    %535 = vector.broadcast %cst_95 : f32 to vector<4x256xf32>
    %536 = arith.select %534, %532, %535 : vector<4x256xi1>, vector<4x256xf32>
    %537 = arith.addf %481, %536 : vector<4x256xf32>
    %c238_i32 = arith.constant 238 : i32
    %538 = tpu.dynamic_rotate %27 by %c238_i32 dim 1 : vector<4x256xf32>, i32 -> vector<4x256xf32>
    %c33 = arith.constant 33 : index
    %539 = memref.load %arg5[%c33] : memref<98xf32, #tpu.memory_space<smem>>
    %c82 = arith.constant 82 : index
    %540 = memref.load %arg5[%c82] : memref<98xf32, #tpu.memory_space<smem>>
    %541 = vector.broadcast %539 : f32 to vector<4x1xf32>
    %542 = vector.broadcast %540 : f32 to vector<4x1xf32>
    %543 = arith.select %72, %541, %542 : vector<4x1xi1>, vector<4x1xf32>
    %544 = arith.andi %42, %66 : vector<1x256xi1>
    %545 = vector.broadcast %543 : vector<4x1xf32> to vector<4x256xf32>
    %546 = arith.mulf %545, %538 : vector<4x256xf32>
    %cst_96 = arith.constant 0.000000e+00 : f32
    %547 = vector.shape_cast %544 : vector<1x256xi1> to vector<1x256xi1>
    %548 = vector.broadcast %547 : vector<1x256xi1> to vector<4x256xi1>
    %549 = vector.broadcast %cst_96 : f32 to vector<4x256xf32>
    %550 = arith.select %548, %546, %549 : vector<4x256xi1>, vector<4x256xf32>
    %551 = arith.addf %495, %550 : vector<4x256xf32>
    %c237_i32 = arith.constant 237 : i32
    %552 = tpu.dynamic_rotate %27 by %c237_i32 dim 1 : vector<4x256xf32>, i32 -> vector<4x256xf32>
    %c34 = arith.constant 34 : index
    %553 = memref.load %arg5[%c34] : memref<98xf32, #tpu.memory_space<smem>>
    %c83 = arith.constant 83 : index
    %554 = memref.load %arg5[%c83] : memref<98xf32, #tpu.memory_space<smem>>
    %555 = vector.broadcast %553 : f32 to vector<4x1xf32>
    %556 = vector.broadcast %554 : f32 to vector<4x1xf32>
    %557 = arith.select %72, %555, %556 : vector<4x1xi1>, vector<4x1xf32>
    %558 = arith.andi %42, %69 : vector<1x256xi1>
    %559 = vector.broadcast %557 : vector<4x1xf32> to vector<4x256xf32>
    %560 = arith.mulf %559, %552 : vector<4x256xf32>
    %cst_97 = arith.constant 0.000000e+00 : f32
    %561 = vector.shape_cast %558 : vector<1x256xi1> to vector<1x256xi1>
    %562 = vector.broadcast %561 : vector<1x256xi1> to vector<4x256xi1>
    %563 = vector.broadcast %cst_97 : f32 to vector<4x256xf32>
    %564 = arith.select %562, %560, %563 : vector<4x256xi1>, vector<4x256xf32>
    %565 = arith.addf %509, %564 : vector<4x256xf32>
    %c227_i32 = arith.constant 227 : i32
    %566 = tpu.dynamic_rotate %27 by %c227_i32 dim 1 : vector<4x256xf32>, i32 -> vector<4x256xf32>
    %c35 = arith.constant 35 : index
    %567 = memref.load %arg5[%c35] : memref<98xf32, #tpu.memory_space<smem>>
    %c84 = arith.constant 84 : index
    %568 = memref.load %arg5[%c84] : memref<98xf32, #tpu.memory_space<smem>>
    %569 = vector.broadcast %567 : f32 to vector<4x1xf32>
    %570 = vector.broadcast %568 : f32 to vector<4x1xf32>
    %571 = arith.select %72, %569, %570 : vector<4x1xi1>, vector<4x1xf32>
    %572 = arith.andi %45, %51 : vector<1x256xi1>
    %573 = vector.broadcast %571 : vector<4x1xf32> to vector<4x256xf32>
    %574 = arith.mulf %573, %566 : vector<4x256xf32>
    %cst_98 = arith.constant 0.000000e+00 : f32
    %575 = vector.shape_cast %572 : vector<1x256xi1> to vector<1x256xi1>
    %576 = vector.broadcast %575 : vector<1x256xi1> to vector<4x256xi1>
    %577 = vector.broadcast %cst_98 : f32 to vector<4x256xf32>
    %578 = arith.select %576, %574, %577 : vector<4x256xi1>, vector<4x256xf32>
    %579 = arith.addf %523, %578 : vector<4x256xf32>
    %c226_i32 = arith.constant 226 : i32
    %580 = tpu.dynamic_rotate %27 by %c226_i32 dim 1 : vector<4x256xf32>, i32 -> vector<4x256xf32>
    %c36 = arith.constant 36 : index
    %581 = memref.load %arg5[%c36] : memref<98xf32, #tpu.memory_space<smem>>
    %c85 = arith.constant 85 : index
    %582 = memref.load %arg5[%c85] : memref<98xf32, #tpu.memory_space<smem>>
    %583 = vector.broadcast %581 : f32 to vector<4x1xf32>
    %584 = vector.broadcast %582 : f32 to vector<4x1xf32>
    %585 = arith.select %72, %583, %584 : vector<4x1xi1>, vector<4x1xf32>
    %586 = arith.andi %45, %54 : vector<1x256xi1>
    %587 = vector.broadcast %585 : vector<4x1xf32> to vector<4x256xf32>
    %588 = arith.mulf %587, %580 : vector<4x256xf32>
    %cst_99 = arith.constant 0.000000e+00 : f32
    %589 = vector.shape_cast %586 : vector<1x256xi1> to vector<1x256xi1>
    %590 = vector.broadcast %589 : vector<1x256xi1> to vector<4x256xi1>
    %591 = vector.broadcast %cst_99 : f32 to vector<4x256xf32>
    %592 = arith.select %590, %588, %591 : vector<4x256xi1>, vector<4x256xf32>
    %593 = arith.addf %537, %592 : vector<4x256xf32>
    %c225_i32 = arith.constant 225 : i32
    %594 = tpu.dynamic_rotate %27 by %c225_i32 dim 1 : vector<4x256xf32>, i32 -> vector<4x256xf32>
    %c37 = arith.constant 37 : index
    %595 = memref.load %arg5[%c37] : memref<98xf32, #tpu.memory_space<smem>>
    %c86 = arith.constant 86 : index
    %596 = memref.load %arg5[%c86] : memref<98xf32, #tpu.memory_space<smem>>
    %597 = vector.broadcast %595 : f32 to vector<4x1xf32>
    %598 = vector.broadcast %596 : f32 to vector<4x1xf32>
    %599 = arith.select %72, %597, %598 : vector<4x1xi1>, vector<4x1xf32>
    %600 = arith.andi %45, %57 : vector<1x256xi1>
    %601 = vector.broadcast %599 : vector<4x1xf32> to vector<4x256xf32>
    %602 = arith.mulf %601, %594 : vector<4x256xf32>
    %cst_100 = arith.constant 0.000000e+00 : f32
    %603 = vector.shape_cast %600 : vector<1x256xi1> to vector<1x256xi1>
    %604 = vector.broadcast %603 : vector<1x256xi1> to vector<4x256xi1>
    %605 = vector.broadcast %cst_100 : f32 to vector<4x256xf32>
    %606 = arith.select %604, %602, %605 : vector<4x256xi1>, vector<4x256xf32>
    %607 = arith.addf %551, %606 : vector<4x256xf32>
    %c224_i32 = arith.constant 224 : i32
    %608 = tpu.dynamic_rotate %27 by %c224_i32 dim 1 : vector<4x256xf32>, i32 -> vector<4x256xf32>
    %c38 = arith.constant 38 : index
    %609 = memref.load %arg5[%c38] : memref<98xf32, #tpu.memory_space<smem>>
    %c87 = arith.constant 87 : index
    %610 = memref.load %arg5[%c87] : memref<98xf32, #tpu.memory_space<smem>>
    %611 = vector.broadcast %609 : f32 to vector<4x1xf32>
    %612 = vector.broadcast %610 : f32 to vector<4x1xf32>
    %613 = arith.select %72, %611, %612 : vector<4x1xi1>, vector<4x1xf32>
    %614 = arith.andi %45, %60 : vector<1x256xi1>
    %615 = vector.broadcast %613 : vector<4x1xf32> to vector<4x256xf32>
    %616 = arith.mulf %615, %608 : vector<4x256xf32>
    %cst_101 = arith.constant 0.000000e+00 : f32
    %617 = vector.shape_cast %614 : vector<1x256xi1> to vector<1x256xi1>
    %618 = vector.broadcast %617 : vector<1x256xi1> to vector<4x256xi1>
    %619 = vector.broadcast %cst_101 : f32 to vector<4x256xf32>
    %620 = arith.select %618, %616, %619 : vector<4x256xi1>, vector<4x256xf32>
    %621 = arith.addf %565, %620 : vector<4x256xf32>
    %c223_i32 = arith.constant 223 : i32
    %622 = tpu.dynamic_rotate %27 by %c223_i32 dim 1 : vector<4x256xf32>, i32 -> vector<4x256xf32>
    %c39 = arith.constant 39 : index
    %623 = memref.load %arg5[%c39] : memref<98xf32, #tpu.memory_space<smem>>
    %c88 = arith.constant 88 : index
    %624 = memref.load %arg5[%c88] : memref<98xf32, #tpu.memory_space<smem>>
    %625 = vector.broadcast %623 : f32 to vector<4x1xf32>
    %626 = vector.broadcast %624 : f32 to vector<4x1xf32>
    %627 = arith.select %72, %625, %626 : vector<4x1xi1>, vector<4x1xf32>
    %628 = arith.andi %45, %63 : vector<1x256xi1>
    %629 = vector.broadcast %627 : vector<4x1xf32> to vector<4x256xf32>
    %630 = arith.mulf %629, %622 : vector<4x256xf32>
    %cst_102 = arith.constant 0.000000e+00 : f32
    %631 = vector.shape_cast %628 : vector<1x256xi1> to vector<1x256xi1>
    %632 = vector.broadcast %631 : vector<1x256xi1> to vector<4x256xi1>
    %633 = vector.broadcast %cst_102 : f32 to vector<4x256xf32>
    %634 = arith.select %632, %630, %633 : vector<4x256xi1>, vector<4x256xf32>
    %635 = arith.addf %579, %634 : vector<4x256xf32>
    %c222_i32 = arith.constant 222 : i32
    %636 = tpu.dynamic_rotate %27 by %c222_i32 dim 1 : vector<4x256xf32>, i32 -> vector<4x256xf32>
    %c40 = arith.constant 40 : index
    %637 = memref.load %arg5[%c40] : memref<98xf32, #tpu.memory_space<smem>>
    %c89 = arith.constant 89 : index
    %638 = memref.load %arg5[%c89] : memref<98xf32, #tpu.memory_space<smem>>
    %639 = vector.broadcast %637 : f32 to vector<4x1xf32>
    %640 = vector.broadcast %638 : f32 to vector<4x1xf32>
    %641 = arith.select %72, %639, %640 : vector<4x1xi1>, vector<4x1xf32>
    %642 = arith.andi %45, %66 : vector<1x256xi1>
    %643 = vector.broadcast %641 : vector<4x1xf32> to vector<4x256xf32>
    %644 = arith.mulf %643, %636 : vector<4x256xf32>
    %cst_103 = arith.constant 0.000000e+00 : f32
    %645 = vector.shape_cast %642 : vector<1x256xi1> to vector<1x256xi1>
    %646 = vector.broadcast %645 : vector<1x256xi1> to vector<4x256xi1>
    %647 = vector.broadcast %cst_103 : f32 to vector<4x256xf32>
    %648 = arith.select %646, %644, %647 : vector<4x256xi1>, vector<4x256xf32>
    %649 = arith.addf %593, %648 : vector<4x256xf32>
    %c221_i32 = arith.constant 221 : i32
    %650 = tpu.dynamic_rotate %27 by %c221_i32 dim 1 : vector<4x256xf32>, i32 -> vector<4x256xf32>
    %c41 = arith.constant 41 : index
    %651 = memref.load %arg5[%c41] : memref<98xf32, #tpu.memory_space<smem>>
    %c90 = arith.constant 90 : index
    %652 = memref.load %arg5[%c90] : memref<98xf32, #tpu.memory_space<smem>>
    %653 = vector.broadcast %651 : f32 to vector<4x1xf32>
    %654 = vector.broadcast %652 : f32 to vector<4x1xf32>
    %655 = arith.select %72, %653, %654 : vector<4x1xi1>, vector<4x1xf32>
    %656 = arith.andi %45, %69 : vector<1x256xi1>
    %657 = vector.broadcast %655 : vector<4x1xf32> to vector<4x256xf32>
    %658 = arith.mulf %657, %650 : vector<4x256xf32>
    %cst_104 = arith.constant 0.000000e+00 : f32
    %659 = vector.shape_cast %656 : vector<1x256xi1> to vector<1x256xi1>
    %660 = vector.broadcast %659 : vector<1x256xi1> to vector<4x256xi1>
    %661 = vector.broadcast %cst_104 : f32 to vector<4x256xf32>
    %662 = arith.select %660, %658, %661 : vector<4x256xi1>, vector<4x256xf32>
    %663 = arith.addf %607, %662 : vector<4x256xf32>
    %c211_i32 = arith.constant 211 : i32
    %664 = tpu.dynamic_rotate %27 by %c211_i32 dim 1 : vector<4x256xf32>, i32 -> vector<4x256xf32>
    %c42 = arith.constant 42 : index
    %665 = memref.load %arg5[%c42] : memref<98xf32, #tpu.memory_space<smem>>
    %c91 = arith.constant 91 : index
    %666 = memref.load %arg5[%c91] : memref<98xf32, #tpu.memory_space<smem>>
    %667 = vector.broadcast %665 : f32 to vector<4x1xf32>
    %668 = vector.broadcast %666 : f32 to vector<4x1xf32>
    %669 = arith.select %72, %667, %668 : vector<4x1xi1>, vector<4x1xf32>
    %670 = arith.andi %48, %51 : vector<1x256xi1>
    %671 = vector.broadcast %669 : vector<4x1xf32> to vector<4x256xf32>
    %672 = arith.mulf %671, %664 : vector<4x256xf32>
    %cst_105 = arith.constant 0.000000e+00 : f32
    %673 = vector.shape_cast %670 : vector<1x256xi1> to vector<1x256xi1>
    %674 = vector.broadcast %673 : vector<1x256xi1> to vector<4x256xi1>
    %675 = vector.broadcast %cst_105 : f32 to vector<4x256xf32>
    %676 = arith.select %674, %672, %675 : vector<4x256xi1>, vector<4x256xf32>
    %677 = arith.addf %621, %676 : vector<4x256xf32>
    %c210_i32 = arith.constant 210 : i32
    %678 = tpu.dynamic_rotate %27 by %c210_i32 dim 1 : vector<4x256xf32>, i32 -> vector<4x256xf32>
    %c43 = arith.constant 43 : index
    %679 = memref.load %arg5[%c43] : memref<98xf32, #tpu.memory_space<smem>>
    %c92 = arith.constant 92 : index
    %680 = memref.load %arg5[%c92] : memref<98xf32, #tpu.memory_space<smem>>
    %681 = vector.broadcast %679 : f32 to vector<4x1xf32>
    %682 = vector.broadcast %680 : f32 to vector<4x1xf32>
    %683 = arith.select %72, %681, %682 : vector<4x1xi1>, vector<4x1xf32>
    %684 = arith.andi %48, %54 : vector<1x256xi1>
    %685 = vector.broadcast %683 : vector<4x1xf32> to vector<4x256xf32>
    %686 = arith.mulf %685, %678 : vector<4x256xf32>
    %cst_106 = arith.constant 0.000000e+00 : f32
    %687 = vector.shape_cast %684 : vector<1x256xi1> to vector<1x256xi1>
    %688 = vector.broadcast %687 : vector<1x256xi1> to vector<4x256xi1>
    %689 = vector.broadcast %cst_106 : f32 to vector<4x256xf32>
    %690 = arith.select %688, %686, %689 : vector<4x256xi1>, vector<4x256xf32>
    %691 = arith.addf %635, %690 : vector<4x256xf32>
    %c209_i32 = arith.constant 209 : i32
    %692 = tpu.dynamic_rotate %27 by %c209_i32 dim 1 : vector<4x256xf32>, i32 -> vector<4x256xf32>
    %c44 = arith.constant 44 : index
    %693 = memref.load %arg5[%c44] : memref<98xf32, #tpu.memory_space<smem>>
    %c93 = arith.constant 93 : index
    %694 = memref.load %arg5[%c93] : memref<98xf32, #tpu.memory_space<smem>>
    %695 = vector.broadcast %693 : f32 to vector<4x1xf32>
    %696 = vector.broadcast %694 : f32 to vector<4x1xf32>
    %697 = arith.select %72, %695, %696 : vector<4x1xi1>, vector<4x1xf32>
    %698 = arith.andi %48, %57 : vector<1x256xi1>
    %699 = vector.broadcast %697 : vector<4x1xf32> to vector<4x256xf32>
    %700 = arith.mulf %699, %692 : vector<4x256xf32>
    %cst_107 = arith.constant 0.000000e+00 : f32
    %701 = vector.shape_cast %698 : vector<1x256xi1> to vector<1x256xi1>
    %702 = vector.broadcast %701 : vector<1x256xi1> to vector<4x256xi1>
    %703 = vector.broadcast %cst_107 : f32 to vector<4x256xf32>
    %704 = arith.select %702, %700, %703 : vector<4x256xi1>, vector<4x256xf32>
    %705 = arith.addf %649, %704 : vector<4x256xf32>
    %c208_i32 = arith.constant 208 : i32
    %706 = tpu.dynamic_rotate %27 by %c208_i32 dim 1 : vector<4x256xf32>, i32 -> vector<4x256xf32>
    %c45 = arith.constant 45 : index
    %707 = memref.load %arg5[%c45] : memref<98xf32, #tpu.memory_space<smem>>
    %c94 = arith.constant 94 : index
    %708 = memref.load %arg5[%c94] : memref<98xf32, #tpu.memory_space<smem>>
    %709 = vector.broadcast %707 : f32 to vector<4x1xf32>
    %710 = vector.broadcast %708 : f32 to vector<4x1xf32>
    %711 = arith.select %72, %709, %710 : vector<4x1xi1>, vector<4x1xf32>
    %712 = arith.andi %48, %60 : vector<1x256xi1>
    %713 = vector.broadcast %711 : vector<4x1xf32> to vector<4x256xf32>
    %714 = arith.mulf %713, %706 : vector<4x256xf32>
    %cst_108 = arith.constant 0.000000e+00 : f32
    %715 = vector.shape_cast %712 : vector<1x256xi1> to vector<1x256xi1>
    %716 = vector.broadcast %715 : vector<1x256xi1> to vector<4x256xi1>
    %717 = vector.broadcast %cst_108 : f32 to vector<4x256xf32>
    %718 = arith.select %716, %714, %717 : vector<4x256xi1>, vector<4x256xf32>
    %719 = arith.addf %663, %718 : vector<4x256xf32>
    %c207_i32 = arith.constant 207 : i32
    %720 = tpu.dynamic_rotate %27 by %c207_i32 dim 1 : vector<4x256xf32>, i32 -> vector<4x256xf32>
    %c46 = arith.constant 46 : index
    %721 = memref.load %arg5[%c46] : memref<98xf32, #tpu.memory_space<smem>>
    %c95 = arith.constant 95 : index
    %722 = memref.load %arg5[%c95] : memref<98xf32, #tpu.memory_space<smem>>
    %723 = vector.broadcast %721 : f32 to vector<4x1xf32>
    %724 = vector.broadcast %722 : f32 to vector<4x1xf32>
    %725 = arith.select %72, %723, %724 : vector<4x1xi1>, vector<4x1xf32>
    %726 = arith.andi %48, %63 : vector<1x256xi1>
    %727 = vector.broadcast %725 : vector<4x1xf32> to vector<4x256xf32>
    %728 = arith.mulf %727, %720 : vector<4x256xf32>
    %cst_109 = arith.constant 0.000000e+00 : f32
    %729 = vector.shape_cast %726 : vector<1x256xi1> to vector<1x256xi1>
    %730 = vector.broadcast %729 : vector<1x256xi1> to vector<4x256xi1>
    %731 = vector.broadcast %cst_109 : f32 to vector<4x256xf32>
    %732 = arith.select %730, %728, %731 : vector<4x256xi1>, vector<4x256xf32>
    %733 = arith.addf %677, %732 : vector<4x256xf32>
    %c206_i32 = arith.constant 206 : i32
    %734 = tpu.dynamic_rotate %27 by %c206_i32 dim 1 : vector<4x256xf32>, i32 -> vector<4x256xf32>
    %c47 = arith.constant 47 : index
    %735 = memref.load %arg5[%c47] : memref<98xf32, #tpu.memory_space<smem>>
    %c96 = arith.constant 96 : index
    %736 = memref.load %arg5[%c96] : memref<98xf32, #tpu.memory_space<smem>>
    %737 = vector.broadcast %735 : f32 to vector<4x1xf32>
    %738 = vector.broadcast %736 : f32 to vector<4x1xf32>
    %739 = arith.select %72, %737, %738 : vector<4x1xi1>, vector<4x1xf32>
    %740 = arith.andi %48, %66 : vector<1x256xi1>
    %741 = vector.broadcast %739 : vector<4x1xf32> to vector<4x256xf32>
    %742 = arith.mulf %741, %734 : vector<4x256xf32>
    %cst_110 = arith.constant 0.000000e+00 : f32
    %743 = vector.shape_cast %740 : vector<1x256xi1> to vector<1x256xi1>
    %744 = vector.broadcast %743 : vector<1x256xi1> to vector<4x256xi1>
    %745 = vector.broadcast %cst_110 : f32 to vector<4x256xf32>
    %746 = arith.select %744, %742, %745 : vector<4x256xi1>, vector<4x256xf32>
    %747 = arith.addf %691, %746 : vector<4x256xf32>
    %c205_i32 = arith.constant 205 : i32
    %748 = tpu.dynamic_rotate %27 by %c205_i32 dim 1 : vector<4x256xf32>, i32 -> vector<4x256xf32>
    %c48 = arith.constant 48 : index
    %749 = memref.load %arg5[%c48] : memref<98xf32, #tpu.memory_space<smem>>
    %c97 = arith.constant 97 : index
    %750 = memref.load %arg5[%c97] : memref<98xf32, #tpu.memory_space<smem>>
    %751 = vector.broadcast %749 : f32 to vector<4x1xf32>
    %752 = vector.broadcast %750 : f32 to vector<4x1xf32>
    %753 = arith.select %72, %751, %752 : vector<4x1xi1>, vector<4x1xf32>
    %754 = arith.andi %48, %69 : vector<1x256xi1>
    %755 = vector.broadcast %753 : vector<4x1xf32> to vector<4x256xf32>
    %756 = arith.mulf %755, %748 : vector<4x256xf32>
    %cst_111 = arith.constant 0.000000e+00 : f32
    %757 = vector.shape_cast %754 : vector<1x256xi1> to vector<1x256xi1>
    %758 = vector.broadcast %757 : vector<1x256xi1> to vector<4x256xi1>
    %759 = vector.broadcast %cst_111 : f32 to vector<4x256xf32>
    %760 = arith.select %758, %756, %759 : vector<4x256xi1>, vector<4x256xf32>
    %761 = arith.addf %705, %760 : vector<4x256xf32>
    %762 = arith.addf %761, %719 : vector<4x256xf32>
    %763 = arith.addf %733, %747 : vector<4x256xf32>
    %764 = arith.addf %762, %763 : vector<4x256xf32>
    %765 = vector.extract_strided_slice %764 {offsets = [0, 0], sizes = [2, 256], strides = [1, 1]} : vector<4x256xf32> to vector<2x256xf32>
    %766 = vector.extract_strided_slice %764 {offsets = [2, 0], sizes = [2, 256], strides = [1, 1]} : vector<4x256xf32> to vector<2x256xf32>
    %767 = arith.addf %765, %766 : vector<2x256xf32>
    %768 = arith.negf %767 : vector<2x256xf32>
    %769 = math.exp %768 : vector<2x256xf32>
    %cst_112 = arith.constant 1.000000e+00 : f32
    %770 = vector.broadcast %cst_112 : f32 to vector<2x256xf32>
    %771 = arith.addf %770, %769 : vector<2x256xf32>
    %772 = arith.divf %770, %771 : vector<2x256xf32>
    %773 = vector.shape_cast %772 : vector<2x256xf32> to vector<2x1x256xf32>
    %774 = vector.broadcast %773 : vector<2x1x256xf32> to vector<2x32x256xf32>
    %775 = arith.mulf %22, %774 : vector<2x32x256xf32>
    %c0_113 = arith.constant 0 : index
    %c0_114 = arith.constant 0 : index
    %c0_115 = arith.constant 0 : index
    %776 = vector.load %arg6[%c0_113, %c0_114, %c0_115] : memref<2x32x256xf32, #tpu.memory_space<vmem>>, vector<2x32x256xf32>
    tpu.vector_store %arg6[%c0_113, %c0_114, %c0_115], %775 {strides = array<i32>} : memref<2x32x256xf32, #tpu.memory_space<vmem>>, vector<2x32x256xf32>,
    return
  }
  func.func @transform_0(%arg0: i32) -> (i32, i32, i32) {
    %c0_i32 = arith.constant 0 : i32
    %c0_i32_0 = arith.constant 0 : i32
    %c0_i32_1 = arith.constant 0 : i32
    return %arg0, %c0_i32, %c0_i32_0 : i32, i32, i32
  }
  func.func @transform_1(%arg0: i32) -> (i32, i32) {
    %c0_i32 = arith.constant 0 : i32
    %c0_i32_0 = arith.constant 0 : i32
    %c0_i32_1 = arith.constant 0 : i32
    return %c0_i32, %c0_i32_0 : i32, i32
  }
  func.func @transform_2(%arg0: i32) -> (i32, i32) {
    %c0_i32 = arith.constant 0 : i32
    %c0_i32_0 = arith.constant 0 : i32
    %c0_i32_1 = arith.constant 0 : i32
    return %c0_i32, %c0_i32_0 : i32, i32
  }
  func.func @transform_3(%arg0: i32) -> (i32, i32) {
    %c0_i32 = arith.constant 0 : i32
    %c0_i32_0 = arith.constant 0 : i32
    %c0_i32_1 = arith.constant 0 : i32
    return %c0_i32, %c0_i32_0 : i32, i32
  }
  func.func @transform_4(%arg0: i32) -> i32 {
    %c0_i32 = arith.constant 0 : i32
    %c0_i32_0 = arith.constant 0 : i32
    return %c0_i32 : i32
  }
  func.func @transform_5(%arg0: i32) -> (i32, i32, i32) {
    %c0_i32 = arith.constant 0 : i32
    %c0_i32_0 = arith.constant 0 : i32
    %c0_i32_1 = arith.constant 0 : i32
    return %arg0, %c0_i32, %c0_i32_0 : i32, i32, i32
  }
}

</mosaic_0001>

<llo_original>
// kernel: tpu_custom_call.1
$region0: #{tpu_custom_call.1}
  #allocation0 [shape = 'u32[]', space=smem, size = 0x4, offset = 0x4, fixed_abs, tag = 'smem constant byte address 0x4 - core index']
  #allocation1 [shape = 'u32[144,128]{1,0:T(1,128)}', space=vmem, size = 0x12000, scoped, tag = 'internal scratch']
  %s0 = inlined_call_operand.hbm [shape: f32[4,32,256], index: 0, kind: input, shape index: {}]
  %s1 = inlined_call_operand.vmem [shape: f32[32,2], index: 1, kind: input, shape index: {}]
  %s2 = inlined_call_operand.vmem [shape: f32[2,32], index: 2, kind: input, shape index: {}]
  %s3 = inlined_call_operand.vmem [shape: f32[15,256], index: 3, kind: input, shape index: {}]
  %s4 = inlined_call_operand.vmem [shape: f32[98], index: 4, kind: input, shape index: {}]
  %s5 = inlined_call_operand.hbm [shape: f32[4,32,256], index: 5, kind: output, shape index: {}]
  %s6 = sld [smem:[#allocation0]]
  $region61: #{tpu_custom_call.1} parent=0
    _
  %s8 = ssub.s32 1, %s6
  %s9 = scalar_select 0, %s8, %s6
  $region1: #{tpu_custom_call.1} parent=0
    #allocation2 [shape = 'u8[131072]{0}', space=vmem, size = 0x20000, scoped, tag = 'input window, operand 0']
    #allocation3 [shape = 's32[2]{0}', space=sflag, size = 0x8, scoped, tag = 'scoped memory for tpu_custom_call.1']
    #allocation4 [shape = 's32[2]{0}', space=sflag, size = 0x8, scoped, tag = 'scoped memory for tpu_custom_call.1']
    #allocation5 [shape = 's32[2]{0}', space=sflag, size = 0x8, scoped, tag = 'scoped memory for tpu_custom_call.1']
    #allocation6 [shape = 'u8[512]{0}', space=smem, size = 0x200, scoped, tag = 'input window, operand 4, single buffered']
    #allocation7 [shape = 'u8[131072]{0}', space=vmem, size = 0x20000, scoped, tag = 'output window, operand 0']
    %10 = vsyncpa [#allocation3], 0
    %s11 = scalar_lea.sflag [#allocation3], 1
    %12 = vsyncpa %s11, 0
    %13 = vsyncpa [#allocation5], 0
    %14 = vsyncpa [#allocation4], 0
    %s15 = scalar_lea.sflag [#allocation4], 1
    %16 = vsyncpa %s15, 0
    loop: start=0, step=1, limit=4
    $region2: #{tpu_custom_call.1} parent=1 // loop_pre_header
      _
    $region3: #{tpu_custom_call.1} parent=1 // loop_header
      %s18 = sphi 0, %s22
      %p19 = scmp.ge.s32.totalorder %s18, 4
      %s28 = sphi 0, %s30
      %s31 = sphi 0, %s28
      %s32 = sphi 0, %s31
      %s48 = sphi 0, %s32
      %s52 = sphi 0, %s52
      %s54 = sphi 0, %s52
      %s55 = sphi 0, %s54
      %s69 = sphi 0, %s55
      %s73 = sphi 0, %s73
      %s75 = sphi 0, %s73
      %s76 = sphi 0, %s75
      %s90 = sphi 0, %s76
      %s94 = sphi 0, %s94
      %s96 = sphi 0, %s94
      %s97 = sphi 0, %s96
      %s111 = sphi 0, %s97
      %s115 = sphi 0, %s115
      %s117 = sphi 0, %s115
      %s118 = sphi 0, %s117
      %s132 = sphi 0, %s118
      %s138 = sphi 0, %s140
      %s141 = sphi 0, %s138
      %s142 = sphi 0, %s141
      %s158 = sphi 0, %s142
    $region4: #{tpu_custom_call.1} parent=1 // loop_header_branch
      %21 = sbr.rel (%p19) target = $region8
    $region5: #{tpu_custom_call.1} parent=1 // loop_body
      %s23 = ssub.s32 %s18, 1
      %s24 = ssub.s32 %s18, 2
      %s25 = sadd.s32 %s18, 1
      %s26 = ssub.s32 %s18, %s25
      %p27 = scmp.eq.s32.totalorder %s26, 0
      %s29 = sadd.s32 %s28, 1
      %s30 = scalar_select %p27, %s28, %s29
      %p33 = pneg %p27
      %p34 = scmp.eq.s32.totalorder %s18, 1
      %p35 = por %p33, %p34
      %p36 = scmp.ne.s32.totalorder %s28, %s31
      %p37 = scmp.eq.s32.totalorder %s18, 0
      %p38 = por %p36, %p37
      %p39 = scmp.ne.s32.totalorder %s28, %s31
      %p40 = scmp.eq.s32.totalorder %s23, 1
      %p41 = por %p39, %p40
      %p42 = scmp.ne.s32.totalorder %s31, %s32
      %p43 = scmp.eq.s32.totalorder %s23, 0
      %p44 = por %p42, %p43
      %p45 = scmp.ne.s32.totalorder %s31, %s32
      %p46 = scmp.eq.s32.totalorder %s24, 1
      %p47 = por %p45, %p46
      %p49 = scmp.ne.s32.totalorder %s32, %s48
      %p50 = scmp.eq.s32.totalorder %s24, 0
      %p51 = por %p49, %p50
      %s53 = sadd.s32 %s52, 1
      %p56 = scmp.eq.s32.totalorder %s18, 1
      %p57 = scmp.ne.s32.totalorder %s52, %s54
      %p58 = scmp.eq.s32.totalorder %s18, 0
      %p59 = por %p57, %p58
      %p60 = scmp.ne.s32.totalorder %s52, %s54
      %p61 = scmp.eq.s32.totalorder %s23, 1
      %p62 = por %p60, %p61
      %p63 = scmp.ne.s32.totalorder %s54, %s55
      %p64 = scmp.eq.s32.totalorder %s23, 0
      %p65 = por %p63, %p64
      %p66 = scmp.ne.s32.totalorder %s54, %s55
      %p67 = scmp.eq.s32.totalorder %s24, 1
      %p68 = por %p66, %p67
      %p70 = scmp.ne.s32.totalorder %s55, %s69
      %p71 = scmp.eq.s32.totalorder %s24, 0
      %p72 = por %p70, %p71
      %s74 = sadd.s32 %s73, 1
      %p77 = scmp.eq.s32.totalorder %s18, 1
      %p78 = scmp.ne.s32.totalorder %s73, %s75
      %p79 = scmp.eq.s32.totalorder %s18, 0
      %p80 = por %p78, %p79
      %p81 = scmp.ne.s32.totalorder %s73, %s75
      %p82 = scmp.eq.s32.totalorder %s23, 1
      %p83 = por %p81, %p82
      %p84 = scmp.ne.s32.totalorder %s75, %s76
      %p85 = scmp.eq.s32.totalorder %s23, 0
      %p86 = por %p84, %p85
      %p87 = scmp.ne.s32.totalorder %s75, %s76
      %p88 = scmp.eq.s32.totalorder %s24, 1
      %p89 = por %p87, %p88
      %p91 = scmp.ne.s32.totalorder %s76, %s90
      %p92 = scmp.eq.s32.totalorder %s24, 0
      %p93 = por %p91, %p92
      %s95 = sadd.s32 %s94, 1
      %p98 = scmp.eq.s32.totalorder %s18, 1
      %p99 = scmp.ne.s32.totalorder %s94, %s96
      %p100 = scmp.eq.s32.totalorder %s18, 0
      %p101 = por %p99, %p100
      %p102 = scmp.ne.s32.totalorder %s94, %s96
      %p103 = scmp.eq.s32.totalorder %s23, 1
      %p104 = por %p102, %p103
      %p105 = scmp.ne.s32.totalorder %s96, %s97
      %p106 = scmp.eq.s32.totalorder %s23, 0
      %p107 = por %p105, %p106
      %p108 = scmp.ne.s32.totalorder %s96, %s97
      %p109 = scmp.eq.s32.totalorder %s24, 1
      %p110 = por %p108, %p109
      %p112 = scmp.ne.s32.totalorder %s97, %s111
      %p113 = scmp.eq.s32.totalorder %s24, 0
      %p114 = por %p112, %p113
      %s116 = sadd.s32 %s115, 1
      %p119 = scmp.eq.s32.totalorder %s18, 1
      %p120 = scmp.ne.s32.totalorder %s115, %s117
      %p121 = scmp.eq.s32.totalorder %s18, 0
      %p122 = por %p120, %p121
      %p123 = scmp.ne.s32.totalorder %s115, %s117
      %p124 = scmp.eq.s32.totalorder %s23, 1
      %p125 = por %p123, %p124
      %p126 = scmp.ne.s32.totalorder %s117, %s118
      %p127 = scmp.eq.s32.totalorder %s23, 0
      %p128 = por %p126, %p127
      %p129 = scmp.ne.s32.totalorder %s117, %s118
      %p130 = scmp.eq.s32.totalorder %s24, 1
      %p131 = por %p129, %p130
      %p133 = scmp.ne.s32.totalorder %s118, %s132
      %p134 = scmp.eq.s32.totalorder %s24, 0
      %p135 = por %p133, %p134
      %s136 = ssub.s32 %s18, %s25
      %p137 = scmp.eq.s32.totalorder %s136, 0
      %s139 = sadd.s32 %s138, 1
      %s140 = scalar_select %p137, %s138, %s139
      %p143 = pneg %p137
      %p144 = scmp.eq.s32.totalorder %s18, 1
      %p145 = por %p143, %p144
      %p146 = scmp.ne.s32.totalorder %s138, %s141
      %p147 = scmp.eq.s32.totalorder %s18, 0
      %p148 = por %p146, %p147
      %p149 = scmp.ne.s32.totalorder %s138, %s141
      %p150 = scmp.eq.s32.totalorder %s23, 1
      %p151 = por %p149, %p150
      %p152 = scmp.ne.s32.totalorder %s141, %s142
      %p153 = scmp.eq.s32.totalorder %s23, 0
      %p154 = por %p152, %p153
      %p155 = scmp.ne.s32.totalorder %s141, %s142
      %p156 = scmp.eq.s32.totalorder %s24, 1
      %p157 = por %p155, %p156
      %p159 = scmp.ne.s32.totalorder %s142, %s158
      %p160 = scmp.eq.s32.totalorder %s24, 0
      %p161 = por %p159, %p160
      %p162 = scmp.le.s32.totalorder 1, %s18
      %p163 = scmp.lt.s32.totalorder %s18, 3
      %p164 = pnand %p162, %p163
      %p165 = pneg %p164
      // Predicated region
      $region9: #{tpu_custom_call.1} parent=5 // pred_check
        _
      $region10: #{tpu_custom_call.1} parent=5 // pred_check_branch
        %167 = sbr.rel (%p164) target = $region12
      $region11: #{tpu_custom_call.1} parent=5 // pred_region
        %s168 = ssub.s32 %s18, 1
        // Predicated region
        $region13: #{tpu_custom_call.1} parent=11 // pred_check
          %p169 = pneg %p65
        $region14: #{tpu_custom_call.1} parent=11 // pred_check_branch
          %171 = sbr.rel (%p169) target = $region16
        $region15: #{tpu_custom_call.1} parent=11 // pred_region
          _
        $region16: #{tpu_custom_call.1} parent=11 // pred_fallthru
          _
        // Predicated region
        $region17: #{tpu_custom_call.1} parent=11 // pred_check
          %p172 = pneg %p86
        $region18: #{tpu_custom_call.1} parent=11 // pred_check_branch
          %174 = sbr.rel (%p172) target = $region20
        $region19: #{tpu_custom_call.1} parent=11 // pred_region
          _
        $region20: #{tpu_custom_call.1} parent=11 // pred_fallthru
          _
        // Predicated region
        $region21: #{tpu_custom_call.1} parent=11 // pred_check
          %p175 = pneg %p107
        $region22: #{tpu_custom_call.1} parent=11 // pred_check_branch
          %177 = sbr.rel (%p175) target = $region24
        $region23: #{tpu_custom_call.1} parent=11 // pred_region
          _
        $region24: #{tpu_custom_call.1} parent=11 // pred_fallthru
          _
        // Predicated region
        $region25: #{tpu_custom_call.1} parent=11 // pred_check
          %p178 = pneg %p128
        $region26: #{tpu_custom_call.1} parent=11 // pred_check_branch
          %180 = sbr.rel (%p178) target = $region28
        $region27: #{tpu_custom_call.1} parent=11 // pred_region
          %s182 = ssub.s32 16, 16
          %183 = vsyncadd [#allocation5], %s182
          %s185 = sshll.u32 %s4, 4
          %s186 = int_to_ptr.vmem [resolvable:$true] %s185
          %188 = dma.vmem_to_smem %s186, 16, [#allocation6], [#allocation5]
        $region28: #{tpu_custom_call.1} parent=11 // pred_fallthru
          _
      $region12: #{tpu_custom_call.1} parent=5 // pred_fallthru
        _
      %p189 = scmp.lt.s32.totalorder %s18, 2
      // Predicated region
      $region29: #{tpu_custom_call.1} parent=5 // pred_check
        %p190 = pneg %p189
      $region30: #{tpu_custom_call.1} parent=5 // pred_check_branch
        %192 = sbr.rel (%p190) target = $region32
      $region31: #{tpu_custom_call.1} parent=5 // pred_region
        // Predicated region
        $region33: #{tpu_custom_call.1} parent=31 // pred_check
          %p193 = pneg %p38
        $region34: #{tpu_custom_call.1} parent=31 // pred_check_branch
          %195 = sbr.rel (%p193) target = $region36
        $region35: #{tpu_custom_call.1} parent=31 // pred_region
          %s196 = sand.u32 %s28, 1
          %s197 = scalar_lea.sflag [#allocation3], %s196
          %s198 = sand.u32 %s28, 1
          %s199 = smul.addr %s198, 128
          %s200 = scalar_lea.vmem [#allocation2], %s199
          %s201 = smul.u32 2, %s18
          %s203 = ssub.s32 2048, 2048
          %204 = vsyncadd %s197, %s203
          %s205 = smul.addr %s201, 8
          %s206 = smul.addr %s205, 128
          %s207 = scalar_lea.hbm %s0, %s206
          %s208 = sshll.u32 %s200, 4
          %s209 = int_to_ptr.vmem [resolvable:$true] %s208
          %214 = dma.hbm_to_vmem [thread:$0]  %s207, 2048, %s209, %s197, 256, 256, 16
        $region36: #{tpu_custom_call.1} parent=31 // pred_fallthru
          _
      $region32: #{tpu_custom_call.1} parent=5 // pred_fallthru
        _
      %p215 = scmp.le.s32.totalorder 1, %s18
      %p216 = scmp.lt.s32.totalorder %s18, 3
      %p217 = pnand %p215, %p216
      %p218 = pneg %p217
      // Predicated region
      $region37: #{tpu_custom_call.1} parent=5 // pred_check
        _
      $region38: #{tpu_custom_call.1} parent=5 // pred_check_branch
        %220 = sbr.rel (%p217) target = $region40
      $region39: #{tpu_custom_call.1} parent=5 // pred_region
        %s221 = ssub.s32 %s18, 1
        %s222 = sand.u32 %s31, 1
        %s223 = scalar_lea.sflag [#allocation3], %s222
        %s224 = sand.u32 %s31, 1
        %s225 = smul.addr %s224, 128
        %s226 = scalar_lea.vmem [#allocation2], %s225
        // Predicated region
        $region41: #{tpu_custom_call.1} parent=39 // pred_check
          %p227 = pneg %p44
        $region42: #{tpu_custom_call.1} parent=39 // pred_check_branch
          %229 = sbr.rel (%p227) target = $region44
        $region43: #{tpu_custom_call.1} parent=39 // pred_region
          %230 = dma.done %s223, 2048
        $region44: #{tpu_custom_call.1} parent=39 // pred_fallthru
          _
        // Predicated region
        $region45: #{tpu_custom_call.1} parent=39 // pred_check
          %p231 = pneg %p128
        $region46: #{tpu_custom_call.1} parent=39 // pred_check_branch
          %233 = sbr.rel (%p231) target = $region48
        $region47: #{tpu_custom_call.1} parent=39 // pred_region
          %234 = dma.done [#allocation5], 16
        $region48: #{tpu_custom_call.1} parent=39 // pred_fallthru
          _
        %235 = sfence
        %s236 = sand.u32 %s31, 1
        %s237 = scalar_lea.sflag [#allocation3], %s236
        %s238 = sand.u32 %s31, 1
        %s239 = smul.addr %s238, 128
        %s240 = scalar_lea.vmem [#allocation2], %s239
        %p241 = pneg %p44
        %p242 = pneg %p41
        %p243 = pneg %p65
        %p244 = pneg %p62
        %p245 = pneg %p86
        %p246 = pneg %p83
        %p247 = pneg %p107
        %p248 = pneg %p104
        %p249 = pneg %p128
        %p250 = pneg %p125
        %p251 = pneg %p154
        %p252 = pneg %p151
        %s253 = sand.u32 %s141, 1
        %s254 = scalar_lea.sflag [#allocation4], %s253
        %s255 = sand.u32 %s141, 1
        %s256 = smul.addr %s255, 128
        %s257 = scalar_lea.vmem [#allocation7], %s256
        %s258 = smul.u32 2, %s23
        %s259 = smul.u32 2, %s23
        %v260 = vld [vmem:[%s226] sm:$0xff]
        %v261 = vld [vmem:[%s226 + $0x8] sm:$0xff]
        %v262 = vld [vmem:[%s226 + $0x10] sm:$0xff]
        %v263 = vld [vmem:[%s226 + $0x18] sm:$0xff]
        %v264 = vld [vmem:[%s226 + $0x20] sm:$0xff]
        %v265 = vld [vmem:[%s226 + $0x28] sm:$0xff]
        %v266 = vld [vmem:[%s226 + $0x30] sm:$0xff]
        %v267 = vld [vmem:[%s226 + $0x38] sm:$0xff]
        %v268 = vld [vmem:[%s226 + $0x40] sm:$0xff]
        %v269 = vld [vmem:[%s226 + $0x48] sm:$0xff]
        %v270 = vld [vmem:[%s226 + $0x50] sm:$0xff]
        %v271 = vld [vmem:[%s226 + $0x58] sm:$0xff]
        %v272 = vld [vmem:[%s226 + $0x60] sm:$0xff]
        %v273 = vld [vmem:[%s226 + $0x68] sm:$0xff]
        %v274 = vld [vmem:[%s226 + $0x70] sm:$0xff]
        %v275 = vld [vmem:[%s226 + $0x78] sm:$0xff]
        %v276 = vadd.f32 %v260, %v261
        %277 = vadd.xlane.f32.xlu0 %v276
        %v278 = vpop.xlane.xlu0 %277
        %v279 = vadd.f32 %v262, %v263
        %280 = vadd.xlane.f32.xlu0 %v279
        %v281 = vpop.xlane.xlu0 %280
        %v282 = vadd.f32 %v264, %v265
        %283 = vadd.xlane.f32.xlu0 %v282
        %v284 = vpop.xlane.xlu0 %283
        %v285 = vadd.f32 %v266, %v267
        %286 = vadd.xlane.f32.xlu0 %v285
        %v287 = vpop.xlane.xlu0 %286
        %v288 = vadd.f32 %v268, %v269
        %289 = vadd.xlane.f32.xlu0 %v288
        %v290 = vpop.xlane.xlu0 %289
        %v291 = vadd.f32 %v270, %v271
        %292 = vadd.xlane.f32.xlu0 %v291
        %v293 = vpop.xlane.xlu0 %292
        %v294 = vadd.f32 %v272, %v273
        %295 = vadd.xlane.f32.xlu0 %v294
        %v296 = vpop.xlane.xlu0 %295
        %v297 = vadd.f32 %v274, %v275
        %298 = vadd.xlane.f32.xlu0 %v297
        %v299 = vpop.xlane.xlu0 %298
        %v300 = vmul.f32 %v278, 0.00390625
        %v301 = vmul.f32 %v281, 0.00390625
        %v302 = vmul.f32 %v284, 0.00390625
        %v303 = vmul.f32 %v287, 0.00390625
        %v304 = vmul.f32 %v290, 0.00390625
        %v305 = vmul.f32 %v293, 0.00390625
        %v306 = vmul.f32 %v296, 0.00390625
        %v307 = vmul.f32 %v299, 0.00390625
        %v308 = vmax.f32 %v260, %v261
        %309 = vmax.xlane.f32.xlu0 %v308
        %v310 = vpop.xlane.xlu0 %309
        %v311 = vmax.f32 %v262, %v263
        %312 = vmax.xlane.f32.xlu0 %v311
        %v313 = vpop.xlane.xlu0 %312
        %v314 = vmax.f32 %v264, %v265
        %315 = vmax.xlane.f32.xlu0 %v314
        %v316 = vpop.xlane.xlu0 %315
        %v317 = vmax.f32 %v266, %v267
        %318 = vmax.xlane.f32.xlu0 %v317
        %v319 = vpop.xlane.xlu0 %318
        %v320 = vmax.f32 %v268, %v269
        %321 = vmax.xlane.f32.xlu0 %v320
        %v322 = vpop.xlane.xlu0 %321
        %v323 = vmax.f32 %v270, %v271
        %324 = vmax.xlane.f32.xlu0 %v323
        %v325 = vpop.xlane.xlu0 %324
        %v326 = vmax.f32 %v272, %v273
        %327 = vmax.xlane.f32.xlu0 %v326
        %v328 = vpop.xlane.xlu0 %327
        %v329 = vmax.f32 %v274, %v275
        %330 = vmax.xlane.f32.xlu0 %v329
        %v331 = vpop.xlane.xlu0 %330
        %v340 = vlaneseq
        %v341 = vand.u32 %v340, 127
        %v342 = vlaneseq
        %v343 = vshrl.u32 %v342, 7
        %v344 = vsub.s32 %v341, %v343
        %v345 = vrot.slane %v300, %v344
        %v346 = vadd.s32 %v341, 4294967288
        %v347 = vlaneseq
        %v348 = vshrl.u32 %v347, 7
        %v349 = vsub.s32 %v346, %v348
        %v350 = vrot.slane %v301, %v349
        %vm351 = vcmask 130112
        %v352 = vsel %vm351, %v350, %v345
        %v353 = vadd.s32 %v341, 4294967280
        %v354 = vlaneseq
        %v355 = vshrl.u32 %v354, 7
        %v356 = vsub.s32 %v353, %v355
        %v357 = vrot.slane %v302, %v356
        %vm358 = vcmask 195712
        %v359 = vsel %vm358, %v357, %v352
        %v360 = vadd.s32 %v341, 4294967272
        %v361 = vlaneseq
        %v362 = vshrl.u32 %v361, 7
        %v363 = vsub.s32 %v360, %v362
        %v364 = vrot.slane %v303, %v363
        %vm365 = vcmask 261312
        %v366 = vsel %vm365, %v364, %v359
        %v367 = vlaneseq
        %v368 = vshrl.u32 %v367, 7
        %v369 = vsub.s32 %v341, %v368
        %v370 = vrot.slane %v304, %v369
        %v371 = vlaneseq
        %v372 = vshrl.u32 %v371, 7
        %v373 = vsub.s32 %v346, %v372
        %v374 = vrot.slane %v305, %v373
        %v375 = vsel %vm351, %v374, %v370
        %v376 = vlaneseq
        %v377 = vshrl.u32 %v376, 7
        %v378 = vsub.s32 %v353, %v377
        %v379 = vrot.slane %v306, %v378
        %v380 = vsel %vm358, %v379, %v375
        %v381 = vlaneseq
        %v382 = vshrl.u32 %v381, 7
        %v383 = vsub.s32 %v360, %v382
        %v384 = vrot.slane %v307, %v383
        %v385 = vsel %vm365, %v384, %v380
        %vm386 = vcmask 1041409
        %v387 = vsel %vm386, %v385, %v366
        %v397 = vlaneseq
        %v398 = vshrl.u32 %v397, 7
        %v399 = vsub.s32 %v341, %v398
        %v400 = vrot.slane %v310, %v399
        %v401 = vlaneseq
        %v402 = vshrl.u32 %v401, 7
        %v403 = vsub.s32 %v346, %v402
        %v404 = vrot.slane %v313, %v403
        %v405 = vsel %vm351, %v404, %v400
        %v406 = vlaneseq
        %v407 = vshrl.u32 %v406, 7
        %v408 = vsub.s32 %v353, %v407
        %v409 = vrot.slane %v316, %v408
        %v410 = vsel %vm358, %v409, %v405
        %v411 = vlaneseq
        %v412 = vshrl.u32 %v411, 7
        %v413 = vsub.s32 %v360, %v412
        %v414 = vrot.slane %v319, %v413
        %v415 = vsel %vm365, %v414, %v410
        %v416 = vlaneseq
        %v417 = vshrl.u32 %v416, 7
        %v418 = vsub.s32 %v341, %v417
        %v419 = vrot.slane %v322, %v418
        %v420 = vlaneseq
        %v421 = vshrl.u32 %v420, 7
        %v422 = vsub.s32 %v346, %v421
        %v423 = vrot.slane %v325, %v422
        %v424 = vsel %vm351, %v423, %v419
        %v425 = vlaneseq
        %v426 = vshrl.u32 %v425, 7
        %v427 = vsub.s32 %v353, %v426
        %v428 = vrot.slane %v328, %v427
        %v429 = vsel %vm358, %v428, %v424
        %v430 = vlaneseq
        %v431 = vshrl.u32 %v430, 7
        %v432 = vsub.s32 %v360, %v431
        %v433 = vrot.slane %v331, %v432
        %v434 = vsel %vm365, %v433, %v429
        %vm435 = vcmask 1043459
        %v436 = vsel %vm435, %v434, %v415
        %vm438 = vcmask 1041408
        %v439 = vsel %vm438, %v387, %v436
        %v440 = vld [vmem:[%s1] sm:$0xff]
        %v441 = vld [vmem:[%s1 + $0x8] sm:$0xff]
        %v442 = vld [vmem:[%s1 + $0x10] sm:$0xff]
        %v443 = vld [vmem:[%s1 + $0x18] sm:$0xff]
        %v444 = vld [vmem:[%s2] sm:$0x3]
        %vm445 = vcmask 261120
        %v447 = vsel %vm445, %v439, 0
        %449 = vmatprep.subr.mxu0 0.0
        %450 = vmatpush1.msra.mxu0 0.0
        %451 = vmatprep.subr.mxu0 0.0
        %452 = vmatpush1.msra.mxu0 0.0
        %453 = vmatprep.subr.mxu0 0.0
        %454 = vmatpush1.msra.mxu0 0.0
        %455 = vmatprep.subr.mxu0 0.0
        %456 = vmatpush1.msra.mxu0 0.0
        %457 = vmatprep.subr.mxu0 0.0
        %458 = vmatpush1.msra.mxu0 0.0
        %459 = vmatprep.subr.mxu0 0.0
        %460 = vmatpush1.msra.mxu0 0.0
        %461 = vmatprep.subr.mxu0 0.0
        %462 = vmatpush1.msra.mxu0 0.0
        %463 = vmatprep.subr.mxu0 0.0
        %464 = vmatpush1.msra.mxu0 0.0
        %465 = vmatprep.subr.mxu0 0.0
        %466 = vmatpush1.msra.mxu0 0.0
        %467 = vmatprep.subr.mxu0 0.0
        %468 = vmatpush1.msra.mxu0 0.0
        %469 = vmatprep.subr.mxu0 0.0
        %470 = vmatpush1.msra.mxu0 0.0
        %471 = vmatprep.subr.mxu0 0.0
        %472 = vmatpush1.msra.mxu0 0.0
        %473 = vmatprep.subr.mxu0 0.0
        %474 = vmatpush1.msra.mxu0 %v443
        %475 = vmatprep.subr.mxu0 0.0
        %476 = vmatpush1.msra.mxu0 %v442
        %477 = vmatprep.subr.mxu0 0.0
        %478 = vmatpush1.msra.mxu0 %v441
        %479 = vmatprep.subr.mxu0 0.0
        %480 = vmatpush1.msra.mxu0 %v440
        %481 = vmatprep.subr.mxu0 0.0
        %482 = vmatpush2.msra.mxu0 0.0
        %483 = vmatprep.subr.mxu0 0.0
        %484 = vmatpush2.msra.mxu0 0.0
        %485 = vmatprep.subr.mxu0 0.0
        %486 = vmatpush2.msra.mxu0 0.0
        %487 = vmatprep.subr.mxu0 0.0
        %488 = vmatpush2.msra.mxu0 0.0
        %489 = vmatprep.subr.mxu0 0.0
        %490 = vmatpush2.msra.mxu0 0.0
        %491 = vmatprep.subr.mxu0 0.0
        %492 = vmatpush2.msra.mxu0 0.0
        %493 = vmatprep.subr.mxu0 0.0
        %494 = vmatpush2.msra.mxu0 0.0
        %495 = vmatprep.subr.mxu0 0.0
        %496 = vmatpush2.msra.mxu0 0.0
        %497 = vmatprep.subr.mxu0 0.0
        %498 = vmatpush2.msra.mxu0 0.0
        %499 = vmatprep.subr.mxu0 0.0
        %500 = vmatpush2.msra.mxu0 0.0
        %501 = vmatprep.subr.mxu0 0.0
        %502 = vmatpush2.msra.mxu0 0.0
        %503 = vmatprep.subr.mxu0 0.0
        %504 = vmatpush2.msra.mxu0 0.0
        %505 = vmatprep.subr.mxu0 0.0
        %506 = vmatpush2.msra.mxu0 0.0
        %507 = vmatprep.subr.mxu0 0.0
        %508 = vmatpush2.msra.mxu0 0.0
        %509 = vmatprep.subr.mxu0 0.0
        %510 = vmatpush2.msra.mxu0 0.0
        %511 = vmatprep.subr.mxu0 0.0
        %512 = vmatpush2.msra.mxu0 0.0
        %513 = vmatprep.mubr.f32.mxu0 0.0
        %514 = vmatmul.mubr.f32.gmra.mxu0 %v447
        %v515 = vpop.f32.mrf.mxu0
        %v516 = vadd.f32 0.0, %v515
        %v517 = vpop.f32.mrf.mxu0
        %518 = vdwg.mxu0
        %v519 = vmax.f32 %v516, 0.0
        %vm520 = vcmask 15360
        %v522 = vsel %vm520, %v519, 0
        %v525 = vsel %vm438, %v444, 0
        %527 = vmatprep.subr.mxu0 0.0
        %528 = vmatpush1.msra.mxu0 0.0
        %529 = vmatprep.subr.mxu0 0.0
        %530 = vmatpush1.msra.mxu0 0.0
        %531 = vmatprep.subr.mxu0 0.0
        %532 = vmatpush1.msra.mxu0 0.0
        %533 = vmatprep.subr.mxu0 0.0
        %534 = vmatpush1.msra.mxu0 0.0
        %535 = vmatprep.subr.mxu0 0.0
        %536 = vmatpush1.msra.mxu0 0.0
        %537 = vmatprep.subr.mxu0 0.0
        %538 = vmatpush1.msra.mxu0 0.0
        %539 = vmatprep.subr.mxu0 0.0
        %540 = vmatpush1.msra.mxu0 0.0
        %541 = vmatprep.subr.mxu0 0.0
        %542 = vmatpush1.msra.mxu0 0.0
        %543 = vmatprep.subr.mxu0 0.0
        %544 = vmatpush1.msra.mxu0 0.0
        %545 = vmatprep.subr.mxu0 0.0
        %546 = vmatpush1.msra.mxu0 0.0
        %547 = vmatprep.subr.mxu0 0.0
        %548 = vmatpush1.msra.mxu0 0.0
        %549 = vmatprep.subr.mxu0 0.0
        %550 = vmatpush1.msra.mxu0 0.0
        %551 = vmatprep.subr.mxu0 0.0
        %552 = vmatpush1.msra.mxu0 0.0
        %553 = vmatprep.subr.mxu0 0.0
        %554 = vmatpush1.msra.mxu0 0.0
        %555 = vmatprep.subr.mxu0 0.0
        %556 = vmatpush1.msra.mxu0 0.0
        %557 = vmatprep.subr.mxu0 0.0
        %558 = vmatpush1.msra.mxu0 %v525
        %559 = vmatprep.subr.mxu0 0.0
        %560 = vmatpush2.msra.mxu0 0.0
        %561 = vmatprep.subr.mxu0 0.0
        %562 = vmatpush2.msra.mxu0 0.0
        %563 = vmatprep.subr.mxu0 0.0
        %564 = vmatpush2.msra.mxu0 0.0
        %565 = vmatprep.subr.mxu0 0.0
        %566 = vmatpush2.msra.mxu0 0.0
        %567 = vmatprep.subr.mxu0 0.0
        %568 = vmatpush2.msra.mxu0 0.0
        %569 = vmatprep.subr.mxu0 0.0
        %570 = vmatpush2.msra.mxu0 0.0
        %571 = vmatprep.subr.mxu0 0.0
        %572 = vmatpush2.msra.mxu0 0.0
        %573 = vmatprep.subr.mxu0 0.0
        %574 = vmatpush2.msra.mxu0 0.0
        %575 = vmatprep.subr.mxu0 0.0
        %576 = vmatpush2.msra.mxu0 0.0
        %577 = vmatprep.subr.mxu0 0.0
        %578 = vmatpush2.msra.mxu0 0.0
        %579 = vmatprep.subr.mxu0 0.0
        %580 = vmatpush2.msra.mxu0 0.0
        %581 = vmatprep.subr.mxu0 0.0
        %582 = vmatpush2.msra.mxu0 0.0
        %583 = vmatprep.subr.mxu0 0.0
        %584 = vmatpush2.msra.mxu0 0.0
        %585 = vmatprep.subr.mxu0 0.0
        %586 = vmatpush2.msra.mxu0 0.0
        %587 = vmatprep.subr.mxu0 0.0
        %588 = vmatpush2.msra.mxu0 0.0
        %589 = vmatprep.subr.mxu0 0.0
        %590 = vmatpush2.msra.mxu0 0.0
        %591 = vmatprep.mubr.f32.mxu0 0.0
        %592 = vmatmul.mubr.f32.gmra.mxu0 %v522
        %v593 = vpop.f32.mrf.mxu0
        %v594 = vadd.f32 0.0, %v593
        %v595 = vpop.f32.mrf.mxu0
        %596 = vdwg.mxu0
        %v598 = vrot.slane %v594, 2
        %v600 = vadd.f32 %v594, %v598
        %v601 = vxor.u32 %v600, 2147483648
        %v602 = vmul.f32 %v601, 1.442695
        %v603 = vpow.pop %v602
        %v604 = vadd.f32 %v603, 1.0
        %v605 = vrcp.pop %v604
        %v606 = vmul.f32 1.0, %v605
        %v607 = vlaneseq
        %v608 = vshrl.u32 %v607, 7
        %v609 = vsub.s32 0, %v608
        %v610 = vrot.slane %v606, %v609
        %612 = vbcast.lane.b32.xlu0 %v610, 256
        %v613 = vpop.permute.xlu0 %612
        %s615 = sor.u32 256, 8
        %616 = vbcast.lane.b32.xlu0 %v610, %s615
        %v617 = vpop.permute.xlu0 %616
        %s619 = sor.u32 256, 16
        %620 = vbcast.lane.b32.xlu0 %v610, %s619
        %v621 = vpop.permute.xlu0 %620
        %s623 = sor.u32 256, 24
        %624 = vbcast.lane.b32.xlu0 %v610, %s623
        %v625 = vpop.permute.xlu0 %624
        %v626 = vlaneseq
        %v627 = vshrl.u32 %v626, 7
        %v628 = vsub.s32 1, %v627
        %v629 = vrot.slane %v606, %v628
        %631 = vbcast.lane.b32.xlu0 %v629, 256
        %v632 = vpop.permute.xlu0 %631
        %s634 = sor.u32 256, 8
        %635 = vbcast.lane.b32.xlu0 %v629, %s634
        %v636 = vpop.permute.xlu0 %635
        %s638 = sor.u32 256, 16
        %639 = vbcast.lane.b32.xlu0 %v629, %s638
        %v640 = vpop.permute.xlu0 %639
        %s642 = sor.u32 256, 24
        %643 = vbcast.lane.b32.xlu0 %v629, %s642
        %v644 = vpop.permute.xlu0 %643
        %v645 = vmul.f32 %v260, %v613
        %v646 = vmul.f32 %v261, %v613
        %v647 = vmul.f32 %v262, %v617
        %v648 = vmul.f32 %v263, %v617
        %v649 = vmul.f32 %v264, %v621
        %v650 = vmul.f32 %v265, %v621
        %v651 = vmul.f32 %v266, %v625
        %v652 = vmul.f32 %v267, %v625
        %v653 = vmul.f32 %v268, %v632
        %v654 = vmul.f32 %v269, %v632
        %v655 = vmul.f32 %v270, %v636
        %v656 = vmul.f32 %v271, %v636
        %v657 = vmul.f32 %v272, %v640
        %v658 = vmul.f32 %v273, %v640
        %v659 = vmul.f32 %v274, %v644
        %v660 = vmul.f32 %v275, %v644
        %v661 = vadd.f32 %v645, %v647
        %v662 = vadd.f32 %v661, %v649
        %v663 = vadd.f32 %v662, %v651
        %v664 = vrot.slane %v663, 4
        %v665 = vadd.f32 %v663, %v664
        %v666 = vrot.slane %v665, 2
        %v667 = vadd.f32 %v665, %v666
        %v668 = vrot.slane %v667, 1
        %v669 = vadd.f32 %v667, %v668
        %v670 = vadd.f32 %v646, %v648
        %v671 = vadd.f32 %v670, %v650
        %v672 = vadd.f32 %v671, %v652
        %v673 = vrot.slane %v672, 4
        %v674 = vadd.f32 %v672, %v673
        %v675 = vrot.slane %v674, 2
        %v676 = vadd.f32 %v674, %v675
        %v677 = vrot.slane %v676, 1
        %v678 = vadd.f32 %v676, %v677
        %v679 = vadd.f32 %v653, %v655
        %v680 = vadd.f32 %v679, %v657
        %v681 = vadd.f32 %v680, %v659
        %v682 = vrot.slane %v681, 4
        %v683 = vadd.f32 %v681, %v682
        %v684 = vrot.slane %v683, 2
        %v685 = vadd.f32 %v683, %v684
        %v686 = vrot.slane %v685, 1
        %v687 = vadd.f32 %v685, %v686
        %v688 = vadd.f32 %v654, %v656
        %v689 = vadd.f32 %v688, %v658
        %v690 = vadd.f32 %v689, %v660
        %v691 = vrot.slane %v690, 4
        %v692 = vadd.f32 %v690, %v691
        %v693 = vrot.slane %v692, 2
        %v694 = vadd.f32 %v692, %v693
        %v695 = vrot.slane %v694, 1
        %v696 = vadd.f32 %v694, %v695
        %v697 = vrcp.pop 32.0
        %v698 = vmul.f32 %v669, %v697
        %v699 = vmul.f32 %v678, %v697
        %v700 = vmul.f32 %v687, %v697
        %v701 = vmul.f32 %v696, %v697
        %v702 = vmax.f32 %v645, %v647
        %v703 = vmax.f32 %v702, %v649
        %v704 = vmax.f32 %v703, %v651
        %v705 = vrot.slane %v704, 4
        %v706 = vmax.f32 %v704, %v705
        %v707 = vrot.slane %v706, 2
        %v708 = vmax.f32 %v706, %v707
        %v709 = vrot.slane %v708, 1
        %v710 = vmax.f32 %v708, %v709
        %v711 = vmax.f32 %v646, %v648
        %v712 = vmax.f32 %v711, %v650
        %v713 = vmax.f32 %v712, %v652
        %v714 = vrot.slane %v713, 4
        %v715 = vmax.f32 %v713, %v714
        %v716 = vrot.slane %v715, 2
        %v717 = vmax.f32 %v715, %v716
        %v718 = vrot.slane %v717, 1
        %v719 = vmax.f32 %v717, %v718
        %v720 = vmax.f32 %v653, %v655
        %v721 = vmax.f32 %v720, %v657
        %v722 = vmax.f32 %v721, %v659
        %v723 = vrot.slane %v722, 4
        %v724 = vmax.f32 %v722, %v723
        %v725 = vrot.slane %v724, 2
        %v726 = vmax.f32 %v724, %v725
        %v727 = vrot.slane %v726, 1
        %v728 = vmax.f32 %v726, %v727
        %v729 = vmax.f32 %v654, %v656
        %v730 = vmax.f32 %v729, %v658
        %v731 = vmax.f32 %v730, %v660
        %v732 = vrot.slane %v731, 4
        %v733 = vmax.f32 %v731, %v732
        %v734 = vrot.slane %v733, 2
        %v735 = vmax.f32 %v733, %v734
        %v736 = vrot.slane %v735, 1
        %v737 = vmax.f32 %v735, %v736
        %v742 = vsel %vm386, %v700, %v698
        %v743 = vsel %vm386, %v701, %v699
        %v750 = vsel %vm435, %v728, %v710
        %v751 = vsel %vm435, %v737, %v719
        %v754 = vsel %vm438, %v742, %v750
        %v755 = vsel %vm438, %v743, %v751
        %v756 = vld [vmem:[%s3] ss:$8 sm:$0x3]
        %vm757 = vcmp.gt.f32.partialorder %v756, 0.5
        %s758 = scalar_lea.vmem %s3, 1
        %v759 = vld [vmem:[%s758] ss:$8 sm:$0x3]
        %vm760 = vcmp.gt.f32.partialorder %v759, 0.5
        %s761 = scalar_lea.vmem %s3, 2
        %v762 = vld [vmem:[%s761] ss:$8 sm:$0x3]
        %vm763 = vcmp.gt.f32.partialorder %v762, 0.5
        %s764 = scalar_lea.vmem %s3, 3
        %v765 = vld [vmem:[%s764] ss:$8 sm:$0x3]
        %vm766 = vcmp.gt.f32.partialorder %v765, 0.5
        %s767 = scalar_lea.vmem %s3, 4
        %v768 = vld [vmem:[%s767] ss:$8 sm:$0x3]
        %vm769 = vcmp.gt.f32.partialorder %v768, 0.5
        %s770 = scalar_lea.vmem %s3, 5
        %v771 = vld [vmem:[%s770] ss:$8 sm:$0x3]
        %vm772 = vcmp.gt.f32.partialorder %v771, 0.5
        %s773 = scalar_lea.vmem %s3, 6
        %v774 = vld [vmem:[%s773] ss:$8 sm:$0x3]
        %vm775 = vcmp.gt.f32.partialorder %v774, 0.5
        %s776 = scalar_lea.vmem %s3, 7
        %v777 = vld [vmem:[%s776] ss:$8 sm:$0x3]
        %vm778 = vcmp.gt.f32.partialorder %v777, 0.5
        %s779 = scalar_lea.vmem %s3, 16
        %v780 = vld [vmem:[%s779] ss:$8 sm:$0x3]
        %vm781 = vcmp.gt.f32.partialorder %v780, 0.5
        %s782 = scalar_lea.vmem %s3, 17
        %v783 = vld [vmem:[%s782] ss:$8 sm:$0x3]
        %vm784 = vcmp.gt.f32.partialorder %v783, 0.5
        %s785 = scalar_lea.vmem %s3, 18
        %v786 = vld [vmem:[%s785] ss:$8 sm:$0x3]
        %vm787 = vcmp.gt.f32.partialorder %v786, 0.5
        %s788 = scalar_lea.vmem %s3, 19
        %v789 = vld [vmem:[%s788] ss:$8 sm:$0x3]
        %vm790 = vcmp.gt.f32.partialorder %v789, 0.5
        %s791 = scalar_lea.vmem %s3, 20
        %v792 = vld [vmem:[%s791] ss:$8 sm:$0x3]
        %vm793 = vcmp.gt.f32.partialorder %v792, 0.5
        %s794 = scalar_lea.vmem %s3, 21
        %v795 = vld [vmem:[%s794] ss:$8 sm:$0x3]
        %vm796 = vcmp.gt.f32.partialorder %v795, 0.5
        %v797 = vlaneseq
        %v798 = vshrl.u32 %v797, 7
        %vm799 = vcmp.lt.s32.totalorder %v798, 2
        %800 = vrot.lane.b32.xlu0 %v754, 51
        %v801 = vpop.permute.xlu0 %800
        %802 = vrot.lane.b32.xlu0 %v755, 51
        %v803 = vpop.permute.xlu0 %802
        %vm804 = vcmp.lt.s32.totalorder %v341, 51
        %v805 = vsel %vm804, %v801, %v803
        %v806 = vsel %vm804, %v803, %v801
        %s807 = sld [smem:[#allocation6]]
        %s808 = sld [smem:[#allocation6 + $0x31]]
        %v809 = vstv %s807
        %v810 = vstv %s808
        %v811 = vsel %vm799, %v809, %v810
        %vm812 = vmand %vm757, %vm778
        %v813 = vmul.f32 %v811, %v806
        %v814 = vmul.f32 %v811, %v805
        %v815 = vsel %vm812, 1, 0
        %v816 = vlaneseq
        %v817 = vshrl.u32 %v816, 7
        %v818 = vsub.s32 0, %v817
        %v819 = vrot.slane %v815, %v818
        %v820 = vlaneseq
        %v821 = vshrl.u32 %v820, 7
        %v822 = vsub.s32 1, %v821
        %v823 = vrot.slane %v815, %v822
        %vm824 = vcmp.eq.s32.totalorder %v819, 1
        %vm825 = vcmp.eq.s32.totalorder %v823, 1
        %v826 = vsel %vm824, %v813, 0.0
        %v827 = vsel %vm825, %v814, 0.0
        %v828 = vadd.f32 %v826, 0.0
        %v829 = vadd.f32 %v827, 0.0
        %830 = vrot.lane.b32.xlu0 %v754, 50
        %v831 = vpop.permute.xlu0 %830
        %832 = vrot.lane.b32.xlu0 %v755, 50
        %v833 = vpop.permute.xlu0 %832
        %vm834 = vcmp.lt.s32.totalorder %v341, 50
        %v835 = vsel %vm834, %v831, %v833
        %v836 = vsel %vm834, %v833, %v831
        %s837 = sld [smem:[#allocation6 + $0x1]]
        %s838 = sld [smem:[#allocation6 + $0x32]]
        %v839 = vstv %s837
        %v840 = vstv %s838
        %v841 = vsel %vm799, %v839, %v840
        %vm842 = vmand %vm757, %vm781
        %v843 = vmul.f32 %v841, %v836
        %v844 = vmul.f32 %v841, %v835
        %v845 = vsel %vm842, 1, 0
        %v846 = vlaneseq
        %v847 = vshrl.u32 %v846, 7
        %v848 = vsub.s32 0, %v847
        %v849 = vrot.slane %v845, %v848
        %v850 = vlaneseq
        %v851 = vshrl.u32 %v850, 7
        %v852 = vsub.s32 1, %v851
        %v853 = vrot.slane %v845, %v852
        %vm854 = vcmp.eq.s32.totalorder %v849, 1
        %vm855 = vcmp.eq.s32.totalorder %v853, 1
        %v856 = vsel %vm854, %v843, 0.0
        %v857 = vsel %vm855, %v844, 0.0
        %v858 = vadd.f32 %v856, 0.0
        %v859 = vadd.f32 %v857, 0.0
        %860 = vrot.lane.b32.xlu0 %v754, 49
        %v861 = vpop.permute.xlu0 %860
        %862 = vrot.lane.b32.xlu0 %v755, 49
        %v863 = vpop.permute.xlu0 %862
        %vm864 = vcmp.lt.s32.totalorder %v341, 49
        %v865 = vsel %vm864, %v861, %v863
        %v866 = vsel %vm864, %v863, %v861
        %s867 = sld [smem:[#allocation6 + $0x2]]
        %s868 = sld [smem:[#allocation6 + $0x33]]
        %v869 = vstv %s867
        %v870 = vstv %s868
        %v871 = vsel %vm799, %v869, %v870
        %vm872 = vmand %vm757, %vm784
        %v873 = vmul.f32 %v871, %v866
        %v874 = vmul.f32 %v871, %v865
        %v875 = vsel %vm872, 1, 0
        %v876 = vlaneseq
        %v877 = vshrl.u32 %v876, 7
        %v878 = vsub.s32 0, %v877
        %v879 = vrot.slane %v875, %v878
        %v880 = vlaneseq
        %v881 = vshrl.u32 %v880, 7
        %v882 = vsub.s32 1, %v881
        %v883 = vrot.slane %v875, %v882
        %vm884 = vcmp.eq.s32.totalorder %v879, 1
        %vm885 = vcmp.eq.s32.totalorder %v883, 1
        %v886 = vsel %vm884, %v873, 0.0
        %v887 = vsel %vm885, %v874, 0.0
        %v888 = vadd.f32 %v886, 0.0
        %v889 = vadd.f32 %v887, 0.0
        %890 = vrot.lane.b32.xlu0 %v754, 48
        %v891 = vpop.permute.xlu0 %890
        %892 = vrot.lane.b32.xlu0 %v755, 48
        %v893 = vpop.permute.xlu0 %892
        %vm894 = vcmp.lt.s32.totalorder %v341, 48
        %v895 = vsel %vm894, %v891, %v893
        %v896 = vsel %vm894, %v893, %v891
        %s897 = sld [smem:[#allocation6 + $0x3]]
        %s898 = sld [smem:[#allocation6 + $0x34]]
        %v899 = vstv %s897
        %v900 = vstv %s898
        %v901 = vsel %vm799, %v899, %v900
        %vm902 = vmand %vm757, %vm787
        %v903 = vmul.f32 %v901, %v896
        %v904 = vmul.f32 %v901, %v895
        %v905 = vsel %vm902, 1, 0
        %v906 = vlaneseq
        %v907 = vshrl.u32 %v906, 7
        %v908 = vsub.s32 0, %v907
        %v909 = vrot.slane %v905, %v908
        %v910 = vlaneseq
        %v911 = vshrl.u32 %v910, 7
        %v912 = vsub.s32 1, %v911
        %v913 = vrot.slane %v905, %v912
        %vm914 = vcmp.eq.s32.totalorder %v909, 1
        %vm915 = vcmp.eq.s32.totalorder %v913, 1
        %v916 = vsel %vm914, %v903, 0.0
        %v917 = vsel %vm915, %v904, 0.0
        %v918 = vadd.f32 %v916, 0.0
        %v919 = vadd.f32 %v917, 0.0
        %920 = vrot.lane.b32.xlu0 %v754, 47
        %v921 = vpop.permute.xlu0 %920
        %922 = vrot.lane.b32.xlu0 %v755, 47
        %v923 = vpop.permute.xlu0 %922
        %vm924 = vcmp.lt.s32.totalorder %v341, 47
        %v925 = vsel %vm924, %v921, %v923
        %v926 = vsel %vm924, %v923, %v921
        %s927 = sld [smem:[#allocation6 + $0x4]]
        %s928 = sld [smem:[#allocation6 + $0x35]]
        %v929 = vstv %s927
        %v930 = vstv %s928
        %v931 = vsel %vm799, %v929, %v930
        %vm932 = vmand %vm757, %vm790
        %v933 = vmul.f32 %v931, %v926
        %v934 = vmul.f32 %v931, %v925
        %v935 = vsel %vm932, 1, 0
        %v936 = vlaneseq
        %v937 = vshrl.u32 %v936, 7
        %v938 = vsub.s32 0, %v937
        %v939 = vrot.slane %v935, %v938
        %v940 = vlaneseq
        %v941 = vshrl.u32 %v940, 7
        %v942 = vsub.s32 1, %v941
        %v943 = vrot.slane %v935, %v942
        %vm944 = vcmp.eq.s32.totalorder %v939, 1
        %vm945 = vcmp.eq.s32.totalorder %v943, 1
        %v946 = vsel %vm944, %v933, 0.0
        %v947 = vsel %vm945, %v934, 0.0
        %v948 = vadd.f32 %v828, %v946
        %v949 = vadd.f32 %v829, %v947
        %950 = vrot.lane.b32.xlu0 %v754, 46
        %v951 = vpop.permute.xlu0 %950
        %952 = vrot.lane.b32.xlu0 %v755, 46
        %v953 = vpop.permute.xlu0 %952
        %vm954 = vcmp.lt.s32.totalorder %v341, 46
        %v955 = vsel %vm954, %v951, %v953
        %v956 = vsel %vm954, %v953, %v951
        %s957 = sld [smem:[#allocation6 + $0x5]]
        %s958 = sld [smem:[#allocation6 + $0x36]]
        %v959 = vstv %s957
        %v960 = vstv %s958
        %v961 = vsel %vm799, %v959, %v960
        %vm962 = vmand %vm757, %vm793
        %v963 = vmul.f32 %v961, %v956
        %v964 = vmul.f32 %v961, %v955
        %v965 = vsel %vm962, 1, 0
        %v966 = vlaneseq
        %v967 = vshrl.u32 %v966, 7
        %v968 = vsub.s32 0, %v967
        %v969 = vrot.slane %v965, %v968
        %v970 = vlaneseq
        %v971 = vshrl.u32 %v970, 7
        %v972 = vsub.s32 1, %v971
        %v973 = vrot.slane %v965, %v972
        %vm974 = vcmp.eq.s32.totalorder %v969, 1
        %vm975 = vcmp.eq.s32.totalorder %v973, 1
        %v976 = vsel %vm974, %v963, 0.0
        %v977 = vsel %vm975, %v964, 0.0
        %v978 = vadd.f32 %v858, %v976
        %v979 = vadd.f32 %v859, %v977
        %980 = vrot.lane.b32.xlu0 %v754, 45
        %v981 = vpop.permute.xlu0 %980
        %982 = vrot.lane.b32.xlu0 %v755, 45
        %v983 = vpop.permute.xlu0 %982
        %vm984 = vcmp.lt.s32.totalorder %v341, 45
        %v985 = vsel %vm984, %v981, %v983
        %v986 = vsel %vm984, %v983, %v981
        %s987 = sld [smem:[#allocation6 + $0x6]]
        %s988 = sld [smem:[#allocation6 + $0x37]]
        %v989 = vstv %s987
        %v990 = vstv %s988
        %v991 = vsel %vm799, %v989, %v990
        %vm992 = vmand %vm757, %vm796
        %v993 = vmul.f32 %v991, %v986
        %v994 = vmul.f32 %v991, %v985
        %v995 = vsel %vm992, 1, 0
        %v996 = vlaneseq
        %v997 = vshrl.u32 %v996, 7
        %v998 = vsub.s32 0, %v997
        %v999 = vrot.slane %v995, %v998
        %v1000 = vlaneseq
        %v1001 = vshrl.u32 %v1000, 7
        %v1002 = vsub.s32 1, %v1001
        %v1003 = vrot.slane %v995, %v1002
        %vm1004 = vcmp.eq.s32.totalorder %v999, 1
        %vm1005 = vcmp.eq.s32.totalorder %v1003, 1
        %v1006 = vsel %vm1004, %v993, 0.0
        %v1007 = vsel %vm1005, %v994, 0.0
        %v1008 = vadd.f32 %v888, %v1006
        %v1009 = vadd.f32 %v889, %v1007
        %1010 = vrot.lane.b32.xlu0 %v754, 35
        %v1011 = vpop.permute.xlu0 %1010
        %1012 = vrot.lane.b32.xlu0 %v755, 35
        %v1013 = vpop.permute.xlu0 %1012
        %vm1014 = vcmp.lt.s32.totalorder %v341, 35
        %v1015 = vsel %vm1014, %v1011, %v1013
        %v1016 = vsel %vm1014, %v1013, %v1011
        %s1017 = sld [smem:[#allocation6 + $0x7]]
        %s1018 = sld [smem:[#allocation6 + $0x38]]
        %v1019 = vstv %s1017
        %v1020 = vstv %s1018
        %v1021 = vsel %vm799, %v1019, %v1020
        %vm1022 = vmand %vm760, %vm778
        %v1023 = vmul.f32 %v1021, %v1016
        %v1024 = vmul.f32 %v1021, %v1015
        %v1025 = vsel %vm1022, 1, 0
        %v1026 = vlaneseq
        %v1027 = vshrl.u32 %v1026, 7
        %v1028 = vsub.s32 0, %v1027
        %v1029 = vrot.slane %v1025, %v1028
        %v1030 = vlaneseq
        %v1031 = vshrl.u32 %v1030, 7
        %v1032 = vsub.s32 1, %v1031
        %v1033 = vrot.slane %v1025, %v1032
        %vm1034 = vcmp.eq.s32.totalorder %v1029, 1
        %vm1035 = vcmp.eq.s32.totalorder %v1033, 1
        %v1036 = vsel %vm1034, %v1023, 0.0
        %v1037 = vsel %vm1035, %v1024, 0.0
        %v1038 = vadd.f32 %v918, %v1036
        %v1039 = vadd.f32 %v919, %v1037
        %1040 = vrot.lane.b32.xlu0 %v754, 34
        %v1041 = vpop.permute.xlu0 %1040
        %1042 = vrot.lane.b32.xlu0 %v755, 34
        %v1043 = vpop.permute.xlu0 %1042
        %vm1044 = vcmp.lt.s32.totalorder %v341, 34
        %v1045 = vsel %vm1044, %v1041, %v1043
        %v1046 = vsel %vm1044, %v1043, %v1041
        %s1047 = sld [smem:[#allocation6 + $0x8]]
        %s1048 = sld [smem:[#allocation6 + $0x39]]
        %v1049 = vstv %s1047
        %v1050 = vstv %s1048
        %v1051 = vsel %vm799, %v1049, %v1050
        %vm1052 = vmand %vm760, %vm781
        %v1053 = vmul.f32 %v1051, %v1046
        %v1054 = vmul.f32 %v1051, %v1045
        %v1055 = vsel %vm1052, 1, 0
        %v1056 = vlaneseq
        %v1057 = vshrl.u32 %v1056, 7
        %v1058 = vsub.s32 0, %v1057
        %v1059 = vrot.slane %v1055, %v1058
        %v1060 = vlaneseq
        %v1061 = vshrl.u32 %v1060, 7
        %v1062 = vsub.s32 1, %v1061
        %v1063 = vrot.slane %v1055, %v1062
        %vm1064 = vcmp.eq.s32.totalorder %v1059, 1
        %vm1065 = vcmp.eq.s32.totalorder %v1063, 1
        %v1066 = vsel %vm1064, %v1053, 0.0
        %v1067 = vsel %vm1065, %v1054, 0.0
        %v1068 = vadd.f32 %v948, %v1066
        %v1069 = vadd.f32 %v949, %v1067
        %1070 = vrot.lane.b32.xlu0 %v754, 33
        %v1071 = vpop.permute.xlu0 %1070
        %1072 = vrot.lane.b32.xlu0 %v755, 33
        %v1073 = vpop.permute.xlu0 %1072
        %vm1074 = vcmp.lt.s32.totalorder %v341, 33
        %v1075 = vsel %vm1074, %v1071, %v1073
        %v1076 = vsel %vm1074, %v1073, %v1071
        %s1077 = sld [smem:[#allocation6 + $0x9]]
        %s1078 = sld [smem:[#allocation6 + $0x3a]]
        %v1079 = vstv %s1077
        %v1080 = vstv %s1078
        %v1081 = vsel %vm799, %v1079, %v1080
        %vm1082 = vmand %vm760, %vm784
        %v1083 = vmul.f32 %v1081, %v1076
        %v1084 = vmul.f32 %v1081, %v1075
        %v1085 = vsel %vm1082, 1, 0
        %v1086 = vlaneseq
        %v1087 = vshrl.u32 %v1086, 7
        %v1088 = vsub.s32 0, %v1087
        %v1089 = vrot.slane %v1085, %v1088
        %v1090 = vlaneseq
        %v1091 = vshrl.u32 %v1090, 7
        %v1092 = vsub.s32 1, %v1091
        %v1093 = vrot.slane %v1085, %v1092
        %vm1094 = vcmp.eq.s32.totalorder %v1089, 1
        %vm1095 = vcmp.eq.s32.totalorder %v1093, 1
        %v1096 = vsel %vm1094, %v1083, 0.0
        %v1097 = vsel %vm1095, %v1084, 0.0
        %v1098 = vadd.f32 %v978, %v1096
        %v1099 = vadd.f32 %v979, %v1097
        %1100 = vrot.lane.b32.xlu0 %v754, 32
        %v1101 = vpop.permute.xlu0 %1100
        %1102 = vrot.lane.b32.xlu0 %v755, 32
        %v1103 = vpop.permute.xlu0 %1102
        %vm1104 = vcmp.lt.s32.totalorder %v341, 32
        %v1105 = vsel %vm1104, %v1101, %v1103
        %v1106 = vsel %vm1104, %v1103, %v1101
        %s1107 = sld [smem:[#allocation6 + $0xa]]
        %s1108 = sld [smem:[#allocation6 + $0x3b]]
        %v1109 = vstv %s1107
        %v1110 = vstv %s1108
        %v1111 = vsel %vm799, %v1109, %v1110
        %vm1112 = vmand %vm760, %vm787
        %v1113 = vmul.f32 %v1111, %v1106
        %v1114 = vmul.f32 %v1111, %v1105
        %v1115 = vsel %vm1112, 1, 0
        %v1116 = vlaneseq
        %v1117 = vshrl.u32 %v1116, 7
        %v1118 = vsub.s32 0, %v1117
        %v1119 = vrot.slane %v1115, %v1118
        %v1120 = vlaneseq
        %v1121 = vshrl.u32 %v1120, 7
        %v1122 = vsub.s32 1, %v1121
        %v1123 = vrot.slane %v1115, %v1122
        %vm1124 = vcmp.eq.s32.totalorder %v1119, 1
        %vm1125 = vcmp.eq.s32.totalorder %v1123, 1
        %v1126 = vsel %vm1124, %v1113, 0.0
        %v1127 = vsel %vm1125, %v1114, 0.0
        %v1128 = vadd.f32 %v1008, %v1126
        %v1129 = vadd.f32 %v1009, %v1127
        %1130 = vrot.lane.b32.xlu0 %v754, 31
        %v1131 = vpop.permute.xlu0 %1130
        %1132 = vrot.lane.b32.xlu0 %v755, 31
        %v1133 = vpop.permute.xlu0 %1132
        %vm1134 = vcmp.lt.s32.totalorder %v341, 31
        %v1135 = vsel %vm1134, %v1131, %v1133
        %v1136 = vsel %vm1134, %v1133, %v1131
        %s1137 = sld [smem:[#allocation6 + $0xb]]
        %s1138 = sld [smem:[#allocation6 + $0x3c]]
        %v1139 = vstv %s1137
        %v1140 = vstv %s1138
        %v1141 = vsel %vm799, %v1139, %v1140
        %vm1142 = vmand %vm760, %vm790
        %v1143 = vmul.f32 %v1141, %v1136
        %v1144 = vmul.f32 %v1141, %v1135
        %v1145 = vsel %vm1142, 1, 0
        %v1146 = vlaneseq
        %v1147 = vshrl.u32 %v1146, 7
        %v1148 = vsub.s32 0, %v1147
        %v1149 = vrot.slane %v1145, %v1148
        %v1150 = vlaneseq
        %v1151 = vshrl.u32 %v1150, 7
        %v1152 = vsub.s32 1, %v1151
        %v1153 = vrot.slane %v1145, %v1152
        %vm1154 = vcmp.eq.s32.totalorder %v1149, 1
        %vm1155 = vcmp.eq.s32.totalorder %v1153, 1
        %v1156 = vsel %vm1154, %v1143, 0.0
        %v1157 = vsel %vm1155, %v1144, 0.0
        %v1158 = vadd.f32 %v1038, %v1156
        %v1159 = vadd.f32 %v1039, %v1157
        %1160 = vrot.lane.b32.xlu0 %v754, 30
        %v1161 = vpop.permute.xlu0 %1160
        %1162 = vrot.lane.b32.xlu0 %v755, 30
        %v1163 = vpop.permute.xlu0 %1162
        %vm1164 = vcmp.lt.s32.totalorder %v341, 30
        %v1165 = vsel %vm1164, %v1161, %v1163
        %v1166 = vsel %vm1164, %v1163, %v1161
        %s1167 = sld [smem:[#allocation6 + $0xc]]
        %s1168 = sld [smem:[#allocation6 + $0x3d]]
        %v1169 = vstv %s1167
        %v1170 = vstv %s1168
        %v1171 = vsel %vm799, %v1169, %v1170
        %vm1172 = vmand %vm760, %vm793
        %v1173 = vmul.f32 %v1171, %v1166
        %v1174 = vmul.f32 %v1171, %v1165
        %v1175 = vsel %vm1172, 1, 0
        %v1176 = vlaneseq
        %v1177 = vshrl.u32 %v1176, 7
        %v1178 = vsub.s32 0, %v1177
        %v1179 = vrot.slane %v1175, %v1178
        %v1180 = vlaneseq
        %v1181 = vshrl.u32 %v1180, 7
        %v1182 = vsub.s32 1, %v1181
        %v1183 = vrot.slane %v1175, %v1182
        %vm1184 = vcmp.eq.s32.totalorder %v1179, 1
        %vm1185 = vcmp.eq.s32.totalorder %v1183, 1
        %v1186 = vsel %vm1184, %v1173, 0.0
        %v1187 = vsel %vm1185, %v1174, 0.0
        %v1188 = vadd.f32 %v1068, %v1186
        %v1189 = vadd.f32 %v1069, %v1187
        %1190 = vrot.lane.b32.xlu0 %v754, 29
        %v1191 = vpop.permute.xlu0 %1190
        %1192 = vrot.lane.b32.xlu0 %v755, 29
        %v1193 = vpop.permute.xlu0 %1192
        %vm1194 = vcmp.lt.s32.totalorder %v341, 29
        %v1195 = vsel %vm1194, %v1191, %v1193
        %v1196 = vsel %vm1194, %v1193, %v1191
        %s1197 = sld [smem:[#allocation6 + $0xd]]
        %s1198 = sld [smem:[#allocation6 + $0x3e]]
        %v1199 = vstv %s1197
        %v1200 = vstv %s1198
        %v1201 = vsel %vm799, %v1199, %v1200
        %vm1202 = vmand %vm760, %vm796
        %v1203 = vmul.f32 %v1201, %v1196
        %v1204 = vmul.f32 %v1201, %v1195
        %v1205 = vsel %vm1202, 1, 0
        %v1206 = vlaneseq
        %v1207 = vshrl.u32 %v1206, 7
        %v1208 = vsub.s32 0, %v1207
        %v1209 = vrot.slane %v1205, %v1208
        %v1210 = vlaneseq
        %v1211 = vshrl.u32 %v1210, 7
        %v1212 = vsub.s32 1, %v1211
        %v1213 = vrot.slane %v1205, %v1212
        %vm1214 = vcmp.eq.s32.totalorder %v1209, 1
        %vm1215 = vcmp.eq.s32.totalorder %v1213, 1
        %v1216 = vsel %vm1214, %v1203, 0.0
        %v1217 = vsel %vm1215, %v1204, 0.0
        %v1218 = vadd.f32 %v1098, %v1216
        %v1219 = vadd.f32 %v1099, %v1217
        %1220 = vrot.lane.b32.xlu0 %v754, 19
        %v1221 = vpop.permute.xlu0 %1220
        %1222 = vrot.lane.b32.xlu0 %v755, 19
        %v1223 = vpop.permute.xlu0 %1222
        %vm1224 = vcmp.lt.s32.totalorder %v341, 19
        %v1225 = vsel %vm1224, %v1221, %v1223
        %v1226 = vsel %vm1224, %v1223, %v1221
        %s1227 = sld [smem:[#allocation6 + $0xe]]
        %s1228 = sld [smem:[#allocation6 + $0x3f]]
        %v1229 = vstv %s1227
        %v1230 = vstv %s1228
        %v1231 = vsel %vm799, %v1229, %v1230
        %vm1232 = vmand %vm763, %vm778
        %v1233 = vmul.f32 %v1231, %v1226
        %v1234 = vmul.f32 %v1231, %v1225
        %v1235 = vsel %vm1232, 1, 0
        %v1236 = vlaneseq
        %v1237 = vshrl.u32 %v1236, 7
        %v1238 = vsub.s32 0, %v1237
        %v1239 = vrot.slane %v1235, %v1238
        %v1240 = vlaneseq
        %v1241 = vshrl.u32 %v1240, 7
        %v1242 = vsub.s32 1, %v1241
        %v1243 = vrot.slane %v1235, %v1242
        %vm1244 = vcmp.eq.s32.totalorder %v1239, 1
        %vm1245 = vcmp.eq.s32.totalorder %v1243, 1
        %v1246 = vsel %vm1244, %v1233, 0.0
        %v1247 = vsel %vm1245, %v1234, 0.0
        %v1248 = vadd.f32 %v1128, %v1246
        %v1249 = vadd.f32 %v1129, %v1247
        %1250 = vrot.lane.b32.xlu0 %v754, 18
        %v1251 = vpop.permute.xlu0 %1250
        %1252 = vrot.lane.b32.xlu0 %v755, 18
        %v1253 = vpop.permute.xlu0 %1252
        %vm1254 = vcmp.lt.s32.totalorder %v341, 18
        %v1255 = vsel %vm1254, %v1251, %v1253
        %v1256 = vsel %vm1254, %v1253, %v1251
        %s1257 = sld [smem:[#allocation6 + $0xf]]
        %s1258 = sld [smem:[#allocation6 + $0x40]]
        %v1259 = vstv %s1257
        %v1260 = vstv %s1258
        %v1261 = vsel %vm799, %v1259, %v1260
        %vm1262 = vmand %vm763, %vm781
        %v1263 = vmul.f32 %v1261, %v1256
        %v1264 = vmul.f32 %v1261, %v1255
        %v1265 = vsel %vm1262, 1, 0
        %v1266 = vlaneseq
        %v1267 = vshrl.u32 %v1266, 7
        %v1268 = vsub.s32 0, %v1267
        %v1269 = vrot.slane %v1265, %v1268
        %v1270 = vlaneseq
        %v1271 = vshrl.u32 %v1270, 7
        %v1272 = vsub.s32 1, %v1271
        %v1273 = vrot.slane %v1265, %v1272
        %vm1274 = vcmp.eq.s32.totalorder %v1269, 1
        %vm1275 = vcmp.eq.s32.totalorder %v1273, 1
        %v1276 = vsel %vm1274, %v1263, 0.0
        %v1277 = vsel %vm1275, %v1264, 0.0
        %v1278 = vadd.f32 %v1158, %v1276
        %v1279 = vadd.f32 %v1159, %v1277
        %1280 = vrot.lane.b32.xlu0 %v754, 17
        %v1281 = vpop.permute.xlu0 %1280
        %1282 = vrot.lane.b32.xlu0 %v755, 17
        %v1283 = vpop.permute.xlu0 %1282
        %vm1284 = vcmp.lt.s32.totalorder %v341, 17
        %v1285 = vsel %vm1284, %v1281, %v1283
        %v1286 = vsel %vm1284, %v1283, %v1281
        %s1287 = sld [smem:[#allocation6 + $0x10]]
        %s1288 = sld [smem:[#allocation6 + $0x41]]
        %v1289 = vstv %s1287
        %v1290 = vstv %s1288
        %v1291 = vsel %vm799, %v1289, %v1290
        %vm1292 = vmand %vm763, %vm784
        %v1293 = vmul.f32 %v1291, %v1286
        %v1294 = vmul.f32 %v1291, %v1285
        %v1295 = vsel %vm1292, 1, 0
        %v1296 = vlaneseq
        %v1297 = vshrl.u32 %v1296, 7
        %v1298 = vsub.s32 0, %v1297
        %v1299 = vrot.slane %v1295, %v1298
        %v1300 = vlaneseq
        %v1301 = vshrl.u32 %v1300, 7
        %v1302 = vsub.s32 1, %v1301
        %v1303 = vrot.slane %v1295, %v1302
        %vm1304 = vcmp.eq.s32.totalorder %v1299, 1
        %vm1305 = vcmp.eq.s32.totalorder %v1303, 1
        %v1306 = vsel %vm1304, %v1293, 0.0
        %v1307 = vsel %vm1305, %v1294, 0.0
        %v1308 = vadd.f32 %v1188, %v1306
        %v1309 = vadd.f32 %v1189, %v1307
        %1310 = vrot.lane.b32.xlu0 %v754, 16
        %v1311 = vpop.permute.xlu0 %1310
        %1312 = vrot.lane.b32.xlu0 %v755, 16
        %v1313 = vpop.permute.xlu0 %1312
        %vm1314 = vcmp.lt.s32.totalorder %v341, 16
        %v1315 = vsel %vm1314, %v1311, %v1313
        %v1316 = vsel %vm1314, %v1313, %v1311
        %s1317 = sld [smem:[#allocation6 + $0x11]]
        %s1318 = sld [smem:[#allocation6 + $0x42]]
        %v1319 = vstv %s1317
        %v1320 = vstv %s1318
        %v1321 = vsel %vm799, %v1319, %v1320
        %vm1322 = vmand %vm763, %vm787
        %v1323 = vmul.f32 %v1321, %v1316
        %v1324 = vmul.f32 %v1321, %v1315
        %v1325 = vsel %vm1322, 1, 0
        %v1326 = vlaneseq
        %v1327 = vshrl.u32 %v1326, 7
        %v1328 = vsub.s32 0, %v1327
        %v1329 = vrot.slane %v1325, %v1328
        %v1330 = vlaneseq
        %v1331 = vshrl.u32 %v1330, 7
        %v1332 = vsub.s32 1, %v1331
        %v1333 = vrot.slane %v1325, %v1332
        %vm1334 = vcmp.eq.s32.totalorder %v1329, 1
        %vm1335 = vcmp.eq.s32.totalorder %v1333, 1
        %v1336 = vsel %vm1334, %v1323, 0.0
        %v1337 = vsel %vm1335, %v1324, 0.0
        %v1338 = vadd.f32 %v1218, %v1336
        %v1339 = vadd.f32 %v1219, %v1337
        %1340 = vrot.lane.b32.xlu0 %v754, 15
        %v1341 = vpop.permute.xlu0 %1340
        %1342 = vrot.lane.b32.xlu0 %v755, 15
        %v1343 = vpop.permute.xlu0 %1342
        %vm1344 = vcmp.lt.s32.totalorder %v341, 15
        %v1345 = vsel %vm1344, %v1341, %v1343
        %v1346 = vsel %vm1344, %v1343, %v1341
        %s1347 = sld [smem:[#allocation6 + $0x12]]
        %s1348 = sld [smem:[#allocation6 + $0x43]]
        %v1349 = vstv %s1347
        %v1350 = vstv %s1348
        %v1351 = vsel %vm799, %v1349, %v1350
        %vm1352 = vmand %vm763, %vm790
        %v1353 = vmul.f32 %v1351, %v1346
        %v1354 = vmul.f32 %v1351, %v1345
        %v1355 = vsel %vm1352, 1, 0
        %v1356 = vlaneseq
        %v1357 = vshrl.u32 %v1356, 7
        %v1358 = vsub.s32 0, %v1357
        %v1359 = vrot.slane %v1355, %v1358
        %v1360 = vlaneseq
        %v1361 = vshrl.u32 %v1360, 7
        %v1362 = vsub.s32 1, %v1361
        %v1363 = vrot.slane %v1355, %v1362
        %vm1364 = vcmp.eq.s32.totalorder %v1359, 1
        %vm1365 = vcmp.eq.s32.totalorder %v1363, 1
        %v1366 = vsel %vm1364, %v1353, 0.0
        %v1367 = vsel %vm1365, %v1354, 0.0
        %v1368 = vadd.f32 %v1248, %v1366
        %v1369 = vadd.f32 %v1249, %v1367
        %1370 = vrot.lane.b32.xlu0 %v754, 14
        %v1371 = vpop.permute.xlu0 %1370
        %1372 = vrot.lane.b32.xlu0 %v755, 14
        %v1373 = vpop.permute.xlu0 %1372
        %vm1374 = vcmp.lt.s32.totalorder %v341, 14
        %v1375 = vsel %vm1374, %v1371, %v1373
        %v1376 = vsel %vm1374, %v1373, %v1371
        %s1377 = sld [smem:[#allocation6 + $0x13]]
        %s1378 = sld [smem:[#allocation6 + $0x44]]
        %v1379 = vstv %s1377
        %v1380 = vstv %s1378
        %v1381 = vsel %vm799, %v1379, %v1380
        %vm1382 = vmand %vm763, %vm793
        %v1383 = vmul.f32 %v1381, %v1376
        %v1384 = vmul.f32 %v1381, %v1375
        %v1385 = vsel %vm1382, 1, 0
        %v1386 = vlaneseq
        %v1387 = vshrl.u32 %v1386, 7
        %v1388 = vsub.s32 0, %v1387
        %v1389 = vrot.slane %v1385, %v1388
        %v1390 = vlaneseq
        %v1391 = vshrl.u32 %v1390, 7
        %v1392 = vsub.s32 1, %v1391
        %v1393 = vrot.slane %v1385, %v1392
        %vm1394 = vcmp.eq.s32.totalorder %v1389, 1
        %vm1395 = vcmp.eq.s32.totalorder %v1393, 1
        %v1396 = vsel %vm1394, %v1383, 0.0
        %v1397 = vsel %vm1395, %v1384, 0.0
        %v1398 = vadd.f32 %v1278, %v1396
        %v1399 = vadd.f32 %v1279, %v1397
        %1400 = vrot.lane.b32.xlu0 %v754, 13
        %v1401 = vpop.permute.xlu0 %1400
        %1402 = vrot.lane.b32.xlu0 %v755, 13
        %v1403 = vpop.permute.xlu0 %1402
        %vm1404 = vcmp.lt.s32.totalorder %v341, 13
        %v1405 = vsel %vm1404, %v1401, %v1403
        %v1406 = vsel %vm1404, %v1403, %v1401
        %s1407 = sld [smem:[#allocation6 + $0x14]]
        %s1408 = sld [smem:[#allocation6 + $0x45]]
        %v1409 = vstv %s1407
        %v1410 = vstv %s1408
        %v1411 = vsel %vm799, %v1409, %v1410
        %vm1412 = vmand %vm763, %vm796
        %v1413 = vmul.f32 %v1411, %v1406
        %v1414 = vmul.f32 %v1411, %v1405
        %v1415 = vsel %vm1412, 1, 0
        %v1416 = vlaneseq
        %v1417 = vshrl.u32 %v1416, 7
        %v1418 = vsub.s32 0, %v1417
        %v1419 = vrot.slane %v1415, %v1418
        %v1420 = vlaneseq
        %v1421 = vshrl.u32 %v1420, 7
        %v1422 = vsub.s32 1, %v1421
        %v1423 = vrot.slane %v1415, %v1422
        %vm1424 = vcmp.eq.s32.totalorder %v1419, 1
        %vm1425 = vcmp.eq.s32.totalorder %v1423, 1
        %v1426 = vsel %vm1424, %v1413, 0.0
        %v1427 = vsel %vm1425, %v1414, 0.0
        %v1428 = vadd.f32 %v1308, %v1426
        %v1429 = vadd.f32 %v1309, %v1427
        %1430 = vrot.lane.b32.xlu0 %v754, 3
        %v1431 = vpop.permute.xlu0 %1430
        %1432 = vrot.lane.b32.xlu0 %v755, 3
        %v1433 = vpop.permute.xlu0 %1432
        %vm1434 = vcmp.lt.s32.totalorder %v341, 3
        %v1435 = vsel %vm1434, %v1431, %v1433
        %v1436 = vsel %vm1434, %v1433, %v1431
        %s1437 = sld [smem:[#allocation6 + $0x15]]
        %s1438 = sld [smem:[#allocation6 + $0x46]]
        %v1439 = vstv %s1437
        %v1440 = vstv %s1438
        %v1441 = vsel %vm799, %v1439, %v1440
        %vm1442 = vmand %vm766, %vm778
        %v1443 = vmul.f32 %v1441, %v1436
        %v1444 = vmul.f32 %v1441, %v1435
        %v1445 = vsel %vm1442, 1, 0
        %v1446 = vlaneseq
        %v1447 = vshrl.u32 %v1446, 7
        %v1448 = vsub.s32 0, %v1447
        %v1449 = vrot.slane %v1445, %v1448
        %v1450 = vlaneseq
        %v1451 = vshrl.u32 %v1450, 7
        %v1452 = vsub.s32 1, %v1451
        %v1453 = vrot.slane %v1445, %v1452
        %vm1454 = vcmp.eq.s32.totalorder %v1449, 1
        %vm1455 = vcmp.eq.s32.totalorder %v1453, 1
        %v1456 = vsel %vm1454, %v1443, 0.0
        %v1457 = vsel %vm1455, %v1444, 0.0
        %v1458 = vadd.f32 %v1338, %v1456
        %v1459 = vadd.f32 %v1339, %v1457
        %1460 = vrot.lane.b32.xlu0 %v754, 2
        %v1461 = vpop.permute.xlu0 %1460
        %1462 = vrot.lane.b32.xlu0 %v755, 2
        %v1463 = vpop.permute.xlu0 %1462
        %vm1464 = vcmp.lt.s32.totalorder %v341, 2
        %v1465 = vsel %vm1464, %v1461, %v1463
        %v1466 = vsel %vm1464, %v1463, %v1461
        %s1467 = sld [smem:[#allocation6 + $0x16]]
        %s1468 = sld [smem:[#allocation6 + $0x47]]
        %v1469 = vstv %s1467
        %v1470 = vstv %s1468
        %v1471 = vsel %vm799, %v1469, %v1470
        %vm1472 = vmand %vm766, %vm781
        %v1473 = vmul.f32 %v1471, %v1466
        %v1474 = vmul.f32 %v1471, %v1465
        %v1475 = vsel %vm1472, 1, 0
        %v1476 = vlaneseq
        %v1477 = vshrl.u32 %v1476, 7
        %v1478 = vsub.s32 0, %v1477
        %v1479 = vrot.slane %v1475, %v1478
        %v1480 = vlaneseq
        %v1481 = vshrl.u32 %v1480, 7
        %v1482 = vsub.s32 1, %v1481
        %v1483 = vrot.slane %v1475, %v1482
        %vm1484 = vcmp.eq.s32.totalorder %v1479, 1
        %vm1485 = vcmp.eq.s32.totalorder %v1483, 1
        %v1486 = vsel %vm1484, %v1473, 0.0
        %v1487 = vsel %vm1485, %v1474, 0.0
        %v1488 = vadd.f32 %v1368, %v1486
        %v1489 = vadd.f32 %v1369, %v1487
        %1490 = vrot.lane.b32.xlu0 %v754, 1
        %v1491 = vpop.permute.xlu0 %1490
        %1492 = vrot.lane.b32.xlu0 %v755, 1
        %v1493 = vpop.permute.xlu0 %1492
        %vm1494 = vcmp.lt.s32.totalorder %v341, 1
        %v1495 = vsel %vm1494, %v1491, %v1493
        %v1496 = vsel %vm1494, %v1493, %v1491
        %s1497 = sld [smem:[#allocation6 + $0x17]]
        %s1498 = sld [smem:[#allocation6 + $0x48]]
        %v1499 = vstv %s1497
        %v1500 = vstv %s1498
        %v1501 = vsel %vm799, %v1499, %v1500
        %vm1502 = vmand %vm766, %vm784
        %v1503 = vmul.f32 %v1501, %v1496
        %v1504 = vmul.f32 %v1501, %v1495
        %v1505 = vsel %vm1502, 1, 0
        %v1506 = vlaneseq
        %v1507 = vshrl.u32 %v1506, 7
        %v1508 = vsub.s32 0, %v1507
        %v1509 = vrot.slane %v1505, %v1508
        %v1510 = vlaneseq
        %v1511 = vshrl.u32 %v1510, 7
        %v1512 = vsub.s32 1, %v1511
        %v1513 = vrot.slane %v1505, %v1512
        %vm1514 = vcmp.eq.s32.totalorder %v1509, 1
        %vm1515 = vcmp.eq.s32.totalorder %v1513, 1
        %v1516 = vsel %vm1514, %v1503, 0.0
        %v1517 = vsel %vm1515, %v1504, 0.0
        %v1518 = vadd.f32 %v1398, %v1516
        %v1519 = vadd.f32 %v1399, %v1517
        %s1520 = sld [smem:[#allocation6 + $0x18]]
        %s1521 = sld [smem:[#allocation6 + $0x49]]
        %v1522 = vstv %s1520
        %v1523 = vstv %s1521
        %v1524 = vsel %vm799, %v1522, %v1523
        %vm1525 = vmand %vm766, %vm787
        %v1526 = vmul.f32 %v1524, %v754
        %v1527 = vmul.f32 %v1524, %v755
        %v1528 = vsel %vm1525, 1, 0
        %v1529 = vlaneseq
        %v1530 = vshrl.u32 %v1529, 7
        %v1531 = vsub.s32 0, %v1530
        %v1532 = vrot.slane %v1528, %v1531
        %v1533 = vlaneseq
        %v1534 = vshrl.u32 %v1533, 7
        %v1535 = vsub.s32 1, %v1534
        %v1536 = vrot.slane %v1528, %v1535
        %vm1537 = vcmp.eq.s32.totalorder %v1532, 1
        %vm1538 = vcmp.eq.s32.totalorder %v1536, 1
        %v1539 = vsel %vm1537, %v1526, 0.0
        %v1540 = vsel %vm1538, %v1527, 0.0
        %v1541 = vadd.f32 %v1428, %v1539
        %v1542 = vadd.f32 %v1429, %v1540
        %1543 = vrot.lane.b32.xlu0 %v754, 127
        %v1544 = vpop.permute.xlu0 %1543
        %1545 = vrot.lane.b32.xlu0 %v755, 127
        %v1546 = vpop.permute.xlu0 %1545
        %vm1547 = vcmp.lt.s32.totalorder %v341, 127
        %v1548 = vsel %vm1547, %v1544, %v1546
        %v1549 = vsel %vm1547, %v1546, %v1544
        %s1550 = sld [smem:[#allocation6 + $0x19]]
        %s1551 = sld [smem:[#allocation6 + $0x4a]]
        %v1552 = vstv %s1550
        %v1553 = vstv %s1551
        %v1554 = vsel %vm799, %v1552, %v1553
        %vm1555 = vmand %vm766, %vm790
        %v1556 = vmul.f32 %v1554, %v1548
        %v1557 = vmul.f32 %v1554, %v1549
        %v1558 = vsel %vm1555, 1, 0
        %v1559 = vlaneseq
        %v1560 = vshrl.u32 %v1559, 7
        %v1561 = vsub.s32 0, %v1560
        %v1562 = vrot.slane %v1558, %v1561
        %v1563 = vlaneseq
        %v1564 = vshrl.u32 %v1563, 7
        %v1565 = vsub.s32 1, %v1564
        %v1566 = vrot.slane %v1558, %v1565
        %vm1567 = vcmp.eq.s32.totalorder %v1562, 1
        %vm1568 = vcmp.eq.s32.totalorder %v1566, 1
        %v1569 = vsel %vm1567, %v1556, 0.0
        %v1570 = vsel %vm1568, %v1557, 0.0
        %v1571 = vadd.f32 %v1458, %v1569
        %v1572 = vadd.f32 %v1459, %v1570
        %1573 = vrot.lane.b32.xlu0 %v754, 126
        %v1574 = vpop.permute.xlu0 %1573
        %1575 = vrot.lane.b32.xlu0 %v755, 126
        %v1576 = vpop.permute.xlu0 %1575
        %vm1577 = vcmp.lt.s32.totalorder %v341, 126
        %v1578 = vsel %vm1577, %v1574, %v1576
        %v1579 = vsel %vm1577, %v1576, %v1574
        %s1580 = sld [smem:[#allocation6 + $0x1a]]
        %s1581 = sld [smem:[#allocation6 + $0x4b]]
        %v1582 = vstv %s1580
        %v1583 = vstv %s1581
        %v1584 = vsel %vm799, %v1582, %v1583
        %vm1585 = vmand %vm766, %vm793
        %v1586 = vmul.f32 %v1584, %v1578
        %v1587 = vmul.f32 %v1584, %v1579
        %v1588 = vsel %vm1585, 1, 0
        %v1589 = vlaneseq
        %v1590 = vshrl.u32 %v1589, 7
        %v1591 = vsub.s32 0, %v1590
        %v1592 = vrot.slane %v1588, %v1591
        %v1593 = vlaneseq
        %v1594 = vshrl.u32 %v1593, 7
        %v1595 = vsub.s32 1, %v1594
        %v1596 = vrot.slane %v1588, %v1595
        %vm1597 = vcmp.eq.s32.totalorder %v1592, 1
        %vm1598 = vcmp.eq.s32.totalorder %v1596, 1
        %v1599 = vsel %vm1597, %v1586, 0.0
        %v1600 = vsel %vm1598, %v1587, 0.0
        %v1601 = vadd.f32 %v1488, %v1599
        %v1602 = vadd.f32 %v1489, %v1600
        %1603 = vrot.lane.b32.xlu0 %v754, 125
        %v1604 = vpop.permute.xlu0 %1603
        %1605 = vrot.lane.b32.xlu0 %v755, 125
        %v1606 = vpop.permute.xlu0 %1605
        %vm1607 = vcmp.lt.s32.totalorder %v341, 125
        %v1608 = vsel %vm1607, %v1604, %v1606
        %v1609 = vsel %vm1607, %v1606, %v1604
        %s1610 = sld [smem:[#allocation6 + $0x1b]]
        %s1611 = sld [smem:[#allocation6 + $0x4c]]
        %v1612 = vstv %s1610
        %v1613 = vstv %s1611
        %v1614 = vsel %vm799, %v1612, %v1613
        %vm1615 = vmand %vm766, %vm796
        %v1616 = vmul.f32 %v1614, %v1608
        %v1617 = vmul.f32 %v1614, %v1609
        %v1618 = vsel %vm1615, 1, 0
        %v1619 = vlaneseq
        %v1620 = vshrl.u32 %v1619, 7
        %v1621 = vsub.s32 0, %v1620
        %v1622 = vrot.slane %v1618, %v1621
        %v1623 = vlaneseq
        %v1624 = vshrl.u32 %v1623, 7
        %v1625 = vsub.s32 1, %v1624
        %v1626 = vrot.slane %v1618, %v1625
        %vm1627 = vcmp.eq.s32.totalorder %v1622, 1
        %vm1628 = vcmp.eq.s32.totalorder %v1626, 1
        %v1629 = vsel %vm1627, %v1616, 0.0
        %v1630 = vsel %vm1628, %v1617, 0.0
        %v1631 = vadd.f32 %v1518, %v1629
        %v1632 = vadd.f32 %v1519, %v1630
        %1633 = vrot.lane.b32.xlu0 %v754, 115
        %v1634 = vpop.permute.xlu0 %1633
        %1635 = vrot.lane.b32.xlu0 %v755, 115
        %v1636 = vpop.permute.xlu0 %1635
        %vm1637 = vcmp.lt.s32.totalorder %v341, 115
        %v1638 = vsel %vm1637, %v1634, %v1636
        %v1639 = vsel %vm1637, %v1636, %v1634
        %s1640 = sld [smem:[#allocation6 + $0x1c]]
        %s1641 = sld [smem:[#allocation6 + $0x4d]]
        %v1642 = vstv %s1640
        %v1643 = vstv %s1641
        %v1644 = vsel %vm799, %v1642, %v1643
        %vm1645 = vmand %vm769, %vm778
        %v1646 = vmul.f32 %v1644, %v1638
        %v1647 = vmul.f32 %v1644, %v1639
        %v1648 = vsel %vm1645, 1, 0
        %v1649 = vlaneseq
        %v1650 = vshrl.u32 %v1649, 7
        %v1651 = vsub.s32 0, %v1650
        %v1652 = vrot.slane %v1648, %v1651
        %v1653 = vlaneseq
        %v1654 = vshrl.u32 %v1653, 7
        %v1655 = vsub.s32 1, %v1654
        %v1656 = vrot.slane %v1648, %v1655
        %vm1657 = vcmp.eq.s32.totalorder %v1652, 1
        %vm1658 = vcmp.eq.s32.totalorder %v1656, 1
        %v1659 = vsel %vm1657, %v1646, 0.0
        %v1660 = vsel %vm1658, %v1647, 0.0
        %v1661 = vadd.f32 %v1541, %v1659
        %v1662 = vadd.f32 %v1542, %v1660
        %1663 = vrot.lane.b32.xlu0 %v754, 114
        %v1664 = vpop.permute.xlu0 %1663
        %1665 = vrot.lane.b32.xlu0 %v755, 114
        %v1666 = vpop.permute.xlu0 %1665
        %vm1667 = vcmp.lt.s32.totalorder %v341, 114
        %v1668 = vsel %vm1667, %v1664, %v1666
        %v1669 = vsel %vm1667, %v1666, %v1664
        %s1670 = sld [smem:[#allocation6 + $0x1d]]
        %s1671 = sld [smem:[#allocation6 + $0x4e]]
        %v1672 = vstv %s1670
        %v1673 = vstv %s1671
        %v1674 = vsel %vm799, %v1672, %v1673
        %vm1675 = vmand %vm769, %vm781
        %v1676 = vmul.f32 %v1674, %v1668
        %v1677 = vmul.f32 %v1674, %v1669
        %v1678 = vsel %vm1675, 1, 0
        %v1679 = vlaneseq
        %v1680 = vshrl.u32 %v1679, 7
        %v1681 = vsub.s32 0, %v1680
        %v1682 = vrot.slane %v1678, %v1681
        %v1683 = vlaneseq
        %v1684 = vshrl.u32 %v1683, 7
        %v1685 = vsub.s32 1, %v1684
        %v1686 = vrot.slane %v1678, %v1685
        %vm1687 = vcmp.eq.s32.totalorder %v1682, 1
        %vm1688 = vcmp.eq.s32.totalorder %v1686, 1
        %v1689 = vsel %vm1687, %v1676, 0.0
        %v1690 = vsel %vm1688, %v1677, 0.0
        %v1691 = vadd.f32 %v1571, %v1689
        %v1692 = vadd.f32 %v1572, %v1690
        %1693 = vrot.lane.b32.xlu0 %v754, 113
        %v1694 = vpop.permute.xlu0 %1693
        %1695 = vrot.lane.b32.xlu0 %v755, 113
        %v1696 = vpop.permute.xlu0 %1695
        %vm1697 = vcmp.lt.s32.totalorder %v341, 113
        %v1698 = vsel %vm1697, %v1694, %v1696
        %v1699 = vsel %vm1697, %v1696, %v1694
        %s1700 = sld [smem:[#allocation6 + $0x1e]]
        %s1701 = sld [smem:[#allocation6 + $0x4f]]
        %v1702 = vstv %s1700
        %v1703 = vstv %s1701
        %v1704 = vsel %vm799, %v1702, %v1703
        %vm1705 = vmand %vm769, %vm784
        %v1706 = vmul.f32 %v1704, %v1698
        %v1707 = vmul.f32 %v1704, %v1699
        %v1708 = vsel %vm1705, 1, 0
        %v1709 = vlaneseq
        %v1710 = vshrl.u32 %v1709, 7
        %v1711 = vsub.s32 0, %v1710
        %v1712 = vrot.slane %v1708, %v1711
        %v1713 = vlaneseq
        %v1714 = vshrl.u32 %v1713, 7
        %v1715 = vsub.s32 1, %v1714
        %v1716 = vrot.slane %v1708, %v1715
        %vm1717 = vcmp.eq.s32.totalorder %v1712, 1
        %vm1718 = vcmp.eq.s32.totalorder %v1716, 1
        %v1719 = vsel %vm1717, %v1706, 0.0
        %v1720 = vsel %vm1718, %v1707, 0.0
        %v1721 = vadd.f32 %v1601, %v1719
        %v1722 = vadd.f32 %v1602, %v1720
        %1723 = vrot.lane.b32.xlu0 %v754, 112
        %v1724 = vpop.permute.xlu0 %1723
        %1725 = vrot.lane.b32.xlu0 %v755, 112
        %v1726 = vpop.permute.xlu0 %1725
        %vm1727 = vcmp.lt.s32.totalorder %v341, 112
        %v1728 = vsel %vm1727, %v1724, %v1726
        %v1729 = vsel %vm1727, %v1726, %v1724
        %s1730 = sld [smem:[#allocation6 + $0x1f]]
        %s1731 = sld [smem:[#allocation6 + $0x50]]
        %v1732 = vstv %s1730
        %v1733 = vstv %s1731
        %v1734 = vsel %vm799, %v1732, %v1733
        %vm1735 = vmand %vm769, %vm787
        %v1736 = vmul.f32 %v1734, %v1728
        %v1737 = vmul.f32 %v1734, %v1729
        %v1738 = vsel %vm1735, 1, 0
        %v1739 = vlaneseq
        %v1740 = vshrl.u32 %v1739, 7
        %v1741 = vsub.s32 0, %v1740
        %v1742 = vrot.slane %v1738, %v1741
        %v1743 = vlaneseq
        %v1744 = vshrl.u32 %v1743, 7
        %v1745 = vsub.s32 1, %v1744
        %v1746 = vrot.slane %v1738, %v1745
        %vm1747 = vcmp.eq.s32.totalorder %v1742, 1
        %vm1748 = vcmp.eq.s32.totalorder %v1746, 1
        %v1749 = vsel %vm1747, %v1736, 0.0
        %v1750 = vsel %vm1748, %v1737, 0.0
        %v1751 = vadd.f32 %v1631, %v1749
        %v1752 = vadd.f32 %v1632, %v1750
        %1753 = vrot.lane.b32.xlu0 %v754, 111
        %v1754 = vpop.permute.xlu0 %1753
        %1755 = vrot.lane.b32.xlu0 %v755, 111
        %v1756 = vpop.permute.xlu0 %1755
        %vm1757 = vcmp.lt.s32.totalorder %v341, 111
        %v1758 = vsel %vm1757, %v1754, %v1756
        %v1759 = vsel %vm1757, %v1756, %v1754
        %s1760 = sld [smem:[#allocation6 + $0x20]]
        %s1761 = sld [smem:[#allocation6 + $0x51]]
        %v1762 = vstv %s1760
        %v1763 = vstv %s1761
        %v1764 = vsel %vm799, %v1762, %v1763
        %vm1765 = vmand %vm769, %vm790
        %v1766 = vmul.f32 %v1764, %v1758
        %v1767 = vmul.f32 %v1764, %v1759
        %v1768 = vsel %vm1765, 1, 0
        %v1769 = vlaneseq
        %v1770 = vshrl.u32 %v1769, 7
        %v1771 = vsub.s32 0, %v1770
        %v1772 = vrot.slane %v1768, %v1771
        %v1773 = vlaneseq
        %v1774 = vshrl.u32 %v1773, 7
        %v1775 = vsub.s32 1, %v1774
        %v1776 = vrot.slane %v1768, %v1775
        %vm1777 = vcmp.eq.s32.totalorder %v1772, 1
        %vm1778 = vcmp.eq.s32.totalorder %v1776, 1
        %v1779 = vsel %vm1777, %v1766, 0.0
        %v1780 = vsel %vm1778, %v1767, 0.0
        %v1781 = vadd.f32 %v1661, %v1779
        %v1782 = vadd.f32 %v1662, %v1780
        %1783 = vrot.lane.b32.xlu0 %v754, 110
        %v1784 = vpop.permute.xlu0 %1783
        %1785 = vrot.lane.b32.xlu0 %v755, 110
        %v1786 = vpop.permute.xlu0 %1785
        %vm1787 = vcmp.lt.s32.totalorder %v341, 110
        %v1788 = vsel %vm1787, %v1784, %v1786
        %v1789 = vsel %vm1787, %v1786, %v1784
        %s1790 = sld [smem:[#allocation6 + $0x21]]
        %s1791 = sld [smem:[#allocation6 + $0x52]]
        %v1792 = vstv %s1790
        %v1793 = vstv %s1791
        %v1794 = vsel %vm799, %v1792, %v1793
        %vm1795 = vmand %vm769, %vm793
        %v1796 = vmul.f32 %v1794, %v1788
        %v1797 = vmul.f32 %v1794, %v1789
        %v1798 = vsel %vm1795, 1, 0
        %v1799 = vlaneseq
        %v1800 = vshrl.u32 %v1799, 7
        %v1801 = vsub.s32 0, %v1800
        %v1802 = vrot.slane %v1798, %v1801
        %v1803 = vlaneseq
        %v1804 = vshrl.u32 %v1803, 7
        %v1805 = vsub.s32 1, %v1804
        %v1806 = vrot.slane %v1798, %v1805
        %vm1807 = vcmp.eq.s32.totalorder %v1802, 1
        %vm1808 = vcmp.eq.s32.totalorder %v1806, 1
        %v1809 = vsel %vm1807, %v1796, 0.0
        %v1810 = vsel %vm1808, %v1797, 0.0
        %v1811 = vadd.f32 %v1691, %v1809
        %v1812 = vadd.f32 %v1692, %v1810
        %1813 = vrot.lane.b32.xlu0 %v754, 109
        %v1814 = vpop.permute.xlu0 %1813
        %1815 = vrot.lane.b32.xlu0 %v755, 109
        %v1816 = vpop.permute.xlu0 %1815
        %vm1817 = vcmp.lt.s32.totalorder %v341, 109
        %v1818 = vsel %vm1817, %v1814, %v1816
        %v1819 = vsel %vm1817, %v1816, %v1814
        %s1820 = sld [smem:[#allocation6 + $0x22]]
        %s1821 = sld [smem:[#allocation6 + $0x53]]
        %v1822 = vstv %s1820
        %v1823 = vstv %s1821
        %v1824 = vsel %vm799, %v1822, %v1823
        %vm1825 = vmand %vm769, %vm796
        %v1826 = vmul.f32 %v1824, %v1818
        %v1827 = vmul.f32 %v1824, %v1819
        %v1828 = vsel %vm1825, 1, 0
        %v1829 = vlaneseq
        %v1830 = vshrl.u32 %v1829, 7
        %v1831 = vsub.s32 0, %v1830
        %v1832 = vrot.slane %v1828, %v1831
        %v1833 = vlaneseq
        %v1834 = vshrl.u32 %v1833, 7
        %v1835 = vsub.s32 1, %v1834
        %v1836 = vrot.slane %v1828, %v1835
        %vm1837 = vcmp.eq.s32.totalorder %v1832, 1
        %vm1838 = vcmp.eq.s32.totalorder %v1836, 1
        %v1839 = vsel %vm1837, %v1826, 0.0
        %v1840 = vsel %vm1838, %v1827, 0.0
        %v1841 = vadd.f32 %v1721, %v1839
        %v1842 = vadd.f32 %v1722, %v1840
        %1843 = vrot.lane.b32.xlu0 %v754, 99
        %v1844 = vpop.permute.xlu0 %1843
        %1845 = vrot.lane.b32.xlu0 %v755, 99
        %v1846 = vpop.permute.xlu0 %1845
        %vm1847 = vcmp.lt.s32.totalorder %v341, 99
        %v1848 = vsel %vm1847, %v1844, %v1846
        %v1849 = vsel %vm1847, %v1846, %v1844
        %s1850 = sld [smem:[#allocation6 + $0x23]]
        %s1851 = sld [smem:[#allocation6 + $0x54]]
        %v1852 = vstv %s1850
        %v1853 = vstv %s1851
        %v1854 = vsel %vm799, %v1852, %v1853
        %vm1855 = vmand %vm772, %vm778
        %v1856 = vmul.f32 %v1854, %v1848
        %v1857 = vmul.f32 %v1854, %v1849
        %v1858 = vsel %vm1855, 1, 0
        %v1859 = vlaneseq
        %v1860 = vshrl.u32 %v1859, 7
        %v1861 = vsub.s32 0, %v1860
        %v1862 = vrot.slane %v1858, %v1861
        %v1863 = vlaneseq
        %v1864 = vshrl.u32 %v1863, 7
        %v1865 = vsub.s32 1, %v1864
        %v1866 = vrot.slane %v1858, %v1865
        %vm1867 = vcmp.eq.s32.totalorder %v1862, 1
        %vm1868 = vcmp.eq.s32.totalorder %v1866, 1
        %v1869 = vsel %vm1867, %v1856, 0.0
        %v1870 = vsel %vm1868, %v1857, 0.0
        %v1871 = vadd.f32 %v1751, %v1869
        %v1872 = vadd.f32 %v1752, %v1870
        %1873 = vrot.lane.b32.xlu0 %v754, 98
        %v1874 = vpop.permute.xlu0 %1873
        %1875 = vrot.lane.b32.xlu0 %v755, 98
        %v1876 = vpop.permute.xlu0 %1875
        %vm1877 = vcmp.lt.s32.totalorder %v341, 98
        %v1878 = vsel %vm1877, %v1874, %v1876
        %v1879 = vsel %vm1877, %v1876, %v1874
        %s1880 = sld [smem:[#allocation6 + $0x24]]
        %s1881 = sld [smem:[#allocation6 + $0x55]]
        %v1882 = vstv %s1880
        %v1883 = vstv %s1881
        %v1884 = vsel %vm799, %v1882, %v1883
        %vm1885 = vmand %vm772, %vm781
        %v1886 = vmul.f32 %v1884, %v1878
        %v1887 = vmul.f32 %v1884, %v1879
        %v1888 = vsel %vm1885, 1, 0
        %v1889 = vlaneseq
        %v1890 = vshrl.u32 %v1889, 7
        %v1891 = vsub.s32 0, %v1890
        %v1892 = vrot.slane %v1888, %v1891
        %v1893 = vlaneseq
        %v1894 = vshrl.u32 %v1893, 7
        %v1895 = vsub.s32 1, %v1894
        %v1896 = vrot.slane %v1888, %v1895
        %vm1897 = vcmp.eq.s32.totalorder %v1892, 1
        %vm1898 = vcmp.eq.s32.totalorder %v1896, 1
        %v1899 = vsel %vm1897, %v1886, 0.0
        %v1900 = vsel %vm1898, %v1887, 0.0
        %v1901 = vadd.f32 %v1781, %v1899
        %v1902 = vadd.f32 %v1782, %v1900
        %1903 = vrot.lane.b32.xlu0 %v754, 97
        %v1904 = vpop.permute.xlu0 %1903
        %1905 = vrot.lane.b32.xlu0 %v755, 97
        %v1906 = vpop.permute.xlu0 %1905
        %vm1907 = vcmp.lt.s32.totalorder %v341, 97
        %v1908 = vsel %vm1907, %v1904, %v1906
        %v1909 = vsel %vm1907, %v1906, %v1904
        %s1910 = sld [smem:[#allocation6 + $0x25]]
        %s1911 = sld [smem:[#allocation6 + $0x56]]
        %v1912 = vstv %s1910
        %v1913 = vstv %s1911
        %v1914 = vsel %vm799, %v1912, %v1913
        %vm1915 = vmand %vm772, %vm784
        %v1916 = vmul.f32 %v1914, %v1908
        %v1917 = vmul.f32 %v1914, %v1909
        %v1918 = vsel %vm1915, 1, 0
        %v1919 = vlaneseq
        %v1920 = vshrl.u32 %v1919, 7
        %v1921 = vsub.s32 0, %v1920
        %v1922 = vrot.slane %v1918, %v1921
        %v1923 = vlaneseq
        %v1924 = vshrl.u32 %v1923, 7
        %v1925 = vsub.s32 1, %v1924
        %v1926 = vrot.slane %v1918, %v1925
        %vm1927 = vcmp.eq.s32.totalorder %v1922, 1
        %vm1928 = vcmp.eq.s32.totalorder %v1926, 1
        %v1929 = vsel %vm1927, %v1916, 0.0
        %v1930 = vsel %vm1928, %v1917, 0.0
        %v1931 = vadd.f32 %v1811, %v1929
        %v1932 = vadd.f32 %v1812, %v1930
        %1933 = vrot.lane.b32.xlu0 %v754, 96
        %v1934 = vpop.permute.xlu0 %1933
        %1935 = vrot.lane.b32.xlu0 %v755, 96
        %v1936 = vpop.permute.xlu0 %1935
        %vm1937 = vcmp.lt.s32.totalorder %v341, 96
        %v1938 = vsel %vm1937, %v1934, %v1936
        %v1939 = vsel %vm1937, %v1936, %v1934
        %s1940 = sld [smem:[#allocation6 + $0x26]]
        %s1941 = sld [smem:[#allocation6 + $0x57]]
        %v1942 = vstv %s1940
        %v1943 = vstv %s1941
        %v1944 = vsel %vm799, %v1942, %v1943
        %vm1945 = vmand %vm772, %vm787
        %v1946 = vmul.f32 %v1944, %v1938
        %v1947 = vmul.f32 %v1944, %v1939
        %v1948 = vsel %vm1945, 1, 0
        %v1949 = vlaneseq
        %v1950 = vshrl.u32 %v1949, 7
        %v1951 = vsub.s32 0, %v1950
        %v1952 = vrot.slane %v1948, %v1951
        %v1953 = vlaneseq
        %v1954 = vshrl.u32 %v1953, 7
        %v1955 = vsub.s32 1, %v1954
        %v1956 = vrot.slane %v1948, %v1955
        %vm1957 = vcmp.eq.s32.totalorder %v1952, 1
        %vm1958 = vcmp.eq.s32.totalorder %v1956, 1
        %v1959 = vsel %vm1957, %v1946, 0.0
        %v1960 = vsel %vm1958, %v1947, 0.0
        %v1961 = vadd.f32 %v1841, %v1959
        %v1962 = vadd.f32 %v1842, %v1960
        %1963 = vrot.lane.b32.xlu0 %v754, 95
        %v1964 = vpop.permute.xlu0 %1963
        %1965 = vrot.lane.b32.xlu0 %v755, 95
        %v1966 = vpop.permute.xlu0 %1965
        %vm1967 = vcmp.lt.s32.totalorder %v341, 95
        %v1968 = vsel %vm1967, %v1964, %v1966
        %v1969 = vsel %vm1967, %v1966, %v1964
        %s1970 = sld [smem:[#allocation6 + $0x27]]
        %s1971 = sld [smem:[#allocation6 + $0x58]]
        %v1972 = vstv %s1970
        %v1973 = vstv %s1971
        %v1974 = vsel %vm799, %v1972, %v1973
        %vm1975 = vmand %vm772, %vm790
        %v1976 = vmul.f32 %v1974, %v1968
        %v1977 = vmul.f32 %v1974, %v1969
        %v1978 = vsel %vm1975, 1, 0
        %v1979 = vlaneseq
        %v1980 = vshrl.u32 %v1979, 7
        %v1981 = vsub.s32 0, %v1980
        %v1982 = vrot.slane %v1978, %v1981
        %v1983 = vlaneseq
        %v1984 = vshrl.u32 %v1983, 7
        %v1985 = vsub.s32 1, %v1984
        %v1986 = vrot.slane %v1978, %v1985
        %vm1987 = vcmp.eq.s32.totalorder %v1982, 1
        %vm1988 = vcmp.eq.s32.totalorder %v1986, 1
        %v1989 = vsel %vm1987, %v1976, 0.0
        %v1990 = vsel %vm1988, %v1977, 0.0
        %v1991 = vadd.f32 %v1871, %v1989
        %v1992 = vadd.f32 %v1872, %v1990
        %1993 = vrot.lane.b32.xlu0 %v754, 94
        %v1994 = vpop.permute.xlu0 %1993
        %1995 = vrot.lane.b32.xlu0 %v755, 94
        %v1996 = vpop.permute.xlu0 %1995
        %vm1997 = vcmp.lt.s32.totalorder %v341, 94
        %v1998 = vsel %vm1997, %v1994, %v1996
        %v1999 = vsel %vm1997, %v1996, %v1994
        %s2000 = sld [smem:[#allocation6 + $0x28]]
        %s2001 = sld [smem:[#allocation6 + $0x59]]
        %v2002 = vstv %s2000
        %v2003 = vstv %s2001
        %v2004 = vsel %vm799, %v2002, %v2003
        %vm2005 = vmand %vm772, %vm793
        %v2006 = vmul.f32 %v2004, %v1998
        %v2007 = vmul.f32 %v2004, %v1999
        %v2008 = vsel %vm2005, 1, 0
        %v2009 = vlaneseq
        %v2010 = vshrl.u32 %v2009, 7
        %v2011 = vsub.s32 0, %v2010
        %v2012 = vrot.slane %v2008, %v2011
        %v2013 = vlaneseq
        %v2014 = vshrl.u32 %v2013, 7
        %v2015 = vsub.s32 1, %v2014
        %v2016 = vrot.slane %v2008, %v2015
        %vm2017 = vcmp.eq.s32.totalorder %v2012, 1
        %vm2018 = vcmp.eq.s32.totalorder %v2016, 1
        %v2019 = vsel %vm2017, %v2006, 0.0
        %v2020 = vsel %vm2018, %v2007, 0.0
        %v2021 = vadd.f32 %v1901, %v2019
        %v2022 = vadd.f32 %v1902, %v2020
        %2023 = vrot.lane.b32.xlu0 %v754, 93
        %v2024 = vpop.permute.xlu0 %2023
        %2025 = vrot.lane.b32.xlu0 %v755, 93
        %v2026 = vpop.permute.xlu0 %2025
        %vm2027 = vcmp.lt.s32.totalorder %v341, 93
        %v2028 = vsel %vm2027, %v2024, %v2026
        %v2029 = vsel %vm2027, %v2026, %v2024
        %s2030 = sld [smem:[#allocation6 + $0x29]]
        %s2031 = sld [smem:[#allocation6 + $0x5a]]
        %v2032 = vstv %s2030
        %v2033 = vstv %s2031
        %v2034 = vsel %vm799, %v2032, %v2033
        %vm2035 = vmand %vm772, %vm796
        %v2036 = vmul.f32 %v2034, %v2028
        %v2037 = vmul.f32 %v2034, %v2029
        %v2038 = vsel %vm2035, 1, 0
        %v2039 = vlaneseq
        %v2040 = vshrl.u32 %v2039, 7
        %v2041 = vsub.s32 0, %v2040
        %v2042 = vrot.slane %v2038, %v2041
        %v2043 = vlaneseq
        %v2044 = vshrl.u32 %v2043, 7
        %v2045 = vsub.s32 1, %v2044
        %v2046 = vrot.slane %v2038, %v2045
        %vm2047 = vcmp.eq.s32.totalorder %v2042, 1
        %vm2048 = vcmp.eq.s32.totalorder %v2046, 1
        %v2049 = vsel %vm2047, %v2036, 0.0
        %v2050 = vsel %vm2048, %v2037, 0.0
        %v2051 = vadd.f32 %v1931, %v2049
        %v2052 = vadd.f32 %v1932, %v2050
        %2053 = vrot.lane.b32.xlu0 %v754, 83
        %v2054 = vpop.permute.xlu0 %2053
        %2055 = vrot.lane.b32.xlu0 %v755, 83
        %v2056 = vpop.permute.xlu0 %2055
        %vm2057 = vcmp.lt.s32.totalorder %v341, 83
        %v2058 = vsel %vm2057, %v2054, %v2056
        %v2059 = vsel %vm2057, %v2056, %v2054
        %s2060 = sld [smem:[#allocation6 + $0x2a]]
        %s2061 = sld [smem:[#allocation6 + $0x5b]]
        %v2062 = vstv %s2060
        %v2063 = vstv %s2061
        %v2064 = vsel %vm799, %v2062, %v2063
        %vm2065 = vmand %vm775, %vm778
        %v2066 = vmul.f32 %v2064, %v2058
        %v2067 = vmul.f32 %v2064, %v2059
        %v2068 = vsel %vm2065, 1, 0
        %v2069 = vlaneseq
        %v2070 = vshrl.u32 %v2069, 7
        %v2071 = vsub.s32 0, %v2070
        %v2072 = vrot.slane %v2068, %v2071
        %v2073 = vlaneseq
        %v2074 = vshrl.u32 %v2073, 7
        %v2075 = vsub.s32 1, %v2074
        %v2076 = vrot.slane %v2068, %v2075
        %vm2077 = vcmp.eq.s32.totalorder %v2072, 1
        %vm2078 = vcmp.eq.s32.totalorder %v2076, 1
        %v2079 = vsel %vm2077, %v2066, 0.0
        %v2080 = vsel %vm2078, %v2067, 0.0
        %v2081 = vadd.f32 %v1961, %v2079
        %v2082 = vadd.f32 %v1962, %v2080
        %2083 = vrot.lane.b32.xlu0 %v754, 82
        %v2084 = vpop.permute.xlu0 %2083
        %2085 = vrot.lane.b32.xlu0 %v755, 82
        %v2086 = vpop.permute.xlu0 %2085
        %vm2087 = vcmp.lt.s32.totalorder %v341, 82
        %v2088 = vsel %vm2087, %v2084, %v2086
        %v2089 = vsel %vm2087, %v2086, %v2084
        %s2090 = sld [smem:[#allocation6 + $0x2b]]
        %s2091 = sld [smem:[#allocation6 + $0x5c]]
        %v2092 = vstv %s2090
        %v2093 = vstv %s2091
        %v2094 = vsel %vm799, %v2092, %v2093
        %vm2095 = vmand %vm775, %vm781
        %v2096 = vmul.f32 %v2094, %v2088
        %v2097 = vmul.f32 %v2094, %v2089
        %v2098 = vsel %vm2095, 1, 0
        %v2099 = vlaneseq
        %v2100 = vshrl.u32 %v2099, 7
        %v2101 = vsub.s32 0, %v2100
        %v2102 = vrot.slane %v2098, %v2101
        %v2103 = vlaneseq
        %v2104 = vshrl.u32 %v2103, 7
        %v2105 = vsub.s32 1, %v2104
        %v2106 = vrot.slane %v2098, %v2105
        %vm2107 = vcmp.eq.s32.totalorder %v2102, 1
        %vm2108 = vcmp.eq.s32.totalorder %v2106, 1
        %v2109 = vsel %vm2107, %v2096, 0.0
        %v2110 = vsel %vm2108, %v2097, 0.0
        %v2111 = vadd.f32 %v1991, %v2109
        %v2112 = vadd.f32 %v1992, %v2110
        %2113 = vrot.lane.b32.xlu0 %v754, 81
        %v2114 = vpop.permute.xlu0 %2113
        %2115 = vrot.lane.b32.xlu0 %v755, 81
        %v2116 = vpop.permute.xlu0 %2115
        %vm2117 = vcmp.lt.s32.totalorder %v341, 81
        %v2118 = vsel %vm2117, %v2114, %v2116
        %v2119 = vsel %vm2117, %v2116, %v2114
        %s2120 = sld [smem:[#allocation6 + $0x2c]]
        %s2121 = sld [smem:[#allocation6 + $0x5d]]
        %v2122 = vstv %s2120
        %v2123 = vstv %s2121
        %v2124 = vsel %vm799, %v2122, %v2123
        %vm2125 = vmand %vm775, %vm784
        %v2126 = vmul.f32 %v2124, %v2118
        %v2127 = vmul.f32 %v2124, %v2119
        %v2128 = vsel %vm2125, 1, 0
        %v2129 = vlaneseq
        %v2130 = vshrl.u32 %v2129, 7
        %v2131 = vsub.s32 0, %v2130
        %v2132 = vrot.slane %v2128, %v2131
        %v2133 = vlaneseq
        %v2134 = vshrl.u32 %v2133, 7
        %v2135 = vsub.s32 1, %v2134
        %v2136 = vrot.slane %v2128, %v2135
        %vm2137 = vcmp.eq.s32.totalorder %v2132, 1
        %vm2138 = vcmp.eq.s32.totalorder %v2136, 1
        %v2139 = vsel %vm2137, %v2126, 0.0
        %v2140 = vsel %vm2138, %v2127, 0.0
        %v2141 = vadd.f32 %v2021, %v2139
        %v2142 = vadd.f32 %v2022, %v2140
        %2143 = vrot.lane.b32.xlu0 %v754, 80
        %v2144 = vpop.permute.xlu0 %2143
        %2145 = vrot.lane.b32.xlu0 %v755, 80
        %v2146 = vpop.permute.xlu0 %2145
        %vm2147 = vcmp.lt.s32.totalorder %v341, 80
        %v2148 = vsel %vm2147, %v2144, %v2146
        %v2149 = vsel %vm2147, %v2146, %v2144
        %s2150 = sld [smem:[#allocation6 + $0x2d]]
        %s2151 = sld [smem:[#allocation6 + $0x5e]]
        %v2152 = vstv %s2150
        %v2153 = vstv %s2151
        %v2154 = vsel %vm799, %v2152, %v2153
        %vm2155 = vmand %vm775, %vm787
        %v2156 = vmul.f32 %v2154, %v2148
        %v2157 = vmul.f32 %v2154, %v2149
        %v2158 = vsel %vm2155, 1, 0
        %v2159 = vlaneseq
        %v2160 = vshrl.u32 %v2159, 7
        %v2161 = vsub.s32 0, %v2160
        %v2162 = vrot.slane %v2158, %v2161
        %v2163 = vlaneseq
        %v2164 = vshrl.u32 %v2163, 7
        %v2165 = vsub.s32 1, %v2164
        %v2166 = vrot.slane %v2158, %v2165
        %vm2167 = vcmp.eq.s32.totalorder %v2162, 1
        %vm2168 = vcmp.eq.s32.totalorder %v2166, 1
        %v2169 = vsel %vm2167, %v2156, 0.0
        %v2170 = vsel %vm2168, %v2157, 0.0
        %v2171 = vadd.f32 %v2051, %v2169
        %v2172 = vadd.f32 %v2052, %v2170
        %2173 = vrot.lane.b32.xlu0 %v754, 79
        %v2174 = vpop.permute.xlu0 %2173
        %2175 = vrot.lane.b32.xlu0 %v755, 79
        %v2176 = vpop.permute.xlu0 %2175
        %vm2177 = vcmp.lt.s32.totalorder %v341, 79
        %v2178 = vsel %vm2177, %v2174, %v2176
        %v2179 = vsel %vm2177, %v2176, %v2174
        %s2180 = sld [smem:[#allocation6 + $0x2e]]
        %s2181 = sld [smem:[#allocation6 + $0x5f]]
        %v2182 = vstv %s2180
        %v2183 = vstv %s2181
        %v2184 = vsel %vm799, %v2182, %v2183
        %vm2185 = vmand %vm775, %vm790
        %v2186 = vmul.f32 %v2184, %v2178
        %v2187 = vmul.f32 %v2184, %v2179
        %v2188 = vsel %vm2185, 1, 0
        %v2189 = vlaneseq
        %v2190 = vshrl.u32 %v2189, 7
        %v2191 = vsub.s32 0, %v2190
        %v2192 = vrot.slane %v2188, %v2191
        %v2193 = vlaneseq
        %v2194 = vshrl.u32 %v2193, 7
        %v2195 = vsub.s32 1, %v2194
        %v2196 = vrot.slane %v2188, %v2195
        %vm2197 = vcmp.eq.s32.totalorder %v2192, 1
        %vm2198 = vcmp.eq.s32.totalorder %v2196, 1
        %v2199 = vsel %vm2197, %v2186, 0.0
        %v2200 = vsel %vm2198, %v2187, 0.0
        %v2201 = vadd.f32 %v2081, %v2199
        %v2202 = vadd.f32 %v2082, %v2200
        %2203 = vrot.lane.b32.xlu0 %v754, 78
        %v2204 = vpop.permute.xlu0 %2203
        %2205 = vrot.lane.b32.xlu0 %v755, 78
        %v2206 = vpop.permute.xlu0 %2205
        %vm2207 = vcmp.lt.s32.totalorder %v341, 78
        %v2208 = vsel %vm2207, %v2204, %v2206
        %v2209 = vsel %vm2207, %v2206, %v2204
        %s2210 = sld [smem:[#allocation6 + $0x2f]]
        %s2211 = sld [smem:[#allocation6 + $0x60]]
        %v2212 = vstv %s2210
        %v2213 = vstv %s2211
        %v2214 = vsel %vm799, %v2212, %v2213
        %vm2215 = vmand %vm775, %vm793
        %v2216 = vmul.f32 %v2214, %v2208
        %v2217 = vmul.f32 %v2214, %v2209
        %v2218 = vsel %vm2215, 1, 0
        %v2219 = vlaneseq
        %v2220 = vshrl.u32 %v2219, 7
        %v2221 = vsub.s32 0, %v2220
        %v2222 = vrot.slane %v2218, %v2221
        %v2223 = vlaneseq
        %v2224 = vshrl.u32 %v2223, 7
        %v2225 = vsub.s32 1, %v2224
        %v2226 = vrot.slane %v2218, %v2225
        %vm2227 = vcmp.eq.s32.totalorder %v2222, 1
        %vm2228 = vcmp.eq.s32.totalorder %v2226, 1
        %v2229 = vsel %vm2227, %v2216, 0.0
        %v2230 = vsel %vm2228, %v2217, 0.0
        %v2231 = vadd.f32 %v2111, %v2229
        %v2232 = vadd.f32 %v2112, %v2230
        %2233 = vrot.lane.b32.xlu0 %v754, 77
        %v2234 = vpop.permute.xlu0 %2233
        %2235 = vrot.lane.b32.xlu0 %v755, 77
        %v2236 = vpop.permute.xlu0 %2235
        %vm2237 = vcmp.lt.s32.totalorder %v341, 77
        %v2238 = vsel %vm2237, %v2234, %v2236
        %v2239 = vsel %vm2237, %v2236, %v2234
        %s2240 = sld [smem:[#allocation6 + $0x30]]
        %s2241 = sld [smem:[#allocation6 + $0x61]]
        %v2242 = vstv %s2240
        %v2243 = vstv %s2241
        %v2244 = vsel %vm799, %v2242, %v2243
        %vm2245 = vmand %vm775, %vm796
        %v2246 = vmul.f32 %v2244, %v2238
        %v2247 = vmul.f32 %v2244, %v2239
        %v2248 = vsel %vm2245, 1, 0
        %v2249 = vlaneseq
        %v2250 = vshrl.u32 %v2249, 7
        %v2251 = vsub.s32 0, %v2250
        %v2252 = vrot.slane %v2248, %v2251
        %v2253 = vlaneseq
        %v2254 = vshrl.u32 %v2253, 7
        %v2255 = vsub.s32 1, %v2254
        %v2256 = vrot.slane %v2248, %v2255
        %vm2257 = vcmp.eq.s32.totalorder %v2252, 1
        %vm2258 = vcmp.eq.s32.totalorder %v2256, 1
        %v2259 = vsel %vm2257, %v2246, 0.0
        %v2260 = vsel %vm2258, %v2247, 0.0
        %v2261 = vadd.f32 %v2141, %v2259
        %v2262 = vadd.f32 %v2142, %v2260
        %v2263 = vadd.f32 %v2261, %v2171
        %v2264 = vadd.f32 %v2262, %v2172
        %v2265 = vadd.f32 %v2201, %v2231
        %v2266 = vadd.f32 %v2202, %v2232
        %v2267 = vadd.f32 %v2263, %v2265
        %v2268 = vadd.f32 %v2264, %v2266
        %v2271 = vrot.slane %v2267, 2
        %v2272 = vrot.slane %v2268, 2
        %v2275 = vadd.f32 %v2267, %v2271
        %v2276 = vadd.f32 %v2268, %v2272
        %v2277 = vxor.u32 %v2275, 2147483648
        %v2278 = vxor.u32 %v2276, 2147483648
        %v2279 = vmul.f32 %v2277, 1.442695
        %v2280 = vpow.pop %v2279
        %v2281 = vmul.f32 %v2278, 1.442695
        %v2282 = vpow.pop %v2281
        %v2283 = vadd.f32 %v2280, 1.0
        %v2284 = vadd.f32 %v2282, 1.0
        %v2285 = vrcp.pop %v2283
        %v2286 = vmul.f32 1.0, %v2285
        %v2287 = vrcp.pop %v2284
        %v2288 = vmul.f32 1.0, %v2287
        %v2291 = vcombine.low %v2286, %v2288
        %v2293 = vunpack.c.l.s4 1966171168
        %v2294 = vunpack.c.0.s8 %v2293
        %v2295 = vlaneseq
        %v2296 = vshrl.u32 %v2295, 7
        %v2297 = vsub.s32 %v2294, %v2296
        %v2298 = vrot.slane %v2291, %v2297
        %v2299 = vcombine.high %v2298, %v2298
        %v2301 = vunpack.c.l.s4 1966171168
        %v2302 = vunpack.c.0.s8 %v2301
        %v2303 = vlaneseq
        %v2304 = vshrl.u32 %v2303, 7
        %v2305 = vsub.s32 %v2302, %v2304
        %v2306 = vrot.slane %v2298, %v2305
        %v2308 = vunpack.c.l.s4 1966171168
        %v2309 = vunpack.c.0.s8 %v2308
        %v2310 = vlaneseq
        %v2311 = vshrl.u32 %v2310, 7
        %v2312 = vsub.s32 %v2309, %v2311
        %v2313 = vrot.slane %v2299, %v2312
        %v2314 = vlaneseq
        %v2315 = vshrl.u32 %v2314, 7
        %v2316 = vsub.s32 0, %v2315
        %v2317 = vrot.slane %v2306, %v2316
        %v2318 = vlaneseq
        %v2319 = vshrl.u32 %v2318, 7
        %v2320 = vsub.s32 1, %v2319
        %v2321 = vrot.slane %v2306, %v2320
        %v2322 = vlaneseq
        %v2323 = vshrl.u32 %v2322, 7
        %v2324 = vsub.s32 0, %v2323
        %v2325 = vrot.slane %v2313, %v2324
        %v2326 = vlaneseq
        %v2327 = vshrl.u32 %v2326, 7
        %v2328 = vsub.s32 1, %v2327
        %v2329 = vrot.slane %v2313, %v2328
        %v2334 = vmul.f32 %v645, %v2317
        %v2335 = vmul.f32 %v646, %v2321
        %v2336 = vmul.f32 %v647, %v2317
        %v2337 = vmul.f32 %v648, %v2321
        %v2338 = vmul.f32 %v649, %v2317
        %v2339 = vmul.f32 %v650, %v2321
        %v2340 = vmul.f32 %v651, %v2317
        %v2341 = vmul.f32 %v652, %v2321
        %v2342 = vmul.f32 %v653, %v2325
        %v2343 = vmul.f32 %v654, %v2329
        %v2344 = vmul.f32 %v655, %v2325
        %v2345 = vmul.f32 %v656, %v2329
        %v2346 = vmul.f32 %v657, %v2325
        %v2347 = vmul.f32 %v658, %v2329
        %v2348 = vmul.f32 %v659, %v2325
        %v2349 = vmul.f32 %v660, %v2329
        %2350 = vst [vmem:[%s257] sm:$0xff] %v2334
        %2351 = vst [vmem:[%s257 + $0x8] sm:$0xff] %v2335
        %2352 = vst [vmem:[%s257 + $0x10] sm:$0xff] %v2336
        %2353 = vst [vmem:[%s257 + $0x18] sm:$0xff] %v2337
        %2354 = vst [vmem:[%s257 + $0x20] sm:$0xff] %v2338
        %2355 = vst [vmem:[%s257 + $0x28] sm:$0xff] %v2339
        %2356 = vst [vmem:[%s257 + $0x30] sm:$0xff] %v2340
        %2357 = vst [vmem:[%s257 + $0x38] sm:$0xff] %v2341
        %2358 = vst [vmem:[%s257 + $0x40] sm:$0xff] %v2342
        %2359 = vst [vmem:[%s257 + $0x48] sm:$0xff] %v2343
        %2360 = vst [vmem:[%s257 + $0x50] sm:$0xff] %v2344
        %2361 = vst [vmem:[%s257 + $0x58] sm:$0xff] %v2345
        %2362 = vst [vmem:[%s257 + $0x60] sm:$0xff] %v2346
        %2363 = vst [vmem:[%s257 + $0x68] sm:$0xff] %v2347
        %2364 = vst [vmem:[%s257 + $0x70] sm:$0xff] %v2348
        %2365 = vst [vmem:[%s257 + $0x78] sm:$0xff] %v2349
        %s2366 = sand.u32 %s141, 1
        %s2367 = scalar_lea.sflag [#allocation4], %s2366
        %s2368 = sand.u32 %s141, 1
        %s2369 = smul.addr %s2368, 128
        %s2370 = scalar_lea.vmem [#allocation7], %s2369
        // Predicated region
        $region49: #{tpu_custom_call.1} parent=39 // pred_check
          %p2371 = pneg %p151
        $region50: #{tpu_custom_call.1} parent=39 // pred_check_branch
          %2373 = sbr.rel (%p2371) target = $region52
        $region51: #{tpu_custom_call.1} parent=39 // pred_region
          %s2374 = smul.u32 2, %s23
          %s2376 = ssub.s32 2048, 2048
          %2377 = vsyncadd %s2367, %s2376
          %s2378 = smul.addr %s2374, 8
          %s2379 = smul.addr %s2378, 128
          %s2380 = scalar_lea.hbm %s5, %s2379
          %s2381 = sshll.u32 %s2370, 4
          %s2382 = int_to_ptr.vmem [resolvable:$true] %s2381
          %2387 = dma.vmem_to_hbm [thread:$0]  %s2382, 2048, %s2380, %s2367, 256, 256, 16
        $region52: #{tpu_custom_call.1} parent=39 // pred_fallthru
          _
      $region40: #{tpu_custom_call.1} parent=5 // pred_fallthru
        _
      %p2388 = scmp.le.s32.totalorder 2, %s18
      // Predicated region
      $region53: #{tpu_custom_call.1} parent=5 // pred_check
        %p2389 = pneg %p2388
      $region54: #{tpu_custom_call.1} parent=5 // pred_check_branch
        %2391 = sbr.rel (%p2389) target = $region56
      $region55: #{tpu_custom_call.1} parent=5 // pred_region
        %s2392 = ssub.s32 %s18, 2
        // Predicated region
        $region57: #{tpu_custom_call.1} parent=55 // pred_check
          %p2393 = pneg %p157
        $region58: #{tpu_custom_call.1} parent=55 // pred_check_branch
          %2395 = sbr.rel (%p2393) target = $region60
        $region59: #{tpu_custom_call.1} parent=55 // pred_region
          %s2396 = sand.u32 %s142, 1
          %s2397 = scalar_lea.sflag [#allocation4], %s2396
          %s2398 = sand.u32 %s142, 1
          %s2399 = smul.addr %s2398, 128
          %s2400 = scalar_lea.vmem [#allocation7], %s2399
          %2401 = dma.done %s2397, 2048
        $region60: #{tpu_custom_call.1} parent=55 // pred_fallthru
          _
      $region56: #{tpu_custom_call.1} parent=5 // pred_fallthru
        _
    $region6: #{tpu_custom_call.1} parent=1 // loop_footer
      %s22 = sadd.s32 1, %s18
    $region7: #{tpu_custom_call.1} parent=1 // loop_footer_branch
      %17 = sbr.rel target = $region3
    $region8: #{tpu_custom_call.1} parent=1 // loop_exit
      _
    %2402 = vsyncpa [#allocation3], 1
    %s2403 = scalar_lea.sflag [#allocation3], 1
    %2404 = vsyncpa %s2403, 1
    %2405 = vsyncpa [#allocation4], 1
    %s2406 = scalar_lea.sflag [#allocation4], 1
    %2407 = vsyncpa %s2406, 1
    %2408 = vsyncpa [#allocation5], 1
    %s2409 = scalar_lea.sflag [#allocation5], 1
    %2410 = vsyncpa %s2409, 1

</llo_original>
